<compile_context>
chip_gen: v6e
topology: v6e:2x2x1
jax: 0.10.0
libtpu: 0.0.40
codegen_flags: <defaults>
</compile_context>

<pallas_src>
import functools

import numpy as np
import jax
import jax.numpy as jnp
from jax import lax
from jax.experimental import pallas as pl
from jax.experimental.pallas import tpu as pltpu


# ---------------------------------------------------------------------------
# Fused conv(k=10, s=5) + bias + ReLU + height(2x1)-maxpool Pallas kernel
# ---------------------------------------------------------------------------
def _conv_relu_hpool_kernel(spt_ref, w_ref, b_ref, o_ref, *, n_rows, cout, ow):
    """One image per grid step.

    spt_ref : (2*n_rows+1, K, ow+1)  super-pixel image (one (K, W) slab / super-row)
    w_ref   : (2, 2*cout, K)         w_ref[di] = [W[di,dj=0]; W[di,dj=1]] row-stacked
    b_ref   : (cout, 1)
    o_ref   : (n_rows, cout, ow)     height-pooled conv output (channels on sublanes)
    """
    bias = b_ref[...]            # (cout, 1), broadcasts along the lane (width) axis
    w0 = w_ref[0]                # di = 0   (2*cout, K)
    w1 = w_ref[1]                # di = 1   (2*cout, K)

    def conv_row(sa, sb):
        # conv output row oh built from super-rows oh (sa) and oh+1 (sb)
        p = (jnp.dot(w0, sa, preferred_element_type=jnp.float32)
             + jnp.dot(w1, sb, preferred_element_type=jnp.float32))   # (2*cout, ow+1)
        # dj=0 rows use columns [0:ow); dj=1 rows use columns shifted by one super-col
        return p[:cout, 0:ow] + p[cout:, 1:ow + 1]                    # (cout, ow)

    def body(r, carry):
        s0 = spt_ref[2 * r]          # (K, ow+1)
        s1 = spt_ref[2 * r + 1]
        s2 = spt_ref[2 * r + 2]
        m = jnp.maximum(conv_row(s0, s1), conv_row(s1, s2)) + bias    # height pool
        o_ref[r] = jnp.maximum(m, 0.0)                                # ReLU
        return carry

    lax.fori_loop(0, n_rows, body, 0)


def conv_relu_hpool(spt, wcat, bias, *, n_rows, cout, ow, vmem_limit_bytes=None):
    B, n_srows, K, width = spt.shape
    assert n_srows == 2 * n_rows + 1 and width == ow + 1
    kern = functools.partial(_conv_relu_hpool_kernel, n_rows=n_rows, cout=cout, ow=ow)
    cparams = dict(dimension_semantics=("parallel",))
    if vmem_limit_bytes is not None:
        cparams["vmem_limit_bytes"] = vmem_limit_bytes
    return pl.pallas_call(
        kern,
        out_shape=jax.ShapeDtypeStruct((B, n_rows, cout, ow), jnp.float32),
        grid_spec=pltpu.PrefetchScalarGridSpec(
            num_scalar_prefetch=0,
            grid=(B,),
            in_specs=[
                pl.BlockSpec((None, n_srows, K, width), lambda b: (b, 0, 0, 0)),
                pl.BlockSpec((2, 2 * cout, K), lambda b: (0, 0, 0)),
                pl.BlockSpec((cout, 1), lambda b: (0, 0)),
            ],
            out_specs=pl.BlockSpec((None, n_rows, cout, ow), lambda b: (b, 0, 0, 0)),
        ),
        compiler_params=pltpu.CompilerParams(**cparams),
    )(spt, wcat, bias)


# ---------------------------------------------------------------------------
# Fused fc1 + ReLU + fc2 Pallas kernel (single grid step, activation stays in VMEM)
# ---------------------------------------------------------------------------
def _fc2_kernel(x_ref, w1_ref, b1_ref, w2_ref, b2_ref, o_ref):
    h = jnp.dot(x_ref[...], w1_ref[...], preferred_element_type=jnp.float32) + b1_ref[...]
    h = jnp.maximum(h, 0.0)
    o_ref[...] = jnp.dot(h, w2_ref[...], preferred_element_type=jnp.float32) + b2_ref[...]


def fc1_fc2(flat, wf1, bf1, wf2, bf2):
    B, K1 = flat.shape
    H = wf1.shape[1]
    N = wf2.shape[1]
    return pl.pallas_call(
        _fc2_kernel,
        out_shape=jax.ShapeDtypeStruct((B, N), jnp.float32),
        grid_spec=pltpu.PrefetchScalarGridSpec(
            num_scalar_prefetch=0,
            grid=(1,),
            in_specs=[
                pl.BlockSpec((B, K1), lambda i: (0, 0)),
                pl.BlockSpec((K1, H), lambda i: (0, 0)),
                pl.BlockSpec((1, H), lambda i: (0, 0)),
                pl.BlockSpec((H, N), lambda i: (0, 0)),
                pl.BlockSpec((1, N), lambda i: (0, 0)),
            ],
            out_specs=pl.BlockSpec((B, N), lambda i: (0, 0)),
        ),
        compiler_params=pltpu.CompilerParams(dimension_semantics=("arbitrary",)),
    )(flat, wf1, bf1.reshape(1, H), wf2, bf2.reshape(1, N))


# ---------------------------------------------------------------------------
# Glue: super-pixel layout + weight repacking (pure layout plumbing, XLA side)
# ---------------------------------------------------------------------------
def _superpixel_t(x_nhwc, s):
    """(B, H, W, C) -> (B, H/s, s*s*C, W/s): one (K, W/s) slab per super-row."""
    B, H, W, C = x_nhwc.shape
    R, Cw = H // s, W // s
    t = x_nhwc.reshape(B, R, s, Cw, s, C)          # (b, R, r, Cw, c, ci)
    t = jnp.transpose(t, (0, 1, 2, 4, 5, 3))       # (b, R, r, c, ci, Cw)
    return t.reshape(B, R, s * s * C, Cw)


def _prep_conv_w(w_hwio, s):
    """(2s, 2s, Cin, Cout) -> (2, 2*Cout, s*s*Cin): [di][dj*Cout + n, (r*s+c)*Cin+ci]."""
    kh, kw, cin, cout = w_hwio.shape
    t = w_hwio.reshape(2, s, 2, s, cin, cout)       # (di, r, dj, c, ci, n)
    t = jnp.transpose(t, (0, 2, 5, 1, 3, 4))        # (di, dj, n, r, c, ci)
    return t.reshape(2, 2 * cout, s * s * cin)


def net_forward(x_nchw, params):
    w1, b1, w2, b2, wf1, bf1, wf2, bf2 = params
    B = x_nchw.shape[0]

    # conv1 + ReLU + 2x2 maxpool -------------------------------------------
    x = jnp.transpose(x_nchw, (0, 2, 3, 1))                   # (B, 1455, 1455, 1)
    spt1 = _superpixel_t(x, 5)                                # (B, 291, 25, 291)
    w1c = _prep_conv_w(w1, 5)                                 # (2, 20, 25)
    y1 = conv_relu_hpool(spt1, w1c, b1.reshape(-1, 1),
                         n_rows=145, cout=10, ow=290,
                         vmem_limit_bytes=48 * 1024 * 1024)   # (B, 145, 10, 290)
    # width half of the 2x2 pool (tiny XLA reduce on the already height-pooled tensor)
    p1 = jnp.max(y1.reshape(B, 145, 10, 145, 2), axis=4)      # (B, 145, 10, 145)
    h1 = jnp.transpose(p1, (0, 1, 3, 2))                      # NHWC (B, 145, 145, 10)

    # conv2 + ReLU + 2x2 maxpool -------------------------------------------
    spt2 = _superpixel_t(h1, 5)                               # (B, 29, 250, 29)
    w2c = _prep_conv_w(w2, 5)                                 # (2, 40, 250)
    y2 = conv_relu_hpool(spt2, w2c, b2.reshape(-1, 1),
                         n_rows=14, cout=20, ow=28)           # (B, 14, 20, 28)
    p2 = jnp.max(y2.reshape(B, 14, 20, 14, 2), axis=4)        # (B, 14, 20, 14) [h,c,w]

    # flatten (our order: h, c, w) + fc1 + ReLU + fc2 ------------------------
    flat = p2.reshape(B, 14 * 20 * 14)                        # (B, 3920)
    # fold torch's NCHW flatten order (c, h, w) into a fc1-weight row permutation
    wf1p = jnp.transpose(wf1.reshape(20, 14, 14, 64), (1, 0, 2, 3)).reshape(3920, 64)
    return fc1_fc2(flat, wf1p, bf1, wf2, bf2)                 # (B, 4)


# ---------------------------------------------------------------------------
# Pure-JAX reference (correctness check)
# ---------------------------------------------------------------------------
def _ref_pool(y):
    B, H, W, C = y.shape
    return jnp.max(y.reshape(B, H // 2, 2, W // 2, 2, C), axis=(2, 4))


def reference_forward(x_nchw, params):
    w1, b1, w2, b2, wf1, bf1, wf2, bf2 = params
    x = jnp.transpose(x_nchw, (0, 2, 3, 1))
    dn = ("NHWC", "HWIO", "NHWC")
    y = lax.conv_general_dilated(x, w1, (5, 5), "VALID", dimension_numbers=dn) + b1
    y = jax.nn.relu(y)
    y = _ref_pool(y)
    y = lax.conv_general_dilated(y, w2, (5, 5), "VALID", dimension_numbers=dn) + b2
    y = jax.nn.relu(y)
    y = _ref_pool(y)
    B = y.shape[0]
    flat = jnp.transpose(y, (0, 3, 1, 2)).reshape(B, -1)
    h = jax.nn.relu(flat @ wf1 + bf1)
    return h @ wf2 + bf2


# ---------------------------------------------------------------------------
# Main
# ---------------------------------------------------------------------------
if __name__ == "__main__":
    key = jax.random.PRNGKey(0)
    ks = jax.random.split(key, 9)

    B, H, W = 2, 1455, 1455  # smallest input consistent with fc1.in_features == 3920
    x = jax.random.normal(ks[0], (B, 1, H, W), jnp.float32)

    def uniform(k, shape, fan_in):
        bound = 1.0 / np.sqrt(fan_in)
        return jax.random.uniform(k, shape, jnp.float32, -bound, bound)

    params = (
        uniform(ks[1], (10, 10, 1, 10), 100),     # conv1 weight (HWIO)
        uniform(ks[2], (10,), 100),               # conv1 bias
        uniform(ks[3], (10, 10, 10, 20), 1000),   # conv2 weight (HWIO)
        uniform(ks[4], (20,), 1000),              # conv2 bias
        uniform(ks[5], (3920, 64), 3920),         # fc1 weight (in, out)
        uniform(ks[6], (64,), 3920),              # fc1 bias
        uniform(ks[7], (64, 4), 64),              # fc2 weight (in, out)
        uniform(ks[8], (4,), 64),                 # fc2 bias
    )

    out = jax.jit(net_forward)(x, params)
    jax.block_until_ready(out)
    assert out.shape == (B, 4), out.shape

    ref = jax.jit(reference_forward)(x, params)
    jax.block_until_ready(ref)
    np.testing.assert_allclose(np.asarray(out), np.asarray(ref), rtol=1e-2, atol=1e-2)

    print("KERNEL_OK")
</pallas_src>

<mosaic_0001>
module attributes {stable_mosaic.version = 11 : i64} {
  func.func @_conv_relu_hpool_kernel(%arg0: i32, %arg1: memref<1x291x25x291xf32, #tpu.memory_space<vmem>>, %arg2: memref<2x20x25xf32, #tpu.memory_space<vmem>>, %arg3: memref<10x1xf32, #tpu.memory_space<vmem>>, %arg4: memref<1x145x10x290xf32, #tpu.memory_space<vmem>>) attributes {dimension_semantics = [#tpu.dimension_semantics<parallel>], iteration_bounds = array<i64: 2>, scalar_prefetch = 0 : i64, scratch_operands = 0 : i64, tpu.core_type = #tpu.core_type<tc>, window_params = [{transform_indices = @transform_0, window_bounds = array<i64: 1, 291, 25, 291>}, {pipeline_mode = #tpu.pipeline_mode<synchronous>, transform_indices = @transform_1, window_bounds = array<i64: 2, 20, 25>}, {pipeline_mode = #tpu.pipeline_mode<synchronous>, transform_indices = @transform_2, window_bounds = array<i64: 10, 1>}, {transform_indices = @transform_3, window_bounds = array<i64: 1, 145, 10, 290>}]} {
    %c0 = arith.constant 0 : index
    %c0_0 = arith.constant 0 : index
    %0 = vector.load %arg3[%c0, %c0_0] : memref<10x1xf32, #tpu.memory_space<vmem>>, vector<10x1xf32>
    %c0_1 = arith.constant 0 : index
    %c0_2 = arith.constant 0 : index
    %c0_3 = arith.constant 0 : index
    %1 = vector.load %arg2[%c0_1, %c0_2, %c0_3] : memref<2x20x25xf32, #tpu.memory_space<vmem>>, vector<1x20x25xf32>
    %2 = vector.shape_cast %1 : vector<1x20x25xf32> to vector<20x25xf32>
    %c1 = arith.constant 1 : index
    %c0_4 = arith.constant 0 : index
    %c0_5 = arith.constant 0 : index
    %3 = vector.load %arg2[%c1, %c0_4, %c0_5] : memref<2x20x25xf32, #tpu.memory_space<vmem>>, vector<1x20x25xf32>
    %4 = vector.shape_cast %3 : vector<1x20x25xf32> to vector<20x25xf32>
    %c0_i32 = arith.constant 0 : i32
    %c145_i32 = arith.constant 145 : i32
    %5 = arith.addi %c0_i32, %c145_i32 : i32
    %c1_i32 = arith.constant 1 : i32
    scf.for %arg5 = %c0_i32 to %5 step %c1_i32  : i32 {
      %c2_i32 = arith.constant 2 : i32
      %6 = arith.muli %c2_i32, %arg5 : i32
      %c0_7 = arith.constant 0 : index
      %7 = arith.index_cast %6 : i32 to index
      %c0_8 = arith.constant 0 : index
      %c0_9 = arith.constant 0 : index
      %8 = vector.load %arg1[%c0_7, %7, %c0_8, %c0_9] : memref<1x291x25x291xf32, #tpu.memory_space<vmem>>, vector<1x1x25x291xf32>
      %9 = vector.shape_cast %8 : vector<1x1x25x291xf32> to vector<25x291xf32>
      %c2_i32_10 = arith.constant 2 : i32
      %10 = arith.muli %c2_i32_10, %arg5 : i32
      %c1_i32_11 = arith.constant 1 : i32
      %11 = arith.addi %10, %c1_i32_11 : i32
      %c0_12 = arith.constant 0 : index
      %12 = arith.index_cast %11 : i32 to index
      %c0_13 = arith.constant 0 : index
      %c0_14 = arith.constant 0 : index
      %13 = vector.load %arg1[%c0_12, %12, %c0_13, %c0_14] : memref<1x291x25x291xf32, #tpu.memory_space<vmem>>, vector<1x1x25x291xf32>
      %14 = vector.shape_cast %13 : vector<1x1x25x291xf32> to vector<25x291xf32>
      %c2_i32_15 = arith.constant 2 : i32
      %15 = arith.muli %c2_i32_15, %arg5 : i32
      %c2_i32_16 = arith.constant 2 : i32
      %16 = arith.addi %15, %c2_i32_16 : i32
      %c0_17 = arith.constant 0 : index
      %17 = arith.index_cast %16 : i32 to index
      %c0_18 = arith.constant 0 : index
      %c0_19 = arith.constant 0 : index
      %18 = vector.load %arg1[%c0_17, %17, %c0_18, %c0_19] : memref<1x291x25x291xf32, #tpu.memory_space<vmem>>, vector<1x1x25x291xf32>
      %19 = vector.shape_cast %18 : vector<1x1x25x291xf32> to vector<25x291xf32>
      %cst = arith.constant dense<0.000000e+00> : vector<20x291xf32>
      %20 = tpu.matmul %2, %9, %cst {dimension_numbers = #tpu.dot_dimension_numbers<[1], [0], [0], [1], [0, 0, 1, 1], [], []>} : vector<20x25xf32>, vector<25x291xf32>, vector<20x291xf32> -> vector<20x291xf32>
      %cst_20 = arith.constant dense<0.000000e+00> : vector<20x291xf32>
      %21 = tpu.matmul %4, %14, %cst_20 {dimension_numbers = #tpu.dot_dimension_numbers<[1], [0], [0], [1], [0, 0, 1, 1], [], []>} : vector<20x25xf32>, vector<25x291xf32>, vector<20x291xf32> -> vector<20x291xf32>
      %22 = arith.addf %20, %21 : vector<20x291xf32>
      %23 = vector.extract_strided_slice %22 {offsets = [0, 0], sizes = [10, 290], strides = [1, 1]} : vector<20x291xf32> to vector<10x290xf32>
      %24 = vector.extract_strided_slice %22 {offsets = [10, 1], sizes = [10, 290], strides = [1, 1]} : vector<20x291xf32> to vector<10x290xf32>
      %25 = arith.addf %23, %24 : vector<10x290xf32>
      %cst_21 = arith.constant dense<0.000000e+00> : vector<20x291xf32>
      %26 = tpu.matmul %2, %14, %cst_21 {dimension_numbers = #tpu.dot_dimension_numbers<[1], [0], [0], [1], [0, 0, 1, 1], [], []>} : vector<20x25xf32>, vector<25x291xf32>, vector<20x291xf32> -> vector<20x291xf32>
      %cst_22 = arith.constant dense<0.000000e+00> : vector<20x291xf32>
      %27 = tpu.matmul %4, %19, %cst_22 {dimension_numbers = #tpu.dot_dimension_numbers<[1], [0], [0], [1], [0, 0, 1, 1], [], []>} : vector<20x25xf32>, vector<25x291xf32>, vector<20x291xf32> -> vector<20x291xf32>
      %28 = arith.addf %26, %27 : vector<20x291xf32>
      %29 = vector.extract_strided_slice %28 {offsets = [0, 0], sizes = [10, 290], strides = [1, 1]} : vector<20x291xf32> to vector<10x290xf32>
      %30 = vector.extract_strided_slice %28 {offsets = [10, 1], sizes = [10, 290], strides = [1, 1]} : vector<20x291xf32> to vector<10x290xf32>
      %31 = arith.addf %29, %30 : vector<10x290xf32>
      %32 = arith.maximumf %25, %31 : vector<10x290xf32>
      %33 = vector.broadcast %0 : vector<10x1xf32> to vector<10x290xf32>
      %34 = arith.addf %32, %33 : vector<10x290xf32>
      %cst_23 = arith.constant 0.000000e+00 : f32
      %35 = vector.broadcast %cst_23 : f32 to vector<10x290xf32>
      %36 = arith.maximumf %34, %35 : vector<10x290xf32>
      %c0_24 = arith.constant 0 : index
      %37 = arith.index_cast %arg5 : i32 to index
      %c0_25 = arith.constant 0 : index
      %c0_26 = arith.constant 0 : index
      %38 = vector.load %arg4[%c0_24, %37, %c0_25, %c0_26] : memref<1x145x10x290xf32, #tpu.memory_space<vmem>>, vector<1x1x10x290xf32>
      %39 = vector.shape_cast %38 : vector<1x1x10x290xf32> to vector<10x290xf32>
      %40 = vector.shape_cast %36 : vector<10x290xf32> to vector<1x1x10x290xf32>
      tpu.vector_store %arg4[%c0_24, %37, %c0_25, %c0_26], %40 {strides = array<i32>} : memref<1x145x10x290xf32, #tpu.memory_space<vmem>>, vector<1x1x10x290xf32>,
    }
    %c145_i32_6 = arith.constant 145 : i32
    return
  }
  func.func @transform_0(%arg0: i32) -> (i32, i32, i32, i32) {
    %c0_i32 = arith.constant 0 : i32
    %c0_i32_0 = arith.constant 0 : i32
    %c0_i32_1 = arith.constant 0 : i32
    %c0_i32_2 = arith.constant 0 : i32
    return %arg0, %c0_i32, %c0_i32_0, %c0_i32_1 : i32, i32, i32, i32
  }
  func.func @transform_1(%arg0: i32) -> (i32, i32, i32) {
    %c0_i32 = arith.constant 0 : i32
    %c0_i32_0 = arith.constant 0 : i32
    %c0_i32_1 = arith.constant 0 : i32
    %c0_i32_2 = arith.constant 0 : i32
    return %c0_i32, %c0_i32_0, %c0_i32_1 : i32, i32, i32
  }
  func.func @transform_2(%arg0: i32) -> (i32, i32) {
    %c0_i32 = arith.constant 0 : i32
    %c0_i32_0 = arith.constant 0 : i32
    %c0_i32_1 = arith.constant 0 : i32
    return %c0_i32, %c0_i32_0 : i32, i32
  }
  func.func @transform_3(%arg0: i32) -> (i32, i32, i32, i32) {
    %c0_i32 = arith.constant 0 : i32
    %c0_i32_0 = arith.constant 0 : i32
    %c0_i32_1 = arith.constant 0 : i32
    %c0_i32_2 = arith.constant 0 : i32
    return %arg0, %c0_i32, %c0_i32_0, %c0_i32_1 : i32, i32, i32, i32
  }
}

module attributes {stable_mosaic.version = 11 : i64} {
  func.func @_conv_relu_hpool_kernel(%arg0: i32, %arg1: memref<1x29x250x29xf32, #tpu.memory_space<vmem>>, %arg2: memref<2x40x250xf32, #tpu.memory_space<vmem>>, %arg3: memref<20x1xf32, #tpu.memory_space<vmem>>, %arg4: memref<1x14x20x28xf32, #tpu.memory_space<vmem>>) attributes {dimension_semantics = [#tpu.dimension_semantics<parallel>], iteration_bounds = array<i64: 2>, scalar_prefetch = 0 : i64, scratch_operands = 0 : i64, tpu.core_type = #tpu.core_type<tc>, window_params = [{transform_indices = @transform_0, window_bounds = array<i64: 1, 29, 250, 29>}, {pipeline_mode = #tpu.pipeline_mode<synchronous>, transform_indices = @transform_1, window_bounds = array<i64: 2, 40, 250>}, {pipeline_mode = #tpu.pipeline_mode<synchronous>, transform_indices = @transform_2, window_bounds = array<i64: 20, 1>}, {transform_indices = @transform_3, window_bounds = array<i64: 1, 14, 20, 28>}]} {
    %c0 = arith.constant 0 : index
    %c0_0 = arith.constant 0 : index
    %0 = vector.load %arg3[%c0, %c0_0] : memref<20x1xf32, #tpu.memory_space<vmem>>, vector<20x1xf32>
    %c0_1 = arith.constant 0 : index
    %c0_2 = arith.constant 0 : index
    %c0_3 = arith.constant 0 : index
    %1 = vector.load %arg2[%c0_1, %c0_2, %c0_3] : memref<2x40x250xf32, #tpu.memory_space<vmem>>, vector<1x40x250xf32>
    %2 = vector.shape_cast %1 : vector<1x40x250xf32> to vector<40x250xf32>
    %c1 = arith.constant 1 : index
    %c0_4 = arith.constant 0 : index
    %c0_5 = arith.constant 0 : index
    %3 = vector.load %arg2[%c1, %c0_4, %c0_5] : memref<2x40x250xf32, #tpu.memory_space<vmem>>, vector<1x40x250xf32>
    %4 = vector.shape_cast %3 : vector<1x40x250xf32> to vector<40x250xf32>
    %c0_i32 = arith.constant 0 : i32
    %c14_i32 = arith.constant 14 : i32
    %5 = arith.addi %c0_i32, %c14_i32 : i32
    %c1_i32 = arith.constant 1 : i32
    scf.for %arg5 = %c0_i32 to %5 step %c1_i32  : i32 {
      %c2_i32 = arith.constant 2 : i32
      %6 = arith.muli %c2_i32, %arg5 : i32
      %c0_7 = arith.constant 0 : index
      %7 = arith.index_cast %6 : i32 to index
      %c0_8 = arith.constant 0 : index
      %c0_9 = arith.constant 0 : index
      %8 = vector.load %arg1[%c0_7, %7, %c0_8, %c0_9] : memref<1x29x250x29xf32, #tpu.memory_space<vmem>>, vector<1x1x250x29xf32>
      %9 = vector.shape_cast %8 : vector<1x1x250x29xf32> to vector<250x29xf32>
      %c2_i32_10 = arith.constant 2 : i32
      %10 = arith.muli %c2_i32_10, %arg5 : i32
      %c1_i32_11 = arith.constant 1 : i32
      %11 = arith.addi %10, %c1_i32_11 : i32
      %c0_12 = arith.constant 0 : index
      %12 = arith.index_cast %11 : i32 to index
      %c0_13 = arith.constant 0 : index
      %c0_14 = arith.constant 0 : index
      %13 = vector.load %arg1[%c0_12, %12, %c0_13, %c0_14] : memref<1x29x250x29xf32, #tpu.memory_space<vmem>>, vector<1x1x250x29xf32>
      %14 = vector.shape_cast %13 : vector<1x1x250x29xf32> to vector<250x29xf32>
      %c2_i32_15 = arith.constant 2 : i32
      %15 = arith.muli %c2_i32_15, %arg5 : i32
      %c2_i32_16 = arith.constant 2 : i32
      %16 = arith.addi %15, %c2_i32_16 : i32
      %c0_17 = arith.constant 0 : index
      %17 = arith.index_cast %16 : i32 to index
      %c0_18 = arith.constant 0 : index
      %c0_19 = arith.constant 0 : index
      %18 = vector.load %arg1[%c0_17, %17, %c0_18, %c0_19] : memref<1x29x250x29xf32, #tpu.memory_space<vmem>>, vector<1x1x250x29xf32>
      %19 = vector.shape_cast %18 : vector<1x1x250x29xf32> to vector<250x29xf32>
      %cst = arith.constant dense<0.000000e+00> : vector<40x29xf32>
      %20 = tpu.matmul %2, %9, %cst {dimension_numbers = #tpu.dot_dimension_numbers<[1], [0], [0], [1], [0, 0, 1, 1], [], []>} : vector<40x250xf32>, vector<250x29xf32>, vector<40x29xf32> -> vector<40x29xf32>
      %cst_20 = arith.constant dense<0.000000e+00> : vector<40x29xf32>
      %21 = tpu.matmul %4, %14, %cst_20 {dimension_numbers = #tpu.dot_dimension_numbers<[1], [0], [0], [1], [0, 0, 1, 1], [], []>} : vector<40x250xf32>, vector<250x29xf32>, vector<40x29xf32> -> vector<40x29xf32>
      %22 = arith.addf %20, %21 : vector<40x29xf32>
      %23 = vector.extract_strided_slice %22 {offsets = [0, 0], sizes = [20, 28], strides = [1, 1]} : vector<40x29xf32> to vector<20x28xf32>
      %24 = vector.extract_strided_slice %22 {offsets = [20, 1], sizes = [20, 28], strides = [1, 1]} : vector<40x29xf32> to vector<20x28xf32>
      %25 = arith.addf %23, %24 : vector<20x28xf32>
      %cst_21 = arith.constant dense<0.000000e+00> : vector<40x29xf32>
      %26 = tpu.matmul %2, %14, %cst_21 {dimension_numbers = #tpu.dot_dimension_numbers<[1], [0], [0], [1], [0, 0, 1, 1], [], []>} : vector<40x250xf32>, vector<250x29xf32>, vector<40x29xf32> -> vector<40x29xf32>
      %cst_22 = arith.constant dense<0.000000e+00> : vector<40x29xf32>
      %27 = tpu.matmul %4, %19, %cst_22 {dimension_numbers = #tpu.dot_dimension_numbers<[1], [0], [0], [1], [0, 0, 1, 1], [], []>} : vector<40x250xf32>, vector<250x29xf32>, vector<40x29xf32> -> vector<40x29xf32>
      %28 = arith.addf %26, %27 : vector<40x29xf32>
      %29 = vector.extract_strided_slice %28 {offsets = [0, 0], sizes = [20, 28], strides = [1, 1]} : vector<40x29xf32> to vector<20x28xf32>
      %30 = vector.extract_strided_slice %28 {offsets = [20, 1], sizes = [20, 28], strides = [1, 1]} : vector<40x29xf32> to vector<20x28xf32>
      %31 = arith.addf %29, %30 : vector<20x28xf32>
      %32 = arith.maximumf %25, %31 : vector<20x28xf32>
      %33 = vector.broadcast %0 : vector<20x1xf32> to vector<20x28xf32>
      %34 = arith.addf %32, %33 : vector<20x28xf32>
      %cst_23 = arith.constant 0.000000e+00 : f32
      %35 = vector.broadcast %cst_23 : f32 to vector<20x28xf32>
      %36 = arith.maximumf %34, %35 : vector<20x28xf32>
      %c0_24 = arith.constant 0 : index
      %37 = arith.index_cast %arg5 : i32 to index
      %c0_25 = arith.constant 0 : index
      %c0_26 = arith.constant 0 : index
      %38 = vector.load %arg4[%c0_24, %37, %c0_25, %c0_26] : memref<1x14x20x28xf32, #tpu.memory_space<vmem>>, vector<1x1x20x28xf32>
      %39 = vector.shape_cast %38 : vector<1x1x20x28xf32> to vector<20x28xf32>
      %40 = vector.shape_cast %36 : vector<20x28xf32> to vector<1x1x20x28xf32>
      tpu.vector_store %arg4[%c0_24, %37, %c0_25, %c0_26], %40 {strides = array<i32>} : memref<1x14x20x28xf32, #tpu.memory_space<vmem>>, vector<1x1x20x28xf32>,
    }
    %c14_i32_6 = arith.constant 14 : i32
    return
  }
  func.func @transform_0(%arg0: i32) -> (i32, i32, i32, i32) {
    %c0_i32 = arith.constant 0 : i32
    %c0_i32_0 = arith.constant 0 : i32
    %c0_i32_1 = arith.constant 0 : i32
    %c0_i32_2 = arith.constant 0 : i32
    return %arg0, %c0_i32, %c0_i32_0, %c0_i32_1 : i32, i32, i32, i32
  }
  func.func @transform_1(%arg0: i32) -> (i32, i32, i32) {
    %c0_i32 = arith.constant 0 : i32
    %c0_i32_0 = arith.constant 0 : i32
    %c0_i32_1 = arith.constant 0 : i32
    %c0_i32_2 = arith.constant 0 : i32
    return %c0_i32, %c0_i32_0, %c0_i32_1 : i32, i32, i32
  }
  func.func @transform_2(%arg0: i32) -> (i32, i32) {
    %c0_i32 = arith.constant 0 : i32
    %c0_i32_0 = arith.constant 0 : i32
    %c0_i32_1 = arith.constant 0 : i32
    return %c0_i32, %c0_i32_0 : i32, i32
  }
  func.func @transform_3(%arg0: i32) -> (i32, i32, i32, i32) {
    %c0_i32 = arith.constant 0 : i32
    %c0_i32_0 = arith.constant 0 : i32
    %c0_i32_1 = arith.constant 0 : i32
    %c0_i32_2 = arith.constant 0 : i32
    return %arg0, %c0_i32, %c0_i32_0, %c0_i32_1 : i32, i32, i32, i32
  }
}

module attributes {stable_mosaic.version = 11 : i64} {
  func.func @_fc2_kernel(%arg0: i32, %arg1: memref<2x3920xf32, #tpu.memory_space<vmem>>, %arg2: memref<3920x64xf32, #tpu.memory_space<vmem>>, %arg3: memref<1x64xf32, #tpu.memory_space<vmem>>, %arg4: memref<64x4xf32, #tpu.memory_space<vmem>>, %arg5: memref<1x4xf32, #tpu.memory_space<vmem>>, %arg6: memref<2x4xf32, #tpu.memory_space<vmem>>) attributes {dimension_semantics = [#tpu.dimension_semantics<arbitrary>], iteration_bounds = array<i64: 1>, scalar_prefetch = 0 : i64, scratch_operands = 0 : i64, tpu.core_type = #tpu.core_type<tc>, window_params = [{pipeline_mode = #tpu.pipeline_mode<synchronous>, transform_indices = @transform_0, window_bounds = array<i64: 2, 3920>}, {pipeline_mode = #tpu.pipeline_mode<synchronous>, transform_indices = @transform_1, window_bounds = array<i64: 3920, 64>}, {pipeline_mode = #tpu.pipeline_mode<synchronous>, transform_indices = @transform_2, window_bounds = array<i64: 1, 64>}, {pipeline_mode = #tpu.pipeline_mode<synchronous>, transform_indices = @transform_3, window_bounds = array<i64: 64, 4>}, {pipeline_mode = #tpu.pipeline_mode<synchronous>, transform_indices = @transform_4, window_bounds = array<i64: 1, 4>}, {pipeline_mode = #tpu.pipeline_mode<synchronous>, transform_indices = @transform_5, window_bounds = array<i64: 2, 4>}]} {
    %c0 = arith.constant 0 : index
    %c0_0 = arith.constant 0 : index
    %0 = vector.load %arg1[%c0, %c0_0] : memref<2x3920xf32, #tpu.memory_space<vmem>>, vector<2x3920xf32>
    %c0_1 = arith.constant 0 : index
    %c0_2 = arith.constant 0 : index
    %1 = vector.load %arg2[%c0_1, %c0_2] : memref<3920x64xf32, #tpu.memory_space<vmem>>, vector<3920x64xf32>
    %cst = arith.constant dense<0.000000e+00> : vector<2x64xf32>
    %2 = tpu.matmul %0, %1, %cst {dimension_numbers = #tpu.dot_dimension_numbers<[1], [0], [0], [1], [0, 0, 1, 1], [], []>} : vector<2x3920xf32>, vector<3920x64xf32>, vector<2x64xf32> -> vector<2x64xf32>
    %c0_3 = arith.constant 0 : index
    %c0_4 = arith.constant 0 : index
    %3 = vector.load %arg3[%c0_3, %c0_4] : memref<1x64xf32, #tpu.memory_space<vmem>>, vector<1x64xf32>
    %4 = vector.broadcast %3 : vector<1x64xf32> to vector<2x64xf32>
    %5 = arith.addf %2, %4 : vector<2x64xf32>
    %cst_5 = arith.constant 0.000000e+00 : f32
    %6 = vector.broadcast %cst_5 : f32 to vector<2x64xf32>
    %7 = arith.maximumf %5, %6 : vector<2x64xf32>
    %c0_6 = arith.constant 0 : index
    %c0_7 = arith.constant 0 : index
    %8 = vector.load %arg4[%c0_6, %c0_7] : memref<64x4xf32, #tpu.memory_space<vmem>>, vector<64x4xf32>
    %cst_8 = arith.constant dense<0.000000e+00> : vector<2x4xf32>
    %9 = tpu.matmul %7, %8, %cst_8 {dimension_numbers = #tpu.dot_dimension_numbers<[1], [0], [0], [1], [0, 0, 1, 1], [], []>} : vector<2x64xf32>, vector<64x4xf32>, vector<2x4xf32> -> vector<2x4xf32>
    %c0_9 = arith.constant 0 : index
    %c0_10 = arith.constant 0 : index
    %10 = vector.load %arg5[%c0_9, %c0_10] : memref<1x4xf32, #tpu.memory_space<vmem>>, vector<1x4xf32>
    %11 = vector.broadcast %10 : vector<1x4xf32> to vector<2x4xf32>
    %12 = arith.addf %9, %11 : vector<2x4xf32>
    %c0_11 = arith.constant 0 : index
    %c0_12 = arith.constant 0 : index
    %13 = vector.load %arg6[%c0_11, %c0_12] : memref<2x4xf32, #tpu.memory_space<vmem>>, vector<2x4xf32>
    tpu.vector_store %arg6[%c0_11, %c0_12], %12 {strides = array<i32>} : memref<2x4xf32, #tpu.memory_space<vmem>>, vector<2x4xf32>,
    return
  }
  func.func @transform_0(%arg0: i32) -> (i32, i32) {
    %c0_i32 = arith.constant 0 : i32
    %c0_i32_0 = arith.constant 0 : i32
    %c0_i32_1 = arith.constant 0 : i32
    return %c0_i32, %c0_i32_0 : i32, i32
  }
  func.func @transform_1(%arg0: i32) -> (i32, i32) {
    %c0_i32 = arith.constant 0 : i32
    %c0_i32_0 = arith.constant 0 : i32
    %c0_i32_1 = arith.constant 0 : i32
    return %c0_i32, %c0_i32_0 : i32, i32
  }
  func.func @transform_2(%arg0: i32) -> (i32, i32) {
    %c0_i32 = arith.constant 0 : i32
    %c0_i32_0 = arith.constant 0 : i32
    %c0_i32_1 = arith.constant 0 : i32
    return %c0_i32, %c0_i32_0 : i32, i32
  }
  func.func @transform_3(%arg0: i32) -> (i32, i32) {
    %c0_i32 = arith.constant 0 : i32
    %c0_i32_0 = arith.constant 0 : i32
    %c0_i32_1 = arith.constant 0 : i32
    return %c0_i32, %c0_i32_0 : i32, i32
  }
  func.func @transform_4(%arg0: i32) -> (i32, i32) {
    %c0_i32 = arith.constant 0 : i32
    %c0_i32_0 = arith.constant 0 : i32
    %c0_i32_1 = arith.constant 0 : i32
    return %c0_i32, %c0_i32_0 : i32, i32
  }
  func.func @transform_5(%arg0: i32) -> (i32, i32) {
    %c0_i32 = arith.constant 0 : i32
    %c0_i32_0 = arith.constant 0 : i32
    %c0_i32_1 = arith.constant 0 : i32
    return %c0_i32, %c0_i32_0 : i32, i32
  }
}

</mosaic_0001>

<llo_original>
// kernel: net_forward.3
$region0: #{net_forward.3}
  #allocation0 [shape = 'u32[]', space=smem, size = 0x4, offset = 0x4, fixed_abs, tag = 'smem constant byte address 0x4 - core index']
  #allocation1 [shape = 'u32[144,128]{1,0:T(1,128)}', space=vmem, size = 0x12000, scoped, tag = 'internal scratch']
  %s0 = inlined_call_operand.vmem [shape: f32[2,291,25,291], index: 0, kind: input, shape index: {}]
  %s1 = inlined_call_operand.vmem [shape: f32[2,20,25], index: 1, kind: input, shape index: {}]
  %s2 = inlined_call_operand.vmem [shape: f32[10,1], index: 2, kind: input, shape index: {}]
  %s3 = inlined_call_operand.vmem [shape: f32[2,145,10,290], index: 3, kind: output, shape index: {}]
  %s4 = sld [smem:[#allocation0]]
  $region52: #{net_forward.3} parent=0
    _
  %s6 = ssub.s32 1, %s4
  %s7 = scalar_select 0, %s6, %s4
  loop: start=0, step=1, limit=4
  $region2: #{net_forward.3} parent=0 // loop_pre_header
    _
  $region3: #{net_forward.3} parent=0 // loop_header
    %s9 = sphi 0, %s13
    %p10 = scmp.ge.s32.totalorder %s9, 4
    %s19 = sphi 0, %s21
    %s22 = sphi 0, %s19
    %s23 = sphi 0, %s22
    %s39 = sphi 0, %s23
    %s43 = sphi 0, %s43
    %s45 = sphi 0, %s43
    %s46 = sphi 0, %s45
    %s60 = sphi 0, %s46
    %s64 = sphi 0, %s64
    %s66 = sphi 0, %s64
    %s67 = sphi 0, %s66
    %s81 = sphi 0, %s67
    %s87 = sphi 0, %s89
    %s90 = sphi 0, %s87
    %s91 = sphi 0, %s90
    %s107 = sphi 0, %s91
  $region4: #{net_forward.3} parent=0 // loop_header_branch
    %12 = sbr.rel (%p10) target = $region8
  $region5: #{net_forward.3} parent=0 // loop_body
    %s14 = ssub.s32 %s9, 1
    %s15 = ssub.s32 %s9, 2
    %s16 = sadd.s32 %s9, 1
    %s17 = ssub.s32 %s9, %s16
    %p18 = scmp.eq.s32.totalorder %s17, 0
    %s20 = sadd.s32 %s19, 1
    %s21 = scalar_select %p18, %s19, %s20
    %p24 = pneg %p18
    %p25 = scmp.eq.s32.totalorder %s9, 1
    %p26 = por %p24, %p25
    %p27 = scmp.ne.s32.totalorder %s19, %s22
    %p28 = scmp.eq.s32.totalorder %s9, 0
    %p29 = por %p27, %p28
    %p30 = scmp.ne.s32.totalorder %s19, %s22
    %p31 = scmp.eq.s32.totalorder %s14, 1
    %p32 = por %p30, %p31
    %p33 = scmp.ne.s32.totalorder %s22, %s23
    %p34 = scmp.eq.s32.totalorder %s14, 0
    %p35 = por %p33, %p34
    %p36 = scmp.ne.s32.totalorder %s22, %s23
    %p37 = scmp.eq.s32.totalorder %s15, 1
    %p38 = por %p36, %p37
    %p40 = scmp.ne.s32.totalorder %s23, %s39
    %p41 = scmp.eq.s32.totalorder %s15, 0
    %p42 = por %p40, %p41
    %s44 = sadd.s32 %s43, 1
    %p47 = scmp.eq.s32.totalorder %s9, 1
    %p48 = scmp.ne.s32.totalorder %s43, %s45
    %p49 = scmp.eq.s32.totalorder %s9, 0
    %p50 = por %p48, %p49
    %p51 = scmp.ne.s32.totalorder %s43, %s45
    %p52 = scmp.eq.s32.totalorder %s14, 1
    %p53 = por %p51, %p52
    %p54 = scmp.ne.s32.totalorder %s45, %s46
    %p55 = scmp.eq.s32.totalorder %s14, 0
    %p56 = por %p54, %p55
    %p57 = scmp.ne.s32.totalorder %s45, %s46
    %p58 = scmp.eq.s32.totalorder %s15, 1
    %p59 = por %p57, %p58
    %p61 = scmp.ne.s32.totalorder %s46, %s60
    %p62 = scmp.eq.s32.totalorder %s15, 0
    %p63 = por %p61, %p62
    %s65 = sadd.s32 %s64, 1
    %p68 = scmp.eq.s32.totalorder %s9, 1
    %p69 = scmp.ne.s32.totalorder %s64, %s66
    %p70 = scmp.eq.s32.totalorder %s9, 0
    %p71 = por %p69, %p70
    %p72 = scmp.ne.s32.totalorder %s64, %s66
    %p73 = scmp.eq.s32.totalorder %s14, 1
    %p74 = por %p72, %p73
    %p75 = scmp.ne.s32.totalorder %s66, %s67
    %p76 = scmp.eq.s32.totalorder %s14, 0
    %p77 = por %p75, %p76
    %p78 = scmp.ne.s32.totalorder %s66, %s67
    %p79 = scmp.eq.s32.totalorder %s15, 1
    %p80 = por %p78, %p79
    %p82 = scmp.ne.s32.totalorder %s67, %s81
    %p83 = scmp.eq.s32.totalorder %s15, 0
    %p84 = por %p82, %p83
    %s85 = ssub.s32 %s9, %s16
    %p86 = scmp.eq.s32.totalorder %s85, 0
    %s88 = sadd.s32 %s87, 1
    %s89 = scalar_select %p86, %s87, %s88
    %p92 = pneg %p86
    %p93 = scmp.eq.s32.totalorder %s9, 1
    %p94 = por %p92, %p93
    %p95 = scmp.ne.s32.totalorder %s87, %s90
    %p96 = scmp.eq.s32.totalorder %s9, 0
    %p97 = por %p95, %p96
    %p98 = scmp.ne.s32.totalorder %s87, %s90
    %p99 = scmp.eq.s32.totalorder %s14, 1
    %p100 = por %p98, %p99
    %p101 = scmp.ne.s32.totalorder %s90, %s91
    %p102 = scmp.eq.s32.totalorder %s14, 0
    %p103 = por %p101, %p102
    %p104 = scmp.ne.s32.totalorder %s90, %s91
    %p105 = scmp.eq.s32.totalorder %s15, 1
    %p106 = por %p104, %p105
    %p108 = scmp.ne.s32.totalorder %s91, %s107
    %p109 = scmp.eq.s32.totalorder %s15, 0
    %p110 = por %p108, %p109
    %p111 = scmp.le.s32.totalorder 1, %s9
    %p112 = scmp.lt.s32.totalorder %s9, 3
    %p113 = pnand %p111, %p112
    %p114 = pneg %p113
    // Predicated region
    $region9: #{net_forward.3} parent=5 // pred_check
      _
    $region10: #{net_forward.3} parent=5 // pred_check_branch
      %116 = sbr.rel (%p113) target = $region12
    $region11: #{net_forward.3} parent=5 // pred_region
      %s117 = ssub.s32 %s9, 1
      // Predicated region
      $region13: #{net_forward.3} parent=11 // pred_check
        %p118 = pneg %p56
      $region14: #{net_forward.3} parent=11 // pred_check_branch
        %120 = sbr.rel (%p118) target = $region16
      $region15: #{net_forward.3} parent=11 // pred_region
        _
      $region16: #{net_forward.3} parent=11 // pred_fallthru
        _
      // Predicated region
      $region17: #{net_forward.3} parent=11 // pred_check
        %p121 = pneg %p77
      $region18: #{net_forward.3} parent=11 // pred_check_branch
        %123 = sbr.rel (%p121) target = $region20
      $region19: #{net_forward.3} parent=11 // pred_region
        _
      $region20: #{net_forward.3} parent=11 // pred_fallthru
        _
    $region12: #{net_forward.3} parent=5 // pred_fallthru
      _
    %p124 = scmp.lt.s32.totalorder %s9, 2
    // Predicated region
    $region21: #{net_forward.3} parent=5 // pred_check
      %p125 = pneg %p124
    $region22: #{net_forward.3} parent=5 // pred_check_branch
      %127 = sbr.rel (%p125) target = $region24
    $region23: #{net_forward.3} parent=5 // pred_region
      // Predicated region
      $region25: #{net_forward.3} parent=23 // pred_check
        %p128 = pneg %p29
      $region26: #{net_forward.3} parent=23 // pred_check_branch
        %130 = sbr.rel (%p128) target = $region28
      $region27: #{net_forward.3} parent=23 // pred_region
        %p131 = scmp.lt.s32.totalorder %s9, 1
        %s132 = scalar_select %p131, %s9, 1
        %s133 = smul.addr %s132, 3492
        %s134 = smul.addr %s133, 8
        %s135 = scalar_lea.vmem %s0, %s134
      $region28: #{net_forward.3} parent=23 // pred_fallthru
        _
    $region24: #{net_forward.3} parent=5 // pred_fallthru
      _
    %p136 = scmp.le.s32.totalorder 1, %s9
    %p137 = scmp.lt.s32.totalorder %s9, 3
    %p138 = pnand %p136, %p137
    %p139 = pneg %p138
    // Predicated region
    $region29: #{net_forward.3} parent=5 // pred_check
      _
    $region30: #{net_forward.3} parent=5 // pred_check_branch
      %141 = sbr.rel (%p138) target = $region32
    $region31: #{net_forward.3} parent=5 // pred_region
      %s142 = ssub.s32 %s9, 1
      %p143 = scmp.lt.s32.totalorder %s14, 1
      %s144 = scalar_select %p143, %s14, 1
      %s145 = smul.addr %s144, 3492
      %s146 = smul.addr %s145, 8
      %s147 = scalar_lea.vmem %s0, %s146
      %p148 = pneg %p35
      %p149 = pneg %p32
      %p150 = pneg %p56
      %p151 = pneg %p53
      %p152 = pneg %p77
      %p153 = pneg %p74
      %p154 = pneg %p103
      %p155 = pneg %p100
      %p156 = scmp.lt.s32.totalorder %s14, 1
      %s157 = scalar_select %p156, %s14, 1
      %s158 = smul.addr %s157, 870
      %s159 = smul.addr %s158, 8
      %s160 = scalar_lea.vmem %s3, %s159
      %p161 = scmp.lt.s32.totalorder %s14, 1
      %s162 = scalar_select %p161, %s14, 1
      %s163 = smul.addr %s162, 3492
      %s164 = smul.addr %s163, 8
      %s165 = scalar_lea.vmem %s0, %s164
      %p166 = scmp.lt.s32.totalorder %s14, 1
      %s167 = scalar_select %p166, %s14, 1
      %s168 = smul.addr %s167, 870
      %s169 = smul.addr %s168, 8
      %s170 = scalar_lea.vmem %s3, %s169
      %v171 = vld [vmem:[%s2] sm:$0xff]
      %v172 = vld [vmem:[%s2 + $0x8] sm:$0x3]
      %v173 = vld [vmem:[%s1] sm:$0xff]
      %v174 = vld [vmem:[%s1 + $0x8] sm:$0xff]
      %v175 = vld [vmem:[%s1 + $0x10] sm:$0xf]
      %s176 = scalar_lea.vmem %s1, 24
      %v177 = vld [vmem:[%s176] sm:$0xff]
      %v178 = vld [vmem:[%s176 + $0x8] sm:$0xff]
      %v179 = vld [vmem:[%s176 + $0x10] sm:$0xf]
      loop: start=0, step=1, limit=145
      $region33: #{net_forward.3} parent=31 // loop_pre_header
        _
      $region34: #{net_forward.3} parent=31 // loop_header
        %s181 = sphi 0, %s185
        %p182 = scmp.ge.s32.totalorder %s181, 145
      $region35: #{net_forward.3} parent=31 // loop_header_branch
        %184 = sbr.rel (%p182) target = $region39
      $region36: #{net_forward.3} parent=31 // loop_body
        %s186 = smul.u32 %s181, 2
        %s187 = smul.u32 %s186, 12
        %s188 = smul.addr %s187, 8
        %s189 = scalar_lea.vmem %s165, %s188
        %v190 = vld [vmem:[%s189] sm:$0xff]
        %v191 = vld [vmem:[%s189 + $0x8] sm:$0xff]
        %v192 = vld [vmem:[%s189 + $0x10] sm:$0xff]
        %v193 = vld [vmem:[%s189 + $0x18] sm:$0xff]
        %v194 = vld [vmem:[%s189 + $0x20] sm:$0xff]
        %v195 = vld [vmem:[%s189 + $0x28] sm:$0xff]
        %v196 = vld [vmem:[%s189 + $0x30] sm:$0xff]
        %v197 = vld [vmem:[%s189 + $0x38] sm:$0xff]
        %v198 = vld [vmem:[%s189 + $0x40] sm:$0xff]
        %v199 = vld [vmem:[%s189 + $0x48] sm:$0x1]
        %v200 = vld [vmem:[%s189 + $0x50] sm:$0x1]
        %v201 = vld [vmem:[%s189 + $0x58] sm:$0x1]
        %s202 = sadd.s32 %s186, 1
        %s203 = smul.u32 %s202, 12
        %s204 = smul.addr %s203, 8
        %s205 = scalar_lea.vmem %s165, %s204
        %v206 = vld [vmem:[%s205] sm:$0xff]
        %v207 = vld [vmem:[%s205 + $0x8] sm:$0xff]
        %v208 = vld [vmem:[%s205 + $0x10] sm:$0xff]
        %v209 = vld [vmem:[%s205 + $0x18] sm:$0xff]
        %v210 = vld [vmem:[%s205 + $0x20] sm:$0xff]
        %v211 = vld [vmem:[%s205 + $0x28] sm:$0xff]
        %v212 = vld [vmem:[%s205 + $0x30] sm:$0xff]
        %v213 = vld [vmem:[%s205 + $0x38] sm:$0xff]
        %v214 = vld [vmem:[%s205 + $0x40] sm:$0xff]
        %v215 = vld [vmem:[%s205 + $0x48] sm:$0x1]
        %v216 = vld [vmem:[%s205 + $0x50] sm:$0x1]
        %v217 = vld [vmem:[%s205 + $0x58] sm:$0x1]
        %s218 = sadd.s32 %s186, 2
        %s219 = smul.u32 %s218, 12
        %s220 = smul.addr %s219, 8
        %s221 = scalar_lea.vmem %s165, %s220
        %v222 = vld [vmem:[%s221] sm:$0xff]
        %v223 = vld [vmem:[%s221 + $0x8] sm:$0xff]
        %v224 = vld [vmem:[%s221 + $0x10] sm:$0xff]
        %v225 = vld [vmem:[%s221 + $0x18] sm:$0xff]
        %v226 = vld [vmem:[%s221 + $0x20] sm:$0xff]
        %v227 = vld [vmem:[%s221 + $0x28] sm:$0xff]
        %v228 = vld [vmem:[%s221 + $0x30] sm:$0xff]
        %v229 = vld [vmem:[%s221 + $0x38] sm:$0xff]
        %v230 = vld [vmem:[%s221 + $0x40] sm:$0xff]
        %v231 = vld [vmem:[%s221 + $0x48] sm:$0x1]
        %v232 = vld [vmem:[%s221 + $0x50] sm:$0x1]
        %v233 = vld [vmem:[%s221 + $0x58] sm:$0x1]
        %vm234 = vcmask 203776
        %v236 = vsel %vm234, %v177, 0
        %v239 = vsel %vm234, %v178, 0
        %v242 = vsel %vm234, %v179, 0
        %vm244 = vcmask 1040384
        %v246 = vsel %vm244, %v215, 0
        %v249 = vsel %vm244, %v216, 0
        %v252 = vsel %vm244, %v217, 0
        %254 = vmatprep.subr.mxu0 0.0
        %255 = vmatpush1.msra.mxu0 0.0
        %256 = vmatprep.subr.mxu0 0.0
        %257 = vmatpush1.msra.mxu0 0.0
        %258 = vmatprep.subr.mxu0 0.0
        %259 = vmatpush1.msra.mxu0 0.0
        %260 = vmatprep.subr.mxu0 0.0
        %261 = vmatpush1.msra.mxu0 0.0
        %262 = vmatprep.subr.mxu0 0.0
        %263 = vmatpush1.msra.mxu0 0.0
        %264 = vmatprep.subr.mxu0 0.0
        %265 = vmatpush1.msra.mxu0 0.0
        %266 = vmatprep.subr.mxu0 0.0
        %267 = vmatpush1.msra.mxu0 0.0
        %268 = vmatprep.subr.mxu0 0.0
        %269 = vmatpush1.msra.mxu0 0.0
        %270 = vmatprep.subr.mxu0 0.0
        %271 = vmatpush1.msra.mxu0 0.0
        %272 = vmatprep.subr.mxu0 0.0
        %273 = vmatpush1.msra.mxu0 0.0
        %274 = vmatprep.subr.mxu0 0.0
        %275 = vmatpush1.msra.mxu0 0.0
        %276 = vmatprep.subr.mxu0 0.0
        %277 = vmatpush1.msra.mxu0 0.0
        %278 = vmatprep.subr.mxu0 %v249
        %279 = vmatpush1.msra.mxu0 %v246
        %280 = vmatprep.subr.mxu0 %v213
        %281 = vmatpush1.msra.mxu0 %v212
        %282 = vmatprep.subr.mxu0 %v210
        %283 = vmatpush1.msra.mxu0 %v209
        %284 = vmatprep.subr.mxu0 %v207
        %285 = vmatpush1.msra.mxu0 %v206
        %286 = vmatprep.subr.mxu0 0.0
        %287 = vmatpush2.msra.mxu0 0.0
        %288 = vmatprep.subr.mxu0 0.0
        %289 = vmatpush2.msra.mxu0 0.0
        %290 = vmatprep.subr.mxu0 0.0
        %291 = vmatpush2.msra.mxu0 0.0
        %292 = vmatprep.subr.mxu0 0.0
        %293 = vmatpush2.msra.mxu0 0.0
        %294 = vmatprep.subr.mxu0 0.0
        %295 = vmatpush2.msra.mxu0 0.0
        %296 = vmatprep.subr.mxu0 0.0
        %297 = vmatpush2.msra.mxu0 0.0
        %298 = vmatprep.subr.mxu0 0.0
        %299 = vmatpush2.msra.mxu0 0.0
        %300 = vmatprep.subr.mxu0 0.0
        %301 = vmatpush2.msra.mxu0 0.0
        %302 = vmatprep.subr.mxu0 0.0
        %303 = vmatpush2.msra.mxu0 0.0
        %304 = vmatprep.subr.mxu0 0.0
        %305 = vmatpush2.msra.mxu0 0.0
        %306 = vmatprep.subr.mxu0 0.0
        %307 = vmatpush2.msra.mxu0 0.0
        %308 = vmatprep.subr.mxu0 0.0
        %309 = vmatpush2.msra.mxu0 0.0
        %310 = vmatprep.subr.mxu0 0.0
        %311 = vmatpush2.msra.mxu0 0.0
        %312 = vmatprep.subr.mxu0 0.0
        %313 = vmatpush2.msra.mxu0 0.0
        %314 = vmatprep.subr.mxu0 0.0
        %315 = vmatpush2.msra.mxu0 0.0
        %316 = vmatprep.subr.mxu0 0.0
        %317 = vmatpush2.msra.mxu0 0.0
        %318 = vmatprep.mubr.f32.mxu0 0.0
        %319 = vmatmul.mubr.f32.gmra.mxu0 %v236
        %v320 = vpop.f32.mrf.mxu0
        %v321 = vadd.f32 0.0, %v320
        %v322 = vpop.f32.mrf.mxu0
        %v323 = vadd.f32 0.0, %v322
        %324 = vmatprep.mubr.f32.mxu0 0.0
        %325 = vmatmul.mubr.f32.gmra.mxu0 %v239
        %v326 = vpop.f32.mrf.mxu0
        %v327 = vadd.f32 0.0, %v326
        %v328 = vpop.f32.mrf.mxu0
        %v329 = vadd.f32 0.0, %v328
        %330 = vmatprep.mubr.f32.mxu0 0.0
        %331 = vmatmul.mubr.f32.gmra.mxu0 %v242
        %v332 = vpop.f32.mrf.mxu0
        %v333 = vadd.f32 0.0, %v332
        %v334 = vpop.f32.mrf.mxu0
        %v335 = vadd.f32 0.0, %v334
        %336 = vdwg.mxu0
        %337 = vmatprep.subr.mxu0 0.0
        %338 = vmatpush1.msra.mxu0 0.0
        %339 = vmatprep.subr.mxu0 0.0
        %340 = vmatpush1.msra.mxu0 0.0
        %341 = vmatprep.subr.mxu0 0.0
        %342 = vmatpush1.msra.mxu0 0.0
        %343 = vmatprep.subr.mxu0 0.0
        %344 = vmatpush1.msra.mxu0 0.0
        %345 = vmatprep.subr.mxu0 0.0
        %346 = vmatpush1.msra.mxu0 0.0
        %347 = vmatprep.subr.mxu0 0.0
        %348 = vmatpush1.msra.mxu0 0.0
        %349 = vmatprep.subr.mxu0 0.0
        %350 = vmatpush1.msra.mxu0 0.0
        %351 = vmatprep.subr.mxu0 0.0
        %352 = vmatpush1.msra.mxu0 0.0
        %353 = vmatprep.subr.mxu0 0.0
        %354 = vmatpush1.msra.mxu0 0.0
        %355 = vmatprep.subr.mxu0 0.0
        %356 = vmatpush1.msra.mxu0 0.0
        %357 = vmatprep.subr.mxu0 0.0
        %358 = vmatpush1.msra.mxu0 0.0
        %359 = vmatprep.subr.mxu0 0.0
        %360 = vmatpush1.msra.mxu0 0.0
        %361 = vmatprep.subr.mxu0 0.0
        %362 = vmatpush1.msra.mxu0 %v252
        %363 = vmatprep.subr.mxu0 0.0
        %364 = vmatpush1.msra.mxu0 %v214
        %365 = vmatprep.subr.mxu0 0.0
        %366 = vmatpush1.msra.mxu0 %v211
        %367 = vmatprep.subr.mxu0 0.0
        %368 = vmatpush1.msra.mxu0 %v208
        %369 = vmatprep.subr.mxu0 0.0
        %370 = vmatpush2.msra.mxu0 0.0
        %371 = vmatprep.subr.mxu0 0.0
        %372 = vmatpush2.msra.mxu0 0.0
        %373 = vmatprep.subr.mxu0 0.0
        %374 = vmatpush2.msra.mxu0 0.0
        %375 = vmatprep.subr.mxu0 0.0
        %376 = vmatpush2.msra.mxu0 0.0
        %377 = vmatprep.subr.mxu0 0.0
        %378 = vmatpush2.msra.mxu0 0.0
        %379 = vmatprep.subr.mxu0 0.0
        %380 = vmatpush2.msra.mxu0 0.0
        %381 = vmatprep.subr.mxu0 0.0
        %382 = vmatpush2.msra.mxu0 0.0
        %383 = vmatprep.subr.mxu0 0.0
        %384 = vmatpush2.msra.mxu0 0.0
        %385 = vmatprep.subr.mxu0 0.0
        %386 = vmatpush2.msra.mxu0 0.0
        %387 = vmatprep.subr.mxu0 0.0
        %388 = vmatpush2.msra.mxu0 0.0
        %389 = vmatprep.subr.mxu0 0.0
        %390 = vmatpush2.msra.mxu0 0.0
        %391 = vmatprep.subr.mxu0 0.0
        %392 = vmatpush2.msra.mxu0 0.0
        %393 = vmatprep.subr.mxu0 0.0
        %394 = vmatpush2.msra.mxu0 0.0
        %395 = vmatprep.subr.mxu0 0.0
        %396 = vmatpush2.msra.mxu0 0.0
        %397 = vmatprep.subr.mxu0 0.0
        %398 = vmatpush2.msra.mxu0 0.0
        %399 = vmatprep.subr.mxu0 0.0
        %400 = vmatpush2.msra.mxu0 0.0
        %401 = vmatprep.mubr.f32.mxu0 0.0
        %402 = vmatmul.mubr.f32.gmra.mxu0 %v236
        %v403 = vpop.f32.mrf.mxu0
        %v404 = vadd.f32 0.0, %v403
        %v405 = vpop.f32.mrf.mxu0
        %406 = vmatprep.mubr.f32.mxu0 0.0
        %407 = vmatmul.mubr.f32.gmra.mxu0 %v239
        %v408 = vpop.f32.mrf.mxu0
        %v409 = vadd.f32 0.0, %v408
        %v410 = vpop.f32.mrf.mxu0
        %411 = vmatprep.mubr.f32.mxu0 0.0
        %412 = vmatmul.mubr.f32.gmra.mxu0 %v242
        %v413 = vpop.f32.mrf.mxu0
        %v414 = vadd.f32 0.0, %v413
        %v415 = vpop.f32.mrf.mxu0
        %416 = vdwg.mxu0
        %v418 = vsel %vm234, %v173, 0
        %v421 = vsel %vm234, %v174, 0
        %v424 = vsel %vm234, %v175, 0
        %v427 = vsel %vm244, %v199, 0
        %v430 = vsel %vm244, %v200, 0
        %v433 = vsel %vm244, %v201, 0
        %435 = vmatprep.subr.mxu0 0.0
        %436 = vmatpush1.msra.mxu0 0.0
        %437 = vmatprep.subr.mxu0 0.0
        %438 = vmatpush1.msra.mxu0 0.0
        %439 = vmatprep.subr.mxu0 0.0
        %440 = vmatpush1.msra.mxu0 0.0
        %441 = vmatprep.subr.mxu0 0.0
        %442 = vmatpush1.msra.mxu0 0.0
        %443 = vmatprep.subr.mxu0 0.0
        %444 = vmatpush1.msra.mxu0 0.0
        %445 = vmatprep.subr.mxu0 0.0
        %446 = vmatpush1.msra.mxu0 0.0
        %447 = vmatprep.subr.mxu0 0.0
        %448 = vmatpush1.msra.mxu0 0.0
        %449 = vmatprep.subr.mxu0 0.0
        %450 = vmatpush1.msra.mxu0 0.0
        %451 = vmatprep.subr.mxu0 0.0
        %452 = vmatpush1.msra.mxu0 0.0
        %453 = vmatprep.subr.mxu0 0.0
        %454 = vmatpush1.msra.mxu0 0.0
        %455 = vmatprep.subr.mxu0 0.0
        %456 = vmatpush1.msra.mxu0 0.0
        %457 = vmatprep.subr.mxu0 0.0
        %458 = vmatpush1.msra.mxu0 0.0
        %459 = vmatprep.subr.mxu0 %v430
        %460 = vmatpush1.msra.mxu0 %v427
        %461 = vmatprep.subr.mxu0 %v197
        %462 = vmatpush1.msra.mxu0 %v196
        %463 = vmatprep.subr.mxu0 %v194
        %464 = vmatpush1.msra.mxu0 %v193
        %465 = vmatprep.subr.mxu0 %v191
        %466 = vmatpush1.msra.mxu0 %v190
        %467 = vmatprep.subr.mxu0 0.0
        %468 = vmatpush2.msra.mxu0 0.0
        %469 = vmatprep.subr.mxu0 0.0
        %470 = vmatpush2.msra.mxu0 0.0
        %471 = vmatprep.subr.mxu0 0.0
        %472 = vmatpush2.msra.mxu0 0.0
        %473 = vmatprep.subr.mxu0 0.0
        %474 = vmatpush2.msra.mxu0 0.0
        %475 = vmatprep.subr.mxu0 0.0
        %476 = vmatpush2.msra.mxu0 0.0
        %477 = vmatprep.subr.mxu0 0.0
        %478 = vmatpush2.msra.mxu0 0.0
        %479 = vmatprep.subr.mxu0 0.0
        %480 = vmatpush2.msra.mxu0 0.0
        %481 = vmatprep.subr.mxu0 0.0
        %482 = vmatpush2.msra.mxu0 0.0
        %483 = vmatprep.subr.mxu0 0.0
        %484 = vmatpush2.msra.mxu0 0.0
        %485 = vmatprep.subr.mxu0 0.0
        %486 = vmatpush2.msra.mxu0 0.0
        %487 = vmatprep.subr.mxu0 0.0
        %488 = vmatpush2.msra.mxu0 0.0
        %489 = vmatprep.subr.mxu0 0.0
        %490 = vmatpush2.msra.mxu0 0.0
        %491 = vmatprep.subr.mxu0 0.0
        %492 = vmatpush2.msra.mxu0 0.0
        %493 = vmatprep.subr.mxu0 0.0
        %494 = vmatpush2.msra.mxu0 0.0
        %495 = vmatprep.subr.mxu0 0.0
        %496 = vmatpush2.msra.mxu0 0.0
        %497 = vmatprep.subr.mxu0 0.0
        %498 = vmatpush2.msra.mxu0 0.0
        %499 = vmatprep.mubr.f32.mxu0 0.0
        %500 = vmatmul.mubr.f32.gmra.mxu0 %v418
        %v501 = vpop.f32.mrf.mxu0
        %v502 = vadd.f32 %v321, %v501
        %v503 = vpop.f32.mrf.mxu0
        %v504 = vadd.f32 %v323, %v503
        %505 = vmatprep.mubr.f32.mxu0 0.0
        %506 = vmatmul.mubr.f32.gmra.mxu0 %v421
        %v507 = vpop.f32.mrf.mxu0
        %v508 = vadd.f32 %v327, %v507
        %v509 = vpop.f32.mrf.mxu0
        %v510 = vadd.f32 %v329, %v509
        %511 = vmatprep.mubr.f32.mxu0 0.0
        %512 = vmatmul.mubr.f32.gmra.mxu0 %v424
        %v513 = vpop.f32.mrf.mxu0
        %v514 = vadd.f32 %v333, %v513
        %v515 = vpop.f32.mrf.mxu0
        %v516 = vadd.f32 %v335, %v515
        %517 = vdwg.mxu0
        %518 = vmatprep.subr.mxu0 0.0
        %519 = vmatpush1.msra.mxu0 0.0
        %520 = vmatprep.subr.mxu0 0.0
        %521 = vmatpush1.msra.mxu0 0.0
        %522 = vmatprep.subr.mxu0 0.0
        %523 = vmatpush1.msra.mxu0 0.0
        %524 = vmatprep.subr.mxu0 0.0
        %525 = vmatpush1.msra.mxu0 0.0
        %526 = vmatprep.subr.mxu0 0.0
        %527 = vmatpush1.msra.mxu0 0.0
        %528 = vmatprep.subr.mxu0 0.0
        %529 = vmatpush1.msra.mxu0 0.0
        %530 = vmatprep.subr.mxu0 0.0
        %531 = vmatpush1.msra.mxu0 0.0
        %532 = vmatprep.subr.mxu0 0.0
        %533 = vmatpush1.msra.mxu0 0.0
        %534 = vmatprep.subr.mxu0 0.0
        %535 = vmatpush1.msra.mxu0 0.0
        %536 = vmatprep.subr.mxu0 0.0
        %537 = vmatpush1.msra.mxu0 0.0
        %538 = vmatprep.subr.mxu0 0.0
        %539 = vmatpush1.msra.mxu0 0.0
        %540 = vmatprep.subr.mxu0 0.0
        %541 = vmatpush1.msra.mxu0 0.0
        %542 = vmatprep.subr.mxu0 0.0
        %543 = vmatpush1.msra.mxu0 %v433
        %544 = vmatprep.subr.mxu0 0.0
        %545 = vmatpush1.msra.mxu0 %v198
        %546 = vmatprep.subr.mxu0 0.0
        %547 = vmatpush1.msra.mxu0 %v195
        %548 = vmatprep.subr.mxu0 0.0
        %549 = vmatpush1.msra.mxu0 %v192
        %550 = vmatprep.subr.mxu0 0.0
        %551 = vmatpush2.msra.mxu0 0.0
        %552 = vmatprep.subr.mxu0 0.0
        %553 = vmatpush2.msra.mxu0 0.0
        %554 = vmatprep.subr.mxu0 0.0
        %555 = vmatpush2.msra.mxu0 0.0
        %556 = vmatprep.subr.mxu0 0.0
        %557 = vmatpush2.msra.mxu0 0.0
        %558 = vmatprep.subr.mxu0 0.0
        %559 = vmatpush2.msra.mxu0 0.0
        %560 = vmatprep.subr.mxu0 0.0
        %561 = vmatpush2.msra.mxu0 0.0
        %562 = vmatprep.subr.mxu0 0.0
        %563 = vmatpush2.msra.mxu0 0.0
        %564 = vmatprep.subr.mxu0 0.0
        %565 = vmatpush2.msra.mxu0 0.0
        %566 = vmatprep.subr.mxu0 0.0
        %567 = vmatpush2.msra.mxu0 0.0
        %568 = vmatprep.subr.mxu0 0.0
        %569 = vmatpush2.msra.mxu0 0.0
        %570 = vmatprep.subr.mxu0 0.0
        %571 = vmatpush2.msra.mxu0 0.0
        %572 = vmatprep.subr.mxu0 0.0
        %573 = vmatpush2.msra.mxu0 0.0
        %574 = vmatprep.subr.mxu0 0.0
        %575 = vmatpush2.msra.mxu0 0.0
        %576 = vmatprep.subr.mxu0 0.0
        %577 = vmatpush2.msra.mxu0 0.0
        %578 = vmatprep.subr.mxu0 0.0
        %579 = vmatpush2.msra.mxu0 0.0
        %580 = vmatprep.subr.mxu0 0.0
        %581 = vmatpush2.msra.mxu0 0.0
        %582 = vmatprep.mubr.f32.mxu0 0.0
        %583 = vmatmul.mubr.f32.gmra.mxu0 %v418
        %v584 = vpop.f32.mrf.mxu0
        %v585 = vadd.f32 %v404, %v584
        %v586 = vpop.f32.mrf.mxu0
        %587 = vmatprep.mubr.f32.mxu0 0.0
        %588 = vmatmul.mubr.f32.gmra.mxu0 %v421
        %v589 = vpop.f32.mrf.mxu0
        %v590 = vadd.f32 %v409, %v589
        %v591 = vpop.f32.mrf.mxu0
        %592 = vmatprep.mubr.f32.mxu0 0.0
        %593 = vmatmul.mubr.f32.gmra.mxu0 %v424
        %v594 = vpop.f32.mrf.mxu0
        %v595 = vadd.f32 %v414, %v594
        %v596 = vpop.f32.mrf.mxu0
        %597 = vdwg.mxu0
        %vm604 = vcmask 1045504
        %v605 = vrot.slane %v508, 2
        %v606 = vrot.slane %v514, 2
        %v607 = vsel %vm604, %v605, %v606
        %v608 = vrot.slane %v510, 2
        %v609 = vrot.slane %v516, 2
        %v610 = vsel %vm604, %v608, %v609
        %v611 = vrot.slane %v590, 2
        %v612 = vrot.slane %v595, 2
        %v613 = vsel %vm604, %v611, %v612
        %614 = vrot.lane.b32.xlu0 %v607, 127
        %v615 = vpop.permute.xlu0 %614
        %616 = vrot.lane.b32.xlu0 %v610, 127
        %v617 = vpop.permute.xlu0 %616
        %618 = vrot.lane.b32.xlu0 %v613, 127
        %v619 = vpop.permute.xlu0 %618
        %620 = vrot.lane.b32.xlu0 %v606, 127
        %v621 = vpop.permute.xlu0 %620
        %622 = vrot.lane.b32.xlu0 %v609, 127
        %v623 = vpop.permute.xlu0 %622
        %624 = vrot.lane.b32.xlu0 %v612, 127
        %v625 = vpop.permute.xlu0 %624
        %vm626 = vcmask 1039360
        %v627 = vsel %vm626, %v615, %v617
        %v628 = vsel %vm626, %v617, %v619
        %v629 = vsel %vm626, %v621, %v623
        %v630 = vsel %vm626, %v623, %v625
        %v637 = vadd.f32 %v502, %v627
        %v638 = vadd.f32 %v504, %v628
        %v639 = vadd.f32 %v585, %v619
        %v640 = vadd.f32 %v508, %v629
        %v641 = vadd.f32 %v510, %v630
        %v642 = vadd.f32 %v590, %v625
        %v644 = vsel %vm244, %v231, 0
        %v647 = vsel %vm244, %v232, 0
        %v650 = vsel %vm244, %v233, 0
        %652 = vmatprep.subr.mxu0 0.0
        %653 = vmatpush1.msra.mxu0 0.0
        %654 = vmatprep.subr.mxu0 0.0
        %655 = vmatpush1.msra.mxu0 0.0
        %656 = vmatprep.subr.mxu0 0.0
        %657 = vmatpush1.msra.mxu0 0.0
        %658 = vmatprep.subr.mxu0 0.0
        %659 = vmatpush1.msra.mxu0 0.0
        %660 = vmatprep.subr.mxu0 0.0
        %661 = vmatpush1.msra.mxu0 0.0
        %662 = vmatprep.subr.mxu0 0.0
        %663 = vmatpush1.msra.mxu0 0.0
        %664 = vmatprep.subr.mxu0 0.0
        %665 = vmatpush1.msra.mxu0 0.0
        %666 = vmatprep.subr.mxu0 0.0
        %667 = vmatpush1.msra.mxu0 0.0
        %668 = vmatprep.subr.mxu0 0.0
        %669 = vmatpush1.msra.mxu0 0.0
        %670 = vmatprep.subr.mxu0 0.0
        %671 = vmatpush1.msra.mxu0 0.0
        %672 = vmatprep.subr.mxu0 0.0
        %673 = vmatpush1.msra.mxu0 0.0
        %674 = vmatprep.subr.mxu0 0.0
        %675 = vmatpush1.msra.mxu0 0.0
        %676 = vmatprep.subr.mxu0 %v647
        %677 = vmatpush1.msra.mxu0 %v644
        %678 = vmatprep.subr.mxu0 %v229
        %679 = vmatpush1.msra.mxu0 %v228
        %680 = vmatprep.subr.mxu0 %v226
        %681 = vmatpush1.msra.mxu0 %v225
        %682 = vmatprep.subr.mxu0 %v223
        %683 = vmatpush1.msra.mxu0 %v222
        %684 = vmatprep.subr.mxu0 0.0
        %685 = vmatpush2.msra.mxu0 0.0
        %686 = vmatprep.subr.mxu0 0.0
        %687 = vmatpush2.msra.mxu0 0.0
        %688 = vmatprep.subr.mxu0 0.0
        %689 = vmatpush2.msra.mxu0 0.0
        %690 = vmatprep.subr.mxu0 0.0
        %691 = vmatpush2.msra.mxu0 0.0
        %692 = vmatprep.subr.mxu0 0.0
        %693 = vmatpush2.msra.mxu0 0.0
        %694 = vmatprep.subr.mxu0 0.0
        %695 = vmatpush2.msra.mxu0 0.0
        %696 = vmatprep.subr.mxu0 0.0
        %697 = vmatpush2.msra.mxu0 0.0
        %698 = vmatprep.subr.mxu0 0.0
        %699 = vmatpush2.msra.mxu0 0.0
        %700 = vmatprep.subr.mxu0 0.0
        %701 = vmatpush2.msra.mxu0 0.0
        %702 = vmatprep.subr.mxu0 0.0
        %703 = vmatpush2.msra.mxu0 0.0
        %704 = vmatprep.subr.mxu0 0.0
        %705 = vmatpush2.msra.mxu0 0.0
        %706 = vmatprep.subr.mxu0 0.0
        %707 = vmatpush2.msra.mxu0 0.0
        %708 = vmatprep.subr.mxu0 0.0
        %709 = vmatpush2.msra.mxu0 0.0
        %710 = vmatprep.subr.mxu0 0.0
        %711 = vmatpush2.msra.mxu0 0.0
        %712 = vmatprep.subr.mxu0 0.0
        %713 = vmatpush2.msra.mxu0 0.0
        %714 = vmatprep.subr.mxu0 0.0
        %715 = vmatpush2.msra.mxu0 0.0
        %716 = vmatprep.mubr.f32.mxu0 0.0
        %717 = vmatmul.mubr.f32.gmra.mxu0 %v236
        %v718 = vpop.f32.mrf.mxu0
        %v719 = vadd.f32 0.0, %v718
        %v720 = vpop.f32.mrf.mxu0
        %v721 = vadd.f32 0.0, %v720
        %722 = vmatprep.mubr.f32.mxu0 0.0
        %723 = vmatmul.mubr.f32.gmra.mxu0 %v239
        %v724 = vpop.f32.mrf.mxu0
        %v725 = vadd.f32 0.0, %v724
        %v726 = vpop.f32.mrf.mxu0
        %v727 = vadd.f32 0.0, %v726
        %728 = vmatprep.mubr.f32.mxu0 0.0
        %729 = vmatmul.mubr.f32.gmra.mxu0 %v242
        %v730 = vpop.f32.mrf.mxu0
        %v731 = vadd.f32 0.0, %v730
        %v732 = vpop.f32.mrf.mxu0
        %v733 = vadd.f32 0.0, %v732
        %734 = vdwg.mxu0
        %735 = vmatprep.subr.mxu0 0.0
        %736 = vmatpush1.msra.mxu0 0.0
        %737 = vmatprep.subr.mxu0 0.0
        %738 = vmatpush1.msra.mxu0 0.0
        %739 = vmatprep.subr.mxu0 0.0
        %740 = vmatpush1.msra.mxu0 0.0
        %741 = vmatprep.subr.mxu0 0.0
        %742 = vmatpush1.msra.mxu0 0.0
        %743 = vmatprep.subr.mxu0 0.0
        %744 = vmatpush1.msra.mxu0 0.0
        %745 = vmatprep.subr.mxu0 0.0
        %746 = vmatpush1.msra.mxu0 0.0
        %747 = vmatprep.subr.mxu0 0.0
        %748 = vmatpush1.msra.mxu0 0.0
        %749 = vmatprep.subr.mxu0 0.0
        %750 = vmatpush1.msra.mxu0 0.0
        %751 = vmatprep.subr.mxu0 0.0
        %752 = vmatpush1.msra.mxu0 0.0
        %753 = vmatprep.subr.mxu0 0.0
        %754 = vmatpush1.msra.mxu0 0.0
        %755 = vmatprep.subr.mxu0 0.0
        %756 = vmatpush1.msra.mxu0 0.0
        %757 = vmatprep.subr.mxu0 0.0
        %758 = vmatpush1.msra.mxu0 0.0
        %759 = vmatprep.subr.mxu0 0.0
        %760 = vmatpush1.msra.mxu0 %v650
        %761 = vmatprep.subr.mxu0 0.0
        %762 = vmatpush1.msra.mxu0 %v230
        %763 = vmatprep.subr.mxu0 0.0
        %764 = vmatpush1.msra.mxu0 %v227
        %765 = vmatprep.subr.mxu0 0.0
        %766 = vmatpush1.msra.mxu0 %v224
        %767 = vmatprep.subr.mxu0 0.0
        %768 = vmatpush2.msra.mxu0 0.0
        %769 = vmatprep.subr.mxu0 0.0
        %770 = vmatpush2.msra.mxu0 0.0
        %771 = vmatprep.subr.mxu0 0.0
        %772 = vmatpush2.msra.mxu0 0.0
        %773 = vmatprep.subr.mxu0 0.0
        %774 = vmatpush2.msra.mxu0 0.0
        %775 = vmatprep.subr.mxu0 0.0
        %776 = vmatpush2.msra.mxu0 0.0
        %777 = vmatprep.subr.mxu0 0.0
        %778 = vmatpush2.msra.mxu0 0.0
        %779 = vmatprep.subr.mxu0 0.0
        %780 = vmatpush2.msra.mxu0 0.0
        %781 = vmatprep.subr.mxu0 0.0
        %782 = vmatpush2.msra.mxu0 0.0
        %783 = vmatprep.subr.mxu0 0.0
        %784 = vmatpush2.msra.mxu0 0.0
        %785 = vmatprep.subr.mxu0 0.0
        %786 = vmatpush2.msra.mxu0 0.0
        %787 = vmatprep.subr.mxu0 0.0
        %788 = vmatpush2.msra.mxu0 0.0
        %789 = vmatprep.subr.mxu0 0.0
        %790 = vmatpush2.msra.mxu0 0.0
        %791 = vmatprep.subr.mxu0 0.0
        %792 = vmatpush2.msra.mxu0 0.0
        %793 = vmatprep.subr.mxu0 0.0
        %794 = vmatpush2.msra.mxu0 0.0
        %795 = vmatprep.subr.mxu0 0.0
        %796 = vmatpush2.msra.mxu0 0.0
        %797 = vmatprep.subr.mxu0 0.0
        %798 = vmatpush2.msra.mxu0 0.0
        %799 = vmatprep.mubr.f32.mxu0 0.0
        %800 = vmatmul.mubr.f32.gmra.mxu0 %v236
        %v801 = vpop.f32.mrf.mxu0
        %v802 = vadd.f32 0.0, %v801
        %v803 = vpop.f32.mrf.mxu0
        %804 = vmatprep.mubr.f32.mxu0 0.0
        %805 = vmatmul.mubr.f32.gmra.mxu0 %v239
        %v806 = vpop.f32.mrf.mxu0
        %v807 = vadd.f32 0.0, %v806
        %v808 = vpop.f32.mrf.mxu0
        %809 = vmatprep.mubr.f32.mxu0 0.0
        %810 = vmatmul.mubr.f32.gmra.mxu0 %v242
        %v811 = vpop.f32.mrf.mxu0
        %v812 = vadd.f32 0.0, %v811
        %v813 = vpop.f32.mrf.mxu0
        %814 = vdwg.mxu0
        %815 = vmatprep.subr.mxu0 0.0
        %816 = vmatpush1.msra.mxu0 0.0
        %817 = vmatprep.subr.mxu0 0.0
        %818 = vmatpush1.msra.mxu0 0.0
        %819 = vmatprep.subr.mxu0 0.0
        %820 = vmatpush1.msra.mxu0 0.0
        %821 = vmatprep.subr.mxu0 0.0
        %822 = vmatpush1.msra.mxu0 0.0
        %823 = vmatprep.subr.mxu0 0.0
        %824 = vmatpush1.msra.mxu0 0.0
        %825 = vmatprep.subr.mxu0 0.0
        %826 = vmatpush1.msra.mxu0 0.0
        %827 = vmatprep.subr.mxu0 0.0
        %828 = vmatpush1.msra.mxu0 0.0
        %829 = vmatprep.subr.mxu0 0.0
        %830 = vmatpush1.msra.mxu0 0.0
        %831 = vmatprep.subr.mxu0 0.0
        %832 = vmatpush1.msra.mxu0 0.0
        %833 = vmatprep.subr.mxu0 0.0
        %834 = vmatpush1.msra.mxu0 0.0
        %835 = vmatprep.subr.mxu0 0.0
        %836 = vmatpush1.msra.mxu0 0.0
        %837 = vmatprep.subr.mxu0 0.0
        %838 = vmatpush1.msra.mxu0 0.0
        %839 = vmatprep.subr.mxu0 %v249
        %840 = vmatpush1.msra.mxu0 %v246
        %841 = vmatprep.subr.mxu0 %v213
        %842 = vmatpush1.msra.mxu0 %v212
        %843 = vmatprep.subr.mxu0 %v210
        %844 = vmatpush1.msra.mxu0 %v209
        %845 = vmatprep.subr.mxu0 %v207
        %846 = vmatpush1.msra.mxu0 %v206
        %847 = vmatprep.subr.mxu0 0.0
        %848 = vmatpush2.msra.mxu0 0.0
        %849 = vmatprep.subr.mxu0 0.0
        %850 = vmatpush2.msra.mxu0 0.0
        %851 = vmatprep.subr.mxu0 0.0
        %852 = vmatpush2.msra.mxu0 0.0
        %853 = vmatprep.subr.mxu0 0.0
        %854 = vmatpush2.msra.mxu0 0.0
        %855 = vmatprep.subr.mxu0 0.0
        %856 = vmatpush2.msra.mxu0 0.0
        %857 = vmatprep.subr.mxu0 0.0
        %858 = vmatpush2.msra.mxu0 0.0
        %859 = vmatprep.subr.mxu0 0.0
        %860 = vmatpush2.msra.mxu0 0.0
        %861 = vmatprep.subr.mxu0 0.0
        %862 = vmatpush2.msra.mxu0 0.0
        %863 = vmatprep.subr.mxu0 0.0
        %864 = vmatpush2.msra.mxu0 0.0
        %865 = vmatprep.subr.mxu0 0.0
        %866 = vmatpush2.msra.mxu0 0.0
        %867 = vmatprep.subr.mxu0 0.0
        %868 = vmatpush2.msra.mxu0 0.0
        %869 = vmatprep.subr.mxu0 0.0
        %870 = vmatpush2.msra.mxu0 0.0
        %871 = vmatprep.subr.mxu0 0.0
        %872 = vmatpush2.msra.mxu0 0.0
        %873 = vmatprep.subr.mxu0 0.0
        %874 = vmatpush2.msra.mxu0 0.0
        %875 = vmatprep.subr.mxu0 0.0
        %876 = vmatpush2.msra.mxu0 0.0
        %877 = vmatprep.subr.mxu0 0.0
        %878 = vmatpush2.msra.mxu0 0.0
        %879 = vmatprep.mubr.f32.mxu0 0.0
        %880 = vmatmul.mubr.f32.gmra.mxu0 %v418
        %v881 = vpop.f32.mrf.mxu0
        %v882 = vadd.f32 %v719, %v881
        %v883 = vpop.f32.mrf.mxu0
        %v884 = vadd.f32 %v721, %v883
        %885 = vmatprep.mubr.f32.mxu0 0.0
        %886 = vmatmul.mubr.f32.gmra.mxu0 %v421
        %v887 = vpop.f32.mrf.mxu0
        %v888 = vadd.f32 %v725, %v887
        %v889 = vpop.f32.mrf.mxu0
        %v890 = vadd.f32 %v727, %v889
        %891 = vmatprep.mubr.f32.mxu0 0.0
        %892 = vmatmul.mubr.f32.gmra.mxu0 %v424
        %v893 = vpop.f32.mrf.mxu0
        %v894 = vadd.f32 %v731, %v893
        %v895 = vpop.f32.mrf.mxu0
        %v896 = vadd.f32 %v733, %v895
        %897 = vdwg.mxu0
        %898 = vmatprep.subr.mxu0 0.0
        %899 = vmatpush1.msra.mxu0 0.0
        %900 = vmatprep.subr.mxu0 0.0
        %901 = vmatpush1.msra.mxu0 0.0
        %902 = vmatprep.subr.mxu0 0.0
        %903 = vmatpush1.msra.mxu0 0.0
        %904 = vmatprep.subr.mxu0 0.0
        %905 = vmatpush1.msra.mxu0 0.0
        %906 = vmatprep.subr.mxu0 0.0
        %907 = vmatpush1.msra.mxu0 0.0
        %908 = vmatprep.subr.mxu0 0.0
        %909 = vmatpush1.msra.mxu0 0.0
        %910 = vmatprep.subr.mxu0 0.0
        %911 = vmatpush1.msra.mxu0 0.0
        %912 = vmatprep.subr.mxu0 0.0
        %913 = vmatpush1.msra.mxu0 0.0
        %914 = vmatprep.subr.mxu0 0.0
        %915 = vmatpush1.msra.mxu0 0.0
        %916 = vmatprep.subr.mxu0 0.0
        %917 = vmatpush1.msra.mxu0 0.0
        %918 = vmatprep.subr.mxu0 0.0
        %919 = vmatpush1.msra.mxu0 0.0
        %920 = vmatprep.subr.mxu0 0.0
        %921 = vmatpush1.msra.mxu0 0.0
        %922 = vmatprep.subr.mxu0 0.0
        %923 = vmatpush1.msra.mxu0 %v252
        %924 = vmatprep.subr.mxu0 0.0
        %925 = vmatpush1.msra.mxu0 %v214
        %926 = vmatprep.subr.mxu0 0.0
        %927 = vmatpush1.msra.mxu0 %v211
        %928 = vmatprep.subr.mxu0 0.0
        %929 = vmatpush1.msra.mxu0 %v208
        %930 = vmatprep.subr.mxu0 0.0
        %931 = vmatpush2.msra.mxu0 0.0
        %932 = vmatprep.subr.mxu0 0.0
        %933 = vmatpush2.msra.mxu0 0.0
        %934 = vmatprep.subr.mxu0 0.0
        %935 = vmatpush2.msra.mxu0 0.0
        %936 = vmatprep.subr.mxu0 0.0
        %937 = vmatpush2.msra.mxu0 0.0
        %938 = vmatprep.subr.mxu0 0.0
        %939 = vmatpush2.msra.mxu0 0.0
        %940 = vmatprep.subr.mxu0 0.0
        %941 = vmatpush2.msra.mxu0 0.0
        %942 = vmatprep.subr.mxu0 0.0
        %943 = vmatpush2.msra.mxu0 0.0
        %944 = vmatprep.subr.mxu0 0.0
        %945 = vmatpush2.msra.mxu0 0.0
        %946 = vmatprep.subr.mxu0 0.0
        %947 = vmatpush2.msra.mxu0 0.0
        %948 = vmatprep.subr.mxu0 0.0
        %949 = vmatpush2.msra.mxu0 0.0
        %950 = vmatprep.subr.mxu0 0.0
        %951 = vmatpush2.msra.mxu0 0.0
        %952 = vmatprep.subr.mxu0 0.0
        %953 = vmatpush2.msra.mxu0 0.0
        %954 = vmatprep.subr.mxu0 0.0
        %955 = vmatpush2.msra.mxu0 0.0
        %956 = vmatprep.subr.mxu0 0.0
        %957 = vmatpush2.msra.mxu0 0.0
        %958 = vmatprep.subr.mxu0 0.0
        %959 = vmatpush2.msra.mxu0 0.0
        %960 = vmatprep.subr.mxu0 0.0
        %961 = vmatpush2.msra.mxu0 0.0
        %962 = vmatprep.mubr.f32.mxu0 0.0
        %963 = vmatmul.mubr.f32.gmra.mxu0 %v418
        %v964 = vpop.f32.mrf.mxu0
        %v965 = vadd.f32 %v802, %v964
        %v966 = vpop.f32.mrf.mxu0
        %967 = vmatprep.mubr.f32.mxu0 0.0
        %968 = vmatmul.mubr.f32.gmra.mxu0 %v421
        %v969 = vpop.f32.mrf.mxu0
        %v970 = vadd.f32 %v807, %v969
        %v971 = vpop.f32.mrf.mxu0
        %972 = vmatprep.mubr.f32.mxu0 0.0
        %973 = vmatmul.mubr.f32.gmra.mxu0 %v424
        %v974 = vpop.f32.mrf.mxu0
        %v975 = vadd.f32 %v812, %v974
        %v976 = vpop.f32.mrf.mxu0
        %977 = vdwg.mxu0
        %v984 = vrot.slane %v888, 2
        %v985 = vrot.slane %v894, 2
        %v986 = vsel %vm604, %v984, %v985
        %v987 = vrot.slane %v890, 2
        %v988 = vrot.slane %v896, 2
        %v989 = vsel %vm604, %v987, %v988
        %v990 = vrot.slane %v970, 2
        %v991 = vrot.slane %v975, 2
        %v992 = vsel %vm604, %v990, %v991
        %993 = vrot.lane.b32.xlu0 %v986, 127
        %v994 = vpop.permute.xlu0 %993
        %995 = vrot.lane.b32.xlu0 %v989, 127
        %v996 = vpop.permute.xlu0 %995
        %997 = vrot.lane.b32.xlu0 %v992, 127
        %v998 = vpop.permute.xlu0 %997
        %999 = vrot.lane.b32.xlu0 %v985, 127
        %v1000 = vpop.permute.xlu0 %999
        %1001 = vrot.lane.b32.xlu0 %v988, 127
        %v1002 = vpop.permute.xlu0 %1001
        %1003 = vrot.lane.b32.xlu0 %v991, 127
        %v1004 = vpop.permute.xlu0 %1003
        %v1005 = vsel %vm626, %v994, %v996
        %v1006 = vsel %vm626, %v996, %v998
        %v1007 = vsel %vm626, %v1000, %v1002
        %v1008 = vsel %vm626, %v1002, %v1004
        %v1015 = vadd.f32 %v882, %v1005
        %v1016 = vadd.f32 %v884, %v1006
        %v1017 = vadd.f32 %v965, %v998
        %v1018 = vadd.f32 %v888, %v1007
        %v1019 = vadd.f32 %v890, %v1008
        %v1020 = vadd.f32 %v970, %v1004
        %v1021 = vmax.f32 %v637, %v1015
        %v1022 = vmax.f32 %v638, %v1016
        %v1023 = vmax.f32 %v639, %v1017
        %v1024 = vmax.f32 %v640, %v1018
        %v1025 = vmax.f32 %v641, %v1019
        %v1026 = vmax.f32 %v642, %v1020
        %1028 = vset.pattern.permute.xlu0 0
        %1029 = vperm.xlu0 %1028, %v171
        %v1030 = vpop.permute.xlu0 %1029
        %1033 = vset.pattern.permute.xlu0 0
        %1034 = vperm.xlu0 %1033, %v172
        %v1035 = vpop.permute.xlu0 %1034
        %v1037 = vadd.f32 %v1021, %v1030
        %v1038 = vadd.f32 %v1022, %v1030
        %v1039 = vadd.f32 %v1023, %v1030
        %v1040 = vadd.f32 %v1024, %v1035
        %v1041 = vadd.f32 %v1025, %v1035
        %v1042 = vadd.f32 %v1026, %v1035
        %v1043 = vmax.f32 %v1037, 0.0
        %v1044 = vmax.f32 %v1038, 0.0
        %v1045 = vmax.f32 %v1039, 0.0
        %v1046 = vmax.f32 %v1040, 0.0
        %v1047 = vmax.f32 %v1041, 0.0
        %v1048 = vmax.f32 %v1042, 0.0
        %s1049 = smul.u32 %s181, 6
        %s1050 = smul.addr %s1049, 8
        %s1051 = scalar_lea.vmem %s170, %s1050
        %1052 = vst [vmem:[%s1051] sm:$0xff] %v1043
        %1053 = vst [vmem:[%s1051 + $0x8] sm:$0xff] %v1044
        %vm1054 = vcmask 277504
        %1055 = vst.msk [vmem:[%s1051 + $0x10] sm:$0xff] %vm1054, %v1045
        %1056 = vst [vmem:[%s1051 + $0x18] sm:$0x3] %v1046
        %1057 = vst [vmem:[%s1051 + $0x20] sm:$0x3] %v1047
        %vm1058 = vcmask 271360
        %1059 = vst.msk [vmem:[%s1051 + $0x28] sm:$0x3] %vm1058, %v1048
      $region37: #{net_forward.3} parent=31 // loop_footer
        %s185 = sadd.s32 1, %s181
      $region38: #{net_forward.3} parent=31 // loop_footer_branch
        %180 = sbr.rel target = $region34
      $region39: #{net_forward.3} parent=31 // loop_exit
        _
      %p1060 = scmp.lt.s32.totalorder %s14, 1
      %s1061 = scalar_select %p1060, %s14, 1
      %s1062 = smul.addr %s1061, 870
      %s1063 = smul.addr %s1062, 8
      %s1064 = scalar_lea.vmem %s3, %s1063
      // Predicated region
      $region40: #{net_forward.3} parent=31 // pred_check
        %p1065 = pneg %p100
      $region41: #{net_forward.3} parent=31 // pred_check_branch
        %1067 = sbr.rel (%p1065) target = $region43
      $region42: #{net_forward.3} parent=31 // pred_region
        _
      $region43: #{net_forward.3} parent=31 // pred_fallthru
        _
    $region32: #{net_forward.3} parent=5 // pred_fallthru
      _
    %p1068 = scmp.le.s32.totalorder 2, %s9
    // Predicated region
    $region44: #{net_forward.3} parent=5 // pred_check
      %p1069 = pneg %p1068
    $region45: #{net_forward.3} parent=5 // pred_check_branch
      %1071 = sbr.rel (%p1069) target = $region47
    $region46: #{net_forward.3} parent=5 // pred_region
      %s1072 = ssub.s32 %s9, 2
      // Predicated region
      $region48: #{net_forward.3} parent=46 // pred_check
        %p1073 = pneg %p106
      $region49: #{net_forward.3} parent=46 // pred_check_branch
        %1075 = sbr.rel (%p1073) target = $region51
      $region50: #{net_forward.3} parent=46 // pred_region
        %p1076 = scmp.lt.s32.totalorder %s15, 1
        %s1077 = scalar_select %p1076, %s15, 1
        %s1078 = smul.addr %s1077, 870
        %s1079 = smul.addr %s1078, 8
        %s1080 = scalar_lea.vmem %s3, %s1079
      $region51: #{net_forward.3} parent=46 // pred_fallthru
        _
    $region47: #{net_forward.3} parent=5 // pred_fallthru
      _
  $region6: #{net_forward.3} parent=0 // loop_footer
    %s13 = sadd.s32 1, %s9
  $region7: #{net_forward.3} parent=0 // loop_footer_branch
    %8 = sbr.rel target = $region3
  $region8: #{net_forward.3} parent=0 // loop_exit
    _

// kernel: net_forward.4
$region0: #{net_forward.4}
  #allocation0 [shape = 'u32[]', space=smem, size = 0x4, offset = 0x4, fixed_abs, tag = 'smem constant byte address 0x4 - core index']
  #allocation1 [shape = 'u32[144,128]{1,0:T(1,128)}', space=vmem, size = 0x12000, scoped, tag = 'internal scratch']
  %s0 = inlined_call_operand.vmem [shape: f32[2,29,250,29], index: 0, kind: input, shape index: {}]
  %s1 = inlined_call_operand.vmem [shape: f32[2,40,250], index: 1, kind: input, shape index: {}]
  %s2 = inlined_call_operand.vmem [shape: f32[20,1], index: 2, kind: input, shape index: {}]
  %s3 = inlined_call_operand.vmem [shape: f32[2,14,20,28], index: 3, kind: output, shape index: {}]
  %s4 = sld [smem:[#allocation0]]
  $region52: #{net_forward.4} parent=0
    _
  %s6 = ssub.s32 1, %s4
  %s7 = scalar_select 0, %s6, %s4
  loop: start=0, step=1, limit=4
  $region2: #{net_forward.4} parent=0 // loop_pre_header
    _
  $region3: #{net_forward.4} parent=0 // loop_header
    %s9 = sphi 0, %s13
    %p10 = scmp.ge.s32.totalorder %s9, 4
    %s19 = sphi 0, %s21
    %s22 = sphi 0, %s19
    %s23 = sphi 0, %s22
    %s39 = sphi 0, %s23
    %s43 = sphi 0, %s43
    %s45 = sphi 0, %s43
    %s46 = sphi 0, %s45
    %s60 = sphi 0, %s46
    %s64 = sphi 0, %s64
    %s66 = sphi 0, %s64
    %s67 = sphi 0, %s66
    %s81 = sphi 0, %s67
    %s87 = sphi 0, %s89
    %s90 = sphi 0, %s87
    %s91 = sphi 0, %s90
    %s107 = sphi 0, %s91
  $region4: #{net_forward.4} parent=0 // loop_header_branch
    %12 = sbr.rel (%p10) target = $region8
  $region5: #{net_forward.4} parent=0 // loop_body
    %s14 = ssub.s32 %s9, 1
    %s15 = ssub.s32 %s9, 2
    %s16 = sadd.s32 %s9, 1
    %s17 = ssub.s32 %s9, %s16
    %p18 = scmp.eq.s32.totalorder %s17, 0
    %s20 = sadd.s32 %s19, 1
    %s21 = scalar_select %p18, %s19, %s20
    %p24 = pneg %p18
    %p25 = scmp.eq.s32.totalorder %s9, 1
    %p26 = por %p24, %p25
    %p27 = scmp.ne.s32.totalorder %s19, %s22
    %p28 = scmp.eq.s32.totalorder %s9, 0
    %p29 = por %p27, %p28
    %p30 = scmp.ne.s32.totalorder %s19, %s22
    %p31 = scmp.eq.s32.totalorder %s14, 1
    %p32 = por %p30, %p31
    %p33 = scmp.ne.s32.totalorder %s22, %s23
    %p34 = scmp.eq.s32.totalorder %s14, 0
    %p35 = por %p33, %p34
    %p36 = scmp.ne.s32.totalorder %s22, %s23
    %p37 = scmp.eq.s32.totalorder %s15, 1
    %p38 = por %p36, %p37
    %p40 = scmp.ne.s32.totalorder %s23, %s39
    %p41 = scmp.eq.s32.totalorder %s15, 0
    %p42 = por %p40, %p41
    %s44 = sadd.s32 %s43, 1
    %p47 = scmp.eq.s32.totalorder %s9, 1
    %p48 = scmp.ne.s32.totalorder %s43, %s45
    %p49 = scmp.eq.s32.totalorder %s9, 0
    %p50 = por %p48, %p49
    %p51 = scmp.ne.s32.totalorder %s43, %s45
    %p52 = scmp.eq.s32.totalorder %s14, 1
    %p53 = por %p51, %p52
    %p54 = scmp.ne.s32.totalorder %s45, %s46
    %p55 = scmp.eq.s32.totalorder %s14, 0
    %p56 = por %p54, %p55
    %p57 = scmp.ne.s32.totalorder %s45, %s46
    %p58 = scmp.eq.s32.totalorder %s15, 1
    %p59 = por %p57, %p58
    %p61 = scmp.ne.s32.totalorder %s46, %s60
    %p62 = scmp.eq.s32.totalorder %s15, 0
    %p63 = por %p61, %p62
    %s65 = sadd.s32 %s64, 1
    %p68 = scmp.eq.s32.totalorder %s9, 1
    %p69 = scmp.ne.s32.totalorder %s64, %s66
    %p70 = scmp.eq.s32.totalorder %s9, 0
    %p71 = por %p69, %p70
    %p72 = scmp.ne.s32.totalorder %s64, %s66
    %p73 = scmp.eq.s32.totalorder %s14, 1
    %p74 = por %p72, %p73
    %p75 = scmp.ne.s32.totalorder %s66, %s67
    %p76 = scmp.eq.s32.totalorder %s14, 0
    %p77 = por %p75, %p76
    %p78 = scmp.ne.s32.totalorder %s66, %s67
    %p79 = scmp.eq.s32.totalorder %s15, 1
    %p80 = por %p78, %p79
    %p82 = scmp.ne.s32.totalorder %s67, %s81
    %p83 = scmp.eq.s32.totalorder %s15, 0
    %p84 = por %p82, %p83
    %s85 = ssub.s32 %s9, %s16
    %p86 = scmp.eq.s32.totalorder %s85, 0
    %s88 = sadd.s32 %s87, 1
    %s89 = scalar_select %p86, %s87, %s88
    %p92 = pneg %p86
    %p93 = scmp.eq.s32.totalorder %s9, 1
    %p94 = por %p92, %p93
    %p95 = scmp.ne.s32.totalorder %s87, %s90
    %p96 = scmp.eq.s32.totalorder %s9, 0
    %p97 = por %p95, %p96
    %p98 = scmp.ne.s32.totalorder %s87, %s90
    %p99 = scmp.eq.s32.totalorder %s14, 1
    %p100 = por %p98, %p99
    %p101 = scmp.ne.s32.totalorder %s90, %s91
    %p102 = scmp.eq.s32.totalorder %s14, 0
    %p103 = por %p101, %p102
    %p104 = scmp.ne.s32.totalorder %s90, %s91
    %p105 = scmp.eq.s32.totalorder %s15, 1
    %p106 = por %p104, %p105
    %p108 = scmp.ne.s32.totalorder %s91, %s107
    %p109 = scmp.eq.s32.totalorder %s15, 0
    %p110 = por %p108, %p109
    %p111 = scmp.le.s32.totalorder 1, %s9
    %p112 = scmp.lt.s32.totalorder %s9, 3
    %p113 = pnand %p111, %p112
    %p114 = pneg %p113
    // Predicated region
    $region9: #{net_forward.4} parent=5 // pred_check
      _
    $region10: #{net_forward.4} parent=5 // pred_check_branch
      %116 = sbr.rel (%p113) target = $region12
    $region11: #{net_forward.4} parent=5 // pred_region
      %s117 = ssub.s32 %s9, 1
      // Predicated region
      $region13: #{net_forward.4} parent=11 // pred_check
        %p118 = pneg %p56
      $region14: #{net_forward.4} parent=11 // pred_check_branch
        %120 = sbr.rel (%p118) target = $region16
      $region15: #{net_forward.4} parent=11 // pred_region
        _
      $region16: #{net_forward.4} parent=11 // pred_fallthru
        _
      // Predicated region
      $region17: #{net_forward.4} parent=11 // pred_check
        %p121 = pneg %p77
      $region18: #{net_forward.4} parent=11 // pred_check_branch
        %123 = sbr.rel (%p121) target = $region20
      $region19: #{net_forward.4} parent=11 // pred_region
        _
      $region20: #{net_forward.4} parent=11 // pred_fallthru
        _
    $region12: #{net_forward.4} parent=5 // pred_fallthru
      _
    %p124 = scmp.lt.s32.totalorder %s9, 2
    // Predicated region
    $region21: #{net_forward.4} parent=5 // pred_check
      %p125 = pneg %p124
    $region22: #{net_forward.4} parent=5 // pred_check_branch
      %127 = sbr.rel (%p125) target = $region24
    $region23: #{net_forward.4} parent=5 // pred_region
      // Predicated region
      $region25: #{net_forward.4} parent=23 // pred_check
        %p128 = pneg %p29
      $region26: #{net_forward.4} parent=23 // pred_check_branch
        %130 = sbr.rel (%p128) target = $region28
      $region27: #{net_forward.4} parent=23 // pred_region
        %p131 = scmp.lt.s32.totalorder %s9, 1
        %s132 = scalar_select %p131, %s9, 1
        %s133 = smul.addr %s132, 928
        %s134 = smul.addr %s133, 8
        %s135 = scalar_lea.vmem %s0, %s134
      $region28: #{net_forward.4} parent=23 // pred_fallthru
        _
    $region24: #{net_forward.4} parent=5 // pred_fallthru
      _
    %p136 = scmp.le.s32.totalorder 1, %s9
    %p137 = scmp.lt.s32.totalorder %s9, 3
    %p138 = pnand %p136, %p137
    %p139 = pneg %p138
    // Predicated region
    $region29: #{net_forward.4} parent=5 // pred_check
      _
    $region30: #{net_forward.4} parent=5 // pred_check_branch
      %141 = sbr.rel (%p138) target = $region32
    $region31: #{net_forward.4} parent=5 // pred_region
      %s142 = ssub.s32 %s9, 1
      %p143 = scmp.lt.s32.totalorder %s14, 1
      %s144 = scalar_select %p143, %s14, 1
      %s145 = smul.addr %s144, 928
      %s146 = smul.addr %s145, 8
      %s147 = scalar_lea.vmem %s0, %s146
      %p148 = pneg %p35
      %p149 = pneg %p32
      %p150 = pneg %p56
      %p151 = pneg %p53
      %p152 = pneg %p77
      %p153 = pneg %p74
      %p154 = pneg %p103
      %p155 = pneg %p100
      %p156 = scmp.lt.s32.totalorder %s14, 1
      %s157 = scalar_select %p156, %s14, 1
      %s158 = smul.addr %s157, 42
      %s159 = smul.addr %s158, 8
      %s160 = scalar_lea.vmem %s3, %s159
      %p161 = scmp.lt.s32.totalorder %s14, 1
      %s162 = scalar_select %p161, %s14, 1
      %s163 = smul.addr %s162, 928
      %s164 = smul.addr %s163, 8
      %s165 = scalar_lea.vmem %s0, %s164
      %p166 = scmp.lt.s32.totalorder %s14, 1
      %s167 = scalar_select %p166, %s14, 1
      %s168 = smul.addr %s167, 42
      %s169 = smul.addr %s168, 8
      %s170 = scalar_lea.vmem %s3, %s169
      %v171 = vld [vmem:[%s2] sm:$0xff]
      %v172 = vld [vmem:[%s2 + $0x8] sm:$0xff]
      %v173 = vld [vmem:[%s2 + $0x10] sm:$0xf]
      %v174 = vld [vmem:[%s1] sm:$0xff]
      %v175 = vld [vmem:[%s1 + $0x8] sm:$0xff]
      %v176 = vld [vmem:[%s1 + $0x10] sm:$0xff]
      %v177 = vld [vmem:[%s1 + $0x18] sm:$0xff]
      %v178 = vld [vmem:[%s1 + $0x20] sm:$0xff]
      %v179 = vld [vmem:[%s1 + $0x28] sm:$0xff]
      %v180 = vld [vmem:[%s1 + $0x30] sm:$0xff]
      %v181 = vld [vmem:[%s1 + $0x38] sm:$0xff]
      %v182 = vld [vmem:[%s1 + $0x40] sm:$0xff]
      %v183 = vld [vmem:[%s1 + $0x48] sm:$0xff]
      %s184 = scalar_lea.vmem %s1, 80
      %v185 = vld [vmem:[%s184] sm:$0xff]
      %v186 = vld [vmem:[%s184 + $0x8] sm:$0xff]
      %v187 = vld [vmem:[%s184 + $0x10] sm:$0xff]
      %v188 = vld [vmem:[%s184 + $0x18] sm:$0xff]
      %v189 = vld [vmem:[%s184 + $0x20] sm:$0xff]
      %v190 = vld [vmem:[%s184 + $0x28] sm:$0xff]
      %v191 = vld [vmem:[%s184 + $0x30] sm:$0xff]
      %v192 = vld [vmem:[%s184 + $0x38] sm:$0xff]
      %v193 = vld [vmem:[%s184 + $0x40] sm:$0xff]
      %v194 = vld [vmem:[%s184 + $0x48] sm:$0xff]
      loop: start=0, step=1, limit=14
      $region33: #{net_forward.4} parent=31 // loop_pre_header
        _
      $region34: #{net_forward.4} parent=31 // loop_header
        %s196 = sphi 0, %s200
        %p197 = scmp.ge.s32.totalorder %s196, 14
      $region35: #{net_forward.4} parent=31 // loop_header_branch
        %199 = sbr.rel (%p197) target = $region39
      $region36: #{net_forward.4} parent=31 // loop_body
        %s201 = smul.u32 %s196, 2
        %s202 = smul.u32 %s201, 256
        %s203 = scalar_lea.vmem %s165, %s202
        %v204 = vld [vmem:[%s203] sm:$0xff]
        %v205 = vld [vmem:[%s203 + $0x8] sm:$0xff]
        %v206 = vld [vmem:[%s203 + $0x10] sm:$0xff]
        %v207 = vld [vmem:[%s203 + $0x18] sm:$0xff]
        %v208 = vld [vmem:[%s203 + $0x20] sm:$0xff]
        %v209 = vld [vmem:[%s203 + $0x28] sm:$0xff]
        %v210 = vld [vmem:[%s203 + $0x30] sm:$0xff]
        %v211 = vld [vmem:[%s203 + $0x38] sm:$0xff]
        %v212 = vld [vmem:[%s203 + $0x40] sm:$0xff]
        %v213 = vld [vmem:[%s203 + $0x48] sm:$0xff]
        %v214 = vld [vmem:[%s203 + $0x50] sm:$0xff]
        %v215 = vld [vmem:[%s203 + $0x58] sm:$0xff]
        %v216 = vld [vmem:[%s203 + $0x60] sm:$0xff]
        %v217 = vld [vmem:[%s203 + $0x68] sm:$0xff]
        %v218 = vld [vmem:[%s203 + $0x70] sm:$0xff]
        %v219 = vld [vmem:[%s203 + $0x78] sm:$0xff]
        %v220 = vld [vmem:[%s203 + $0x80] sm:$0xff]
        %v221 = vld [vmem:[%s203 + $0x88] sm:$0xff]
        %v222 = vld [vmem:[%s203 + $0x90] sm:$0xff]
        %v223 = vld [vmem:[%s203 + $0x98] sm:$0xff]
        %v224 = vld [vmem:[%s203 + $0xa0] sm:$0xff]
        %v225 = vld [vmem:[%s203 + $0xa8] sm:$0xff]
        %v226 = vld [vmem:[%s203 + $0xb0] sm:$0xff]
        %v227 = vld [vmem:[%s203 + $0xb8] sm:$0xff]
        %v228 = vld [vmem:[%s203 + $0xc0] sm:$0xff]
        %v229 = vld [vmem:[%s203 + $0xc8] sm:$0xff]
        %v230 = vld [vmem:[%s203 + $0xd0] sm:$0xff]
        %v231 = vld [vmem:[%s203 + $0xd8] sm:$0xff]
        %v232 = vld [vmem:[%s203 + $0xe0] sm:$0xff]
        %v233 = vld [vmem:[%s203 + $0xe8] sm:$0xff]
        %v234 = vld [vmem:[%s203 + $0xf0] sm:$0xff]
        %v235 = vld [vmem:[%s203 + $0xf8] sm:$0x3]
        %s236 = sadd.s32 %s201, 1
        %s237 = smul.u32 %s236, 256
        %s238 = scalar_lea.vmem %s165, %s237
        %v239 = vld [vmem:[%s238] sm:$0xff]
        %v240 = vld [vmem:[%s238 + $0x8] sm:$0xff]
        %v241 = vld [vmem:[%s238 + $0x10] sm:$0xff]
        %v242 = vld [vmem:[%s238 + $0x18] sm:$0xff]
        %v243 = vld [vmem:[%s238 + $0x20] sm:$0xff]
        %v244 = vld [vmem:[%s238 + $0x28] sm:$0xff]
        %v245 = vld [vmem:[%s238 + $0x30] sm:$0xff]
        %v246 = vld [vmem:[%s238 + $0x38] sm:$0xff]
        %v247 = vld [vmem:[%s238 + $0x40] sm:$0xff]
        %v248 = vld [vmem:[%s238 + $0x48] sm:$0xff]
        %v249 = vld [vmem:[%s238 + $0x50] sm:$0xff]
        %v250 = vld [vmem:[%s238 + $0x58] sm:$0xff]
        %v251 = vld [vmem:[%s238 + $0x60] sm:$0xff]
        %v252 = vld [vmem:[%s238 + $0x68] sm:$0xff]
        %v253 = vld [vmem:[%s238 + $0x70] sm:$0xff]
        %v254 = vld [vmem:[%s238 + $0x78] sm:$0xff]
        %v255 = vld [vmem:[%s238 + $0x80] sm:$0xff]
        %v256 = vld [vmem:[%s238 + $0x88] sm:$0xff]
        %v257 = vld [vmem:[%s238 + $0x90] sm:$0xff]
        %v258 = vld [vmem:[%s238 + $0x98] sm:$0xff]
        %v259 = vld [vmem:[%s238 + $0xa0] sm:$0xff]
        %v260 = vld [vmem:[%s238 + $0xa8] sm:$0xff]
        %v261 = vld [vmem:[%s238 + $0xb0] sm:$0xff]
        %v262 = vld [vmem:[%s238 + $0xb8] sm:$0xff]
        %v263 = vld [vmem:[%s238 + $0xc0] sm:$0xff]
        %v264 = vld [vmem:[%s238 + $0xc8] sm:$0xff]
        %v265 = vld [vmem:[%s238 + $0xd0] sm:$0xff]
        %v266 = vld [vmem:[%s238 + $0xd8] sm:$0xff]
        %v267 = vld [vmem:[%s238 + $0xe0] sm:$0xff]
        %v268 = vld [vmem:[%s238 + $0xe8] sm:$0xff]
        %v269 = vld [vmem:[%s238 + $0xf0] sm:$0xff]
        %v270 = vld [vmem:[%s238 + $0xf8] sm:$0x3]
        %s271 = sadd.s32 %s201, 2
        %s272 = smul.u32 %s271, 256
        %s273 = scalar_lea.vmem %s165, %s272
        %v274 = vld [vmem:[%s273] sm:$0xff]
        %v275 = vld [vmem:[%s273 + $0x8] sm:$0xff]
        %v276 = vld [vmem:[%s273 + $0x10] sm:$0xff]
        %v277 = vld [vmem:[%s273 + $0x18] sm:$0xff]
        %v278 = vld [vmem:[%s273 + $0x20] sm:$0xff]
        %v279 = vld [vmem:[%s273 + $0x28] sm:$0xff]
        %v280 = vld [vmem:[%s273 + $0x30] sm:$0xff]
        %v281 = vld [vmem:[%s273 + $0x38] sm:$0xff]
        %v282 = vld [vmem:[%s273 + $0x40] sm:$0xff]
        %v283 = vld [vmem:[%s273 + $0x48] sm:$0xff]
        %v284 = vld [vmem:[%s273 + $0x50] sm:$0xff]
        %v285 = vld [vmem:[%s273 + $0x58] sm:$0xff]
        %v286 = vld [vmem:[%s273 + $0x60] sm:$0xff]
        %v287 = vld [vmem:[%s273 + $0x68] sm:$0xff]
        %v288 = vld [vmem:[%s273 + $0x70] sm:$0xff]
        %v289 = vld [vmem:[%s273 + $0x78] sm:$0xff]
        %v290 = vld [vmem:[%s273 + $0x80] sm:$0xff]
        %v291 = vld [vmem:[%s273 + $0x88] sm:$0xff]
        %v292 = vld [vmem:[%s273 + $0x90] sm:$0xff]
        %v293 = vld [vmem:[%s273 + $0x98] sm:$0xff]
        %v294 = vld [vmem:[%s273 + $0xa0] sm:$0xff]
        %v295 = vld [vmem:[%s273 + $0xa8] sm:$0xff]
        %v296 = vld [vmem:[%s273 + $0xb0] sm:$0xff]
        %v297 = vld [vmem:[%s273 + $0xb8] sm:$0xff]
        %v298 = vld [vmem:[%s273 + $0xc0] sm:$0xff]
        %v299 = vld [vmem:[%s273 + $0xc8] sm:$0xff]
        %v300 = vld [vmem:[%s273 + $0xd0] sm:$0xff]
        %v301 = vld [vmem:[%s273 + $0xd8] sm:$0xff]
        %v302 = vld [vmem:[%s273 + $0xe0] sm:$0xff]
        %v303 = vld [vmem:[%s273 + $0xe8] sm:$0xff]
        %v304 = vld [vmem:[%s273 + $0xf0] sm:$0xff]
        %v305 = vld [vmem:[%s273 + $0xf8] sm:$0x3]
        %vm306 = vcmask 998400
        %v308 = vsel %vm306, %v186, 0
        %v311 = vsel %vm306, %v188, 0
        %v314 = vsel %vm306, %v190, 0
        %v317 = vsel %vm306, %v192, 0
        %v320 = vsel %vm306, %v194, 0
        %vm322 = vcmask 1041408
        %v324 = vsel %vm322, %v270, 0
        %326 = vmatprep.subr.mxu0 0.0
        %327 = vmatpush1.msra.mxu0 %v254
        %328 = vmatprep.subr.mxu0 0.0
        %329 = vmatpush1.msra.mxu0 %v253
        %330 = vmatprep.subr.mxu0 0.0
        %331 = vmatpush1.msra.mxu0 %v252
        %332 = vmatprep.subr.mxu0 0.0
        %333 = vmatpush1.msra.mxu0 %v251
        %334 = vmatprep.subr.mxu0 0.0
        %335 = vmatpush1.msra.mxu0 %v250
        %336 = vmatprep.subr.mxu0 0.0
        %337 = vmatpush1.msra.mxu0 %v249
        %338 = vmatprep.subr.mxu0 0.0
        %339 = vmatpush1.msra.mxu0 %v248
        %340 = vmatprep.subr.mxu0 0.0
        %341 = vmatpush1.msra.mxu0 %v247
        %342 = vmatprep.subr.mxu0 0.0
        %343 = vmatpush1.msra.mxu0 %v246
        %344 = vmatprep.subr.mxu0 0.0
        %345 = vmatpush1.msra.mxu0 %v245
        %346 = vmatprep.subr.mxu0 0.0
        %347 = vmatpush1.msra.mxu0 %v244
        %348 = vmatprep.subr.mxu0 0.0
        %349 = vmatpush1.msra.mxu0 %v243
        %350 = vmatprep.subr.mxu0 0.0
        %351 = vmatpush1.msra.mxu0 %v242
        %352 = vmatprep.subr.mxu0 0.0
        %353 = vmatpush1.msra.mxu0 %v241
        %354 = vmatprep.subr.mxu0 0.0
        %355 = vmatpush1.msra.mxu0 %v240
        %356 = vmatprep.subr.mxu0 0.0
        %357 = vmatpush1.msra.mxu0 %v239
        %358 = vmatprep.subr.mxu0 0.0
        %359 = vmatpush2.msra.mxu0 %v324
        %360 = vmatprep.subr.mxu0 0.0
        %361 = vmatpush2.msra.mxu0 %v269
        %362 = vmatprep.subr.mxu0 0.0
        %363 = vmatpush2.msra.mxu0 %v268
        %364 = vmatprep.subr.mxu0 0.0
        %365 = vmatpush2.msra.mxu0 %v267
        %366 = vmatprep.subr.mxu0 0.0
        %367 = vmatpush2.msra.mxu0 %v266
        %368 = vmatprep.subr.mxu0 0.0
        %369 = vmatpush2.msra.mxu0 %v265
        %370 = vmatprep.subr.mxu0 0.0
        %371 = vmatpush2.msra.mxu0 %v264
        %372 = vmatprep.subr.mxu0 0.0
        %373 = vmatpush2.msra.mxu0 %v263
        %374 = vmatprep.subr.mxu0 0.0
        %375 = vmatpush2.msra.mxu0 %v262
        %376 = vmatprep.subr.mxu0 0.0
        %377 = vmatpush2.msra.mxu0 %v261
        %378 = vmatprep.subr.mxu0 0.0
        %379 = vmatpush2.msra.mxu0 %v260
        %380 = vmatprep.subr.mxu0 0.0
        %381 = vmatpush2.msra.mxu0 %v259
        %382 = vmatprep.subr.mxu0 0.0
        %383 = vmatpush2.msra.mxu0 %v258
        %384 = vmatprep.subr.mxu0 0.0
        %385 = vmatpush2.msra.mxu0 %v257
        %386 = vmatprep.subr.mxu0 0.0
        %387 = vmatpush2.msra.mxu0 %v256
        %388 = vmatprep.subr.mxu0 0.0
        %389 = vmatpush2.msra.mxu0 %v255
        %390 = vmatprep.mubr.f32.mxu0 %v308
        %391 = vmatmul.mubr.f32.gmra.mxu0 %v185
        %v392 = vpop.f32.mrf.mxu0
        %v393 = vadd.f32 0.0, %v392
        %v394 = vpop.f32.mrf.mxu0
        %395 = vmatprep.mubr.f32.mxu0 %v311
        %396 = vmatmul.mubr.f32.gmra.mxu0 %v187
        %v397 = vpop.f32.mrf.mxu0
        %v398 = vadd.f32 0.0, %v397
        %v399 = vpop.f32.mrf.mxu0
        %400 = vmatprep.mubr.f32.mxu0 %v314
        %401 = vmatmul.mubr.f32.gmra.mxu0 %v189
        %v402 = vpop.f32.mrf.mxu0
        %v403 = vadd.f32 0.0, %v402
        %v404 = vpop.f32.mrf.mxu0
        %405 = vmatprep.mubr.f32.mxu0 %v317
        %406 = vmatmul.mubr.f32.gmra.mxu0 %v191
        %v407 = vpop.f32.mrf.mxu0
        %v408 = vadd.f32 0.0, %v407
        %v409 = vpop.f32.mrf.mxu0
        %410 = vmatprep.mubr.f32.mxu0 %v320
        %411 = vmatmul.mubr.f32.gmra.mxu0 %v193
        %v412 = vpop.f32.mrf.mxu0
        %v413 = vadd.f32 0.0, %v412
        %v414 = vpop.f32.mrf.mxu0
        %415 = vdwg.mxu0
        %v417 = vsel %vm306, %v175, 0
        %v420 = vsel %vm306, %v177, 0
        %v423 = vsel %vm306, %v179, 0
        %v426 = vsel %vm306, %v181, 0
        %v429 = vsel %vm306, %v183, 0
        %v432 = vsel %vm322, %v235, 0
        %434 = vmatprep.subr.mxu0 0.0
        %435 = vmatpush1.msra.mxu0 %v219
        %436 = vmatprep.subr.mxu0 0.0
        %437 = vmatpush1.msra.mxu0 %v218
        %438 = vmatprep.subr.mxu0 0.0
        %439 = vmatpush1.msra.mxu0 %v217
        %440 = vmatprep.subr.mxu0 0.0
        %441 = vmatpush1.msra.mxu0 %v216
        %442 = vmatprep.subr.mxu0 0.0
        %443 = vmatpush1.msra.mxu0 %v215
        %444 = vmatprep.subr.mxu0 0.0
        %445 = vmatpush1.msra.mxu0 %v214
        %446 = vmatprep.subr.mxu0 0.0
        %447 = vmatpush1.msra.mxu0 %v213
        %448 = vmatprep.subr.mxu0 0.0
        %449 = vmatpush1.msra.mxu0 %v212
        %450 = vmatprep.subr.mxu0 0.0
        %451 = vmatpush1.msra.mxu0 %v211
        %452 = vmatprep.subr.mxu0 0.0
        %453 = vmatpush1.msra.mxu0 %v210
        %454 = vmatprep.subr.mxu0 0.0
        %455 = vmatpush1.msra.mxu0 %v209
        %456 = vmatprep.subr.mxu0 0.0
        %457 = vmatpush1.msra.mxu0 %v208
        %458 = vmatprep.subr.mxu0 0.0
        %459 = vmatpush1.msra.mxu0 %v207
        %460 = vmatprep.subr.mxu0 0.0
        %461 = vmatpush1.msra.mxu0 %v206
        %462 = vmatprep.subr.mxu0 0.0
        %463 = vmatpush1.msra.mxu0 %v205
        %464 = vmatprep.subr.mxu0 0.0
        %465 = vmatpush1.msra.mxu0 %v204
        %466 = vmatprep.subr.mxu0 0.0
        %467 = vmatpush2.msra.mxu0 %v432
        %468 = vmatprep.subr.mxu0 0.0
        %469 = vmatpush2.msra.mxu0 %v234
        %470 = vmatprep.subr.mxu0 0.0
        %471 = vmatpush2.msra.mxu0 %v233
        %472 = vmatprep.subr.mxu0 0.0
        %473 = vmatpush2.msra.mxu0 %v232
        %474 = vmatprep.subr.mxu0 0.0
        %475 = vmatpush2.msra.mxu0 %v231
        %476 = vmatprep.subr.mxu0 0.0
        %477 = vmatpush2.msra.mxu0 %v230
        %478 = vmatprep.subr.mxu0 0.0
        %479 = vmatpush2.msra.mxu0 %v229
        %480 = vmatprep.subr.mxu0 0.0
        %481 = vmatpush2.msra.mxu0 %v228
        %482 = vmatprep.subr.mxu0 0.0
        %483 = vmatpush2.msra.mxu0 %v227
        %484 = vmatprep.subr.mxu0 0.0
        %485 = vmatpush2.msra.mxu0 %v226
        %486 = vmatprep.subr.mxu0 0.0
        %487 = vmatpush2.msra.mxu0 %v225
        %488 = vmatprep.subr.mxu0 0.0
        %489 = vmatpush2.msra.mxu0 %v224
        %490 = vmatprep.subr.mxu0 0.0
        %491 = vmatpush2.msra.mxu0 %v223
        %492 = vmatprep.subr.mxu0 0.0
        %493 = vmatpush2.msra.mxu0 %v222
        %494 = vmatprep.subr.mxu0 0.0
        %495 = vmatpush2.msra.mxu0 %v221
        %496 = vmatprep.subr.mxu0 0.0
        %497 = vmatpush2.msra.mxu0 %v220
        %498 = vmatprep.mubr.f32.mxu0 %v417
        %499 = vmatmul.mubr.f32.gmra.mxu0 %v174
        %v500 = vpop.f32.mrf.mxu0
        %v501 = vadd.f32 %v393, %v500
        %v502 = vpop.f32.mrf.mxu0
        %503 = vmatprep.mubr.f32.mxu0 %v420
        %504 = vmatmul.mubr.f32.gmra.mxu0 %v176
        %v505 = vpop.f32.mrf.mxu0
        %v506 = vadd.f32 %v398, %v505
        %v507 = vpop.f32.mrf.mxu0
        %508 = vmatprep.mubr.f32.mxu0 %v423
        %509 = vmatmul.mubr.f32.gmra.mxu0 %v178
        %v510 = vpop.f32.mrf.mxu0
        %v511 = vadd.f32 %v403, %v510
        %v512 = vpop.f32.mrf.mxu0
        %513 = vmatprep.mubr.f32.mxu0 %v426
        %514 = vmatmul.mubr.f32.gmra.mxu0 %v180
        %v515 = vpop.f32.mrf.mxu0
        %v516 = vadd.f32 %v408, %v515
        %v517 = vpop.f32.mrf.mxu0
        %518 = vmatprep.mubr.f32.mxu0 %v429
        %519 = vmatmul.mubr.f32.gmra.mxu0 %v182
        %v520 = vpop.f32.mrf.mxu0
        %v521 = vadd.f32 %v413, %v520
        %v522 = vpop.f32.mrf.mxu0
        %523 = vdwg.mxu0
        %vm527 = vcmask 1043456
        %v528 = vrot.slane %v511, 4
        %v529 = vrot.slane %v516, 4
        %v530 = vsel %vm527, %v528, %v529
        %v531 = vrot.slane %v521, 4
        %v532 = vsel %vm527, %v529, %v531
        %533 = vrot.lane.b32.xlu0 %v530, 127
        %v534 = vpop.permute.xlu0 %533
        %535 = vrot.lane.b32.xlu0 %v532, 127
        %v536 = vpop.permute.xlu0 %535
        %537 = vrot.lane.b32.xlu0 %v531, 127
        %v538 = vpop.permute.xlu0 %537
        %v542 = vadd.f32 %v501, %v534
        %v543 = vadd.f32 %v506, %v536
        %v544 = vadd.f32 %v511, %v538
        %v546 = vsel %vm322, %v305, 0
        %548 = vmatprep.subr.mxu0 0.0
        %549 = vmatpush1.msra.mxu0 %v289
        %550 = vmatprep.subr.mxu0 0.0
        %551 = vmatpush1.msra.mxu0 %v288
        %552 = vmatprep.subr.mxu0 0.0
        %553 = vmatpush1.msra.mxu0 %v287
        %554 = vmatprep.subr.mxu0 0.0
        %555 = vmatpush1.msra.mxu0 %v286
        %556 = vmatprep.subr.mxu0 0.0
        %557 = vmatpush1.msra.mxu0 %v285
        %558 = vmatprep.subr.mxu0 0.0
        %559 = vmatpush1.msra.mxu0 %v284
        %560 = vmatprep.subr.mxu0 0.0
        %561 = vmatpush1.msra.mxu0 %v283
        %562 = vmatprep.subr.mxu0 0.0
        %563 = vmatpush1.msra.mxu0 %v282
        %564 = vmatprep.subr.mxu0 0.0
        %565 = vmatpush1.msra.mxu0 %v281
        %566 = vmatprep.subr.mxu0 0.0
        %567 = vmatpush1.msra.mxu0 %v280
        %568 = vmatprep.subr.mxu0 0.0
        %569 = vmatpush1.msra.mxu0 %v279
        %570 = vmatprep.subr.mxu0 0.0
        %571 = vmatpush1.msra.mxu0 %v278
        %572 = vmatprep.subr.mxu0 0.0
        %573 = vmatpush1.msra.mxu0 %v277
        %574 = vmatprep.subr.mxu0 0.0
        %575 = vmatpush1.msra.mxu0 %v276
        %576 = vmatprep.subr.mxu0 0.0
        %577 = vmatpush1.msra.mxu0 %v275
        %578 = vmatprep.subr.mxu0 0.0
        %579 = vmatpush1.msra.mxu0 %v274
        %580 = vmatprep.subr.mxu0 0.0
        %581 = vmatpush2.msra.mxu0 %v546
        %582 = vmatprep.subr.mxu0 0.0
        %583 = vmatpush2.msra.mxu0 %v304
        %584 = vmatprep.subr.mxu0 0.0
        %585 = vmatpush2.msra.mxu0 %v303
        %586 = vmatprep.subr.mxu0 0.0
        %587 = vmatpush2.msra.mxu0 %v302
        %588 = vmatprep.subr.mxu0 0.0
        %589 = vmatpush2.msra.mxu0 %v301
        %590 = vmatprep.subr.mxu0 0.0
        %591 = vmatpush2.msra.mxu0 %v300
        %592 = vmatprep.subr.mxu0 0.0
        %593 = vmatpush2.msra.mxu0 %v299
        %594 = vmatprep.subr.mxu0 0.0
        %595 = vmatpush2.msra.mxu0 %v298
        %596 = vmatprep.subr.mxu0 0.0
        %597 = vmatpush2.msra.mxu0 %v297
        %598 = vmatprep.subr.mxu0 0.0
        %599 = vmatpush2.msra.mxu0 %v296
        %600 = vmatprep.subr.mxu0 0.0
        %601 = vmatpush2.msra.mxu0 %v295
        %602 = vmatprep.subr.mxu0 0.0
        %603 = vmatpush2.msra.mxu0 %v294
        %604 = vmatprep.subr.mxu0 0.0
        %605 = vmatpush2.msra.mxu0 %v293
        %606 = vmatprep.subr.mxu0 0.0
        %607 = vmatpush2.msra.mxu0 %v292
        %608 = vmatprep.subr.mxu0 0.0
        %609 = vmatpush2.msra.mxu0 %v291
        %610 = vmatprep.subr.mxu0 0.0
        %611 = vmatpush2.msra.mxu0 %v290
        %612 = vmatprep.mubr.f32.mxu0 %v308
        %613 = vmatmul.mubr.f32.gmra.mxu0 %v185
        %v614 = vpop.f32.mrf.mxu0
        %v615 = vadd.f32 0.0, %v614
        %v616 = vpop.f32.mrf.mxu0
        %617 = vmatprep.mubr.f32.mxu0 %v311
        %618 = vmatmul.mubr.f32.gmra.mxu0 %v187
        %v619 = vpop.f32.mrf.mxu0
        %v620 = vadd.f32 0.0, %v619
        %v621 = vpop.f32.mrf.mxu0
        %622 = vmatprep.mubr.f32.mxu0 %v314
        %623 = vmatmul.mubr.f32.gmra.mxu0 %v189
        %v624 = vpop.f32.mrf.mxu0
        %v625 = vadd.f32 0.0, %v624
        %v626 = vpop.f32.mrf.mxu0
        %627 = vmatprep.mubr.f32.mxu0 %v317
        %628 = vmatmul.mubr.f32.gmra.mxu0 %v191
        %v629 = vpop.f32.mrf.mxu0
        %v630 = vadd.f32 0.0, %v629
        %v631 = vpop.f32.mrf.mxu0
        %632 = vmatprep.mubr.f32.mxu0 %v320
        %633 = vmatmul.mubr.f32.gmra.mxu0 %v193
        %v634 = vpop.f32.mrf.mxu0
        %v635 = vadd.f32 0.0, %v634
        %v636 = vpop.f32.mrf.mxu0
        %637 = vdwg.mxu0
        %638 = vmatprep.subr.mxu0 0.0
        %639 = vmatpush1.msra.mxu0 %v254
        %640 = vmatprep.subr.mxu0 0.0
        %641 = vmatpush1.msra.mxu0 %v253
        %642 = vmatprep.subr.mxu0 0.0
        %643 = vmatpush1.msra.mxu0 %v252
        %644 = vmatprep.subr.mxu0 0.0
        %645 = vmatpush1.msra.mxu0 %v251
        %646 = vmatprep.subr.mxu0 0.0
        %647 = vmatpush1.msra.mxu0 %v250
        %648 = vmatprep.subr.mxu0 0.0
        %649 = vmatpush1.msra.mxu0 %v249
        %650 = vmatprep.subr.mxu0 0.0
        %651 = vmatpush1.msra.mxu0 %v248
        %652 = vmatprep.subr.mxu0 0.0
        %653 = vmatpush1.msra.mxu0 %v247
        %654 = vmatprep.subr.mxu0 0.0
        %655 = vmatpush1.msra.mxu0 %v246
        %656 = vmatprep.subr.mxu0 0.0
        %657 = vmatpush1.msra.mxu0 %v245
        %658 = vmatprep.subr.mxu0 0.0
        %659 = vmatpush1.msra.mxu0 %v244
        %660 = vmatprep.subr.mxu0 0.0
        %661 = vmatpush1.msra.mxu0 %v243
        %662 = vmatprep.subr.mxu0 0.0
        %663 = vmatpush1.msra.mxu0 %v242
        %664 = vmatprep.subr.mxu0 0.0
        %665 = vmatpush1.msra.mxu0 %v241
        %666 = vmatprep.subr.mxu0 0.0
        %667 = vmatpush1.msra.mxu0 %v240
        %668 = vmatprep.subr.mxu0 0.0
        %669 = vmatpush1.msra.mxu0 %v239
        %670 = vmatprep.subr.mxu0 0.0
        %671 = vmatpush2.msra.mxu0 %v324
        %672 = vmatprep.subr.mxu0 0.0
        %673 = vmatpush2.msra.mxu0 %v269
        %674 = vmatprep.subr.mxu0 0.0
        %675 = vmatpush2.msra.mxu0 %v268
        %676 = vmatprep.subr.mxu0 0.0
        %677 = vmatpush2.msra.mxu0 %v267
        %678 = vmatprep.subr.mxu0 0.0
        %679 = vmatpush2.msra.mxu0 %v266
        %680 = vmatprep.subr.mxu0 0.0
        %681 = vmatpush2.msra.mxu0 %v265
        %682 = vmatprep.subr.mxu0 0.0
        %683 = vmatpush2.msra.mxu0 %v264
        %684 = vmatprep.subr.mxu0 0.0
        %685 = vmatpush2.msra.mxu0 %v263
        %686 = vmatprep.subr.mxu0 0.0
        %687 = vmatpush2.msra.mxu0 %v262
        %688 = vmatprep.subr.mxu0 0.0
        %689 = vmatpush2.msra.mxu0 %v261
        %690 = vmatprep.subr.mxu0 0.0
        %691 = vmatpush2.msra.mxu0 %v260
        %692 = vmatprep.subr.mxu0 0.0
        %693 = vmatpush2.msra.mxu0 %v259
        %694 = vmatprep.subr.mxu0 0.0
        %695 = vmatpush2.msra.mxu0 %v258
        %696 = vmatprep.subr.mxu0 0.0
        %697 = vmatpush2.msra.mxu0 %v257
        %698 = vmatprep.subr.mxu0 0.0
        %699 = vmatpush2.msra.mxu0 %v256
        %700 = vmatprep.subr.mxu0 0.0
        %701 = vmatpush2.msra.mxu0 %v255
        %702 = vmatprep.mubr.f32.mxu0 %v417
        %703 = vmatmul.mubr.f32.gmra.mxu0 %v174
        %v704 = vpop.f32.mrf.mxu0
        %v705 = vadd.f32 %v615, %v704
        %v706 = vpop.f32.mrf.mxu0
        %707 = vmatprep.mubr.f32.mxu0 %v420
        %708 = vmatmul.mubr.f32.gmra.mxu0 %v176
        %v709 = vpop.f32.mrf.mxu0
        %v710 = vadd.f32 %v620, %v709
        %v711 = vpop.f32.mrf.mxu0
        %712 = vmatprep.mubr.f32.mxu0 %v423
        %713 = vmatmul.mubr.f32.gmra.mxu0 %v178
        %v714 = vpop.f32.mrf.mxu0
        %v715 = vadd.f32 %v625, %v714
        %v716 = vpop.f32.mrf.mxu0
        %717 = vmatprep.mubr.f32.mxu0 %v426
        %718 = vmatmul.mubr.f32.gmra.mxu0 %v180
        %v719 = vpop.f32.mrf.mxu0
        %v720 = vadd.f32 %v630, %v719
        %v721 = vpop.f32.mrf.mxu0
        %722 = vmatprep.mubr.f32.mxu0 %v429
        %723 = vmatmul.mubr.f32.gmra.mxu0 %v182
        %v724 = vpop.f32.mrf.mxu0
        %v725 = vadd.f32 %v635, %v724
        %v726 = vpop.f32.mrf.mxu0
        %727 = vdwg.mxu0
        %v731 = vrot.slane %v715, 4
        %v732 = vrot.slane %v720, 4
        %v733 = vsel %vm527, %v731, %v732
        %v734 = vrot.slane %v725, 4
        %v735 = vsel %vm527, %v732, %v734
        %736 = vrot.lane.b32.xlu0 %v733, 127
        %v737 = vpop.permute.xlu0 %736
        %738 = vrot.lane.b32.xlu0 %v735, 127
        %v739 = vpop.permute.xlu0 %738
        %740 = vrot.lane.b32.xlu0 %v734, 127
        %v741 = vpop.permute.xlu0 %740
        %v745 = vadd.f32 %v705, %v737
        %v746 = vadd.f32 %v710, %v739
        %v747 = vadd.f32 %v715, %v741
        %v748 = vmax.f32 %v542, %v745
        %v749 = vmax.f32 %v543, %v746
        %v750 = vmax.f32 %v544, %v747
        %752 = vset.pattern.permute.xlu0 0
        %753 = vperm.xlu0 %752, %v171
        %v754 = vpop.permute.xlu0 %753
        %757 = vset.pattern.permute.xlu0 0
        %758 = vperm.xlu0 %757, %v172
        %v759 = vpop.permute.xlu0 %758
        %762 = vset.pattern.permute.xlu0 0
        %763 = vperm.xlu0 %762, %v173
        %v764 = vpop.permute.xlu0 %763
        %v766 = vadd.f32 %v748, %v754
        %v767 = vadd.f32 %v749, %v759
        %v768 = vadd.f32 %v750, %v764
        %v769 = vmax.f32 %v766, 0.0
        %v770 = vmax.f32 %v767, 0.0
        %v771 = vmax.f32 %v768, 0.0
        %s772 = smul.u32 %s196, 24
        %s773 = scalar_lea.vmem %s170, %s772
        %vm774 = vcmask 228352
        %775 = vst.msk [vmem:[%s773] sm:$0xff] %vm774, %v769
        %776 = vst.msk [vmem:[%s773 + $0x8] sm:$0xff] %vm774, %v770
        %vm777 = vcmask 224256
        %778 = vst.msk [vmem:[%s773 + $0x10] sm:$0xf] %vm777, %v771
      $region37: #{net_forward.4} parent=31 // loop_footer
        %s200 = sadd.s32 1, %s196
      $region38: #{net_forward.4} parent=31 // loop_footer_branch
        %195 = sbr.rel target = $region34
      $region39: #{net_forward.4} parent=31 // loop_exit
        _
      %p779 = scmp.lt.s32.totalorder %s14, 1
      %s780 = scalar_select %p779, %s14, 1
      %s781 = smul.addr %s780, 42
      %s782 = smul.addr %s781, 8
      %s783 = scalar_lea.vmem %s3, %s782
      // Predicated region
      $region40: #{net_forward.4} parent=31 // pred_check
        %p784 = pneg %p100
      $region41: #{net_forward.4} parent=31 // pred_check_branch
        %786 = sbr.rel (%p784) target = $region43
      $region42: #{net_forward.4} parent=31 // pred_region
        _
      $region43: #{net_forward.4} parent=31 // pred_fallthru
        _
    $region32: #{net_forward.4} parent=5 // pred_fallthru
      _
    %p787 = scmp.le.s32.totalorder 2, %s9
    // Predicated region
    $region44: #{net_forward.4} parent=5 // pred_check
      %p788 = pneg %p787
    $region45: #{net_forward.4} parent=5 // pred_check_branch
      %790 = sbr.rel (%p788) target = $region47
    $region46: #{net_forward.4} parent=5 // pred_region
      %s791 = ssub.s32 %s9, 2
      // Predicated region
      $region48: #{net_forward.4} parent=46 // pred_check
        %p792 = pneg %p106
      $region49: #{net_forward.4} parent=46 // pred_check_branch
        %794 = sbr.rel (%p792) target = $region51
      $region50: #{net_forward.4} parent=46 // pred_region
        %p795 = scmp.lt.s32.totalorder %s15, 1
        %s796 = scalar_select %p795, %s15, 1
        %s797 = smul.addr %s796, 42
        %s798 = smul.addr %s797, 8
        %s799 = scalar_lea.vmem %s3, %s798
      $region51: #{net_forward.4} parent=46 // pred_fallthru
        _
    $region47: #{net_forward.4} parent=5 // pred_fallthru
      _
  $region6: #{net_forward.4} parent=0 // loop_footer
    %s13 = sadd.s32 1, %s9
  $region7: #{net_forward.4} parent=0 // loop_footer_branch
    %8 = sbr.rel target = $region3
  $region8: #{net_forward.4} parent=0 // loop_exit
    _

// kernel: net_forward.5
$region0: #{net_forward.5}
  #allocation0 [shape = 'u32[]', space=smem, size = 0x4, offset = 0x4, fixed_abs, tag = 'smem constant byte address 0x4 - core index']
  #allocation1 [shape = 'u32[144,128]{1,0:T(1,128)}', space=vmem, size = 0x12000, scoped, tag = 'internal scratch']
  %s0 = inlined_call_operand.vmem [shape: f32[2,3920], index: 0, kind: input, shape index: {}]
  %s1 = inlined_call_operand.vmem [shape: f32[3920,64], index: 1, kind: input, shape index: {}]
  %s2 = inlined_call_operand.vmem [shape: f32[1,64], index: 2, kind: input, shape index: {}]
  %s3 = inlined_call_operand.vmem [shape: f32[64,4], index: 3, kind: input, shape index: {}]
  %s4 = inlined_call_operand.vmem [shape: f32[1,4], index: 4, kind: input, shape index: {}]
  %s5 = inlined_call_operand.hbm [shape: f32[2,4], index: 5, kind: output, shape index: {}]
  %s6 = sld [smem:[#allocation0]]
  $region30: #{net_forward.5} parent=0
    _
  %s8 = ssub.s32 1, %s6
  %s9 = scalar_select 0, %s8, %s6
  $region1: #{net_forward.5} parent=0
    #allocation2 [shape = 'u8[1024]{0}', space=vmem, size = 0x400, scoped, tag = 'output window, operand 0, single buffered']
    #allocation3 [shape = 's32[1]{0}', space=sflag, size = 0x4, scoped, tag = 'scoped memory for net_forward.5']
    %10 = vsyncpa [#allocation3], 0
    // Predicated region
    $region2: #{net_forward.5} parent=1 // pred_check
      _
    $region3: #{net_forward.5} parent=1 // pred_check_branch
      %12 = sbr.rel (0) target = $region5
    $region4: #{net_forward.5} parent=1 // pred_region
      _
    $region5: #{net_forward.5} parent=1 // pred_fallthru
      _
    // Predicated region
    $region6: #{net_forward.5} parent=1 // pred_check
      _
    $region7: #{net_forward.5} parent=1 // pred_check_branch
      %14 = sbr.rel (0) target = $region9
    $region8: #{net_forward.5} parent=1 // pred_region
      _
    $region9: #{net_forward.5} parent=1 // pred_fallthru
      _
    // Predicated region
    $region10: #{net_forward.5} parent=1 // pred_check
      _
    $region11: #{net_forward.5} parent=1 // pred_check_branch
      %16 = sbr.rel (0) target = $region13
    $region12: #{net_forward.5} parent=1 // pred_region
      _
    $region13: #{net_forward.5} parent=1 // pred_fallthru
      _
    // Predicated region
    $region14: #{net_forward.5} parent=1 // pred_check
      _
    $region15: #{net_forward.5} parent=1 // pred_check_branch
      %18 = sbr.rel (0) target = $region17
    $region16: #{net_forward.5} parent=1 // pred_region
      _
    $region17: #{net_forward.5} parent=1 // pred_fallthru
      _
    // Predicated region
    $region18: #{net_forward.5} parent=1 // pred_check
      _
    $region19: #{net_forward.5} parent=1 // pred_check_branch
      %20 = sbr.rel (0) target = $region21
    $region20: #{net_forward.5} parent=1 // pred_region
      _
    $region21: #{net_forward.5} parent=1 // pred_fallthru
      _
    %v21 = vld [vmem:[%s0] sm:$0xff]
    %v22 = vld [vmem:[%s0 + $0x8] sm:$0xff]
    %v23 = vld [vmem:[%s0 + $0x10] sm:$0xff]
    %v24 = vld [vmem:[%s0 + $0x18] sm:$0xff]
    %v25 = vld [vmem:[%s0 + $0x20] sm:$0xff]
    %v26 = vld [vmem:[%s0 + $0x28] sm:$0xff]
    %v27 = vld [vmem:[%s0 + $0x30] sm:$0xff]
    %v28 = vld [vmem:[%s0 + $0x38] sm:$0x3f]
    %v29 = vld [vmem:[%s1] sm:$0xff]
    %v30 = vld [vmem:[%s1 + $0x8] sm:$0xff]
    %v31 = vld [vmem:[%s1 + $0x10] sm:$0xff]
    %v32 = vld [vmem:[%s1 + $0x18] sm:$0xff]
    %v33 = vld [vmem:[%s1 + $0x20] sm:$0xff]
    %v34 = vld [vmem:[%s1 + $0x28] sm:$0xff]
    %v35 = vld [vmem:[%s1 + $0x30] sm:$0xff]
    %v36 = vld [vmem:[%s1 + $0x38] sm:$0xff]
    %v37 = vld [vmem:[%s1 + $0x40] sm:$0xff]
    %v38 = vld [vmem:[%s1 + $0x48] sm:$0xff]
    %v39 = vld [vmem:[%s1 + $0x50] sm:$0xff]
    %v40 = vld [vmem:[%s1 + $0x58] sm:$0xff]
    %v41 = vld [vmem:[%s1 + $0x60] sm:$0xff]
    %v42 = vld [vmem:[%s1 + $0x68] sm:$0xff]
    %v43 = vld [vmem:[%s1 + $0x70] sm:$0xff]
    %v44 = vld [vmem:[%s1 + $0x78] sm:$0xff]
    %v45 = vld [vmem:[%s1 + $0x80] sm:$0xff]
    %v46 = vld [vmem:[%s1 + $0x88] sm:$0xff]
    %v47 = vld [vmem:[%s1 + $0x90] sm:$0xff]
    %v48 = vld [vmem:[%s1 + $0x98] sm:$0xff]
    %v49 = vld [vmem:[%s1 + $0xa0] sm:$0xff]
    %v50 = vld [vmem:[%s1 + $0xa8] sm:$0xff]
    %v51 = vld [vmem:[%s1 + $0xb0] sm:$0xff]
    %v52 = vld [vmem:[%s1 + $0xb8] sm:$0xff]
    %v53 = vld [vmem:[%s1 + $0xc0] sm:$0xff]
    %v54 = vld [vmem:[%s1 + $0xc8] sm:$0xff]
    %v55 = vld [vmem:[%s1 + $0xd0] sm:$0xff]
    %v56 = vld [vmem:[%s1 + $0xd8] sm:$0xff]
    %v57 = vld [vmem:[%s1 + $0xe0] sm:$0xff]
    %v58 = vld [vmem:[%s1 + $0xe8] sm:$0xff]
    %v59 = vld [vmem:[%s1 + $0xf0] sm:$0xff]
    %v60 = vld [vmem:[%s1 + $0xf8] sm:$0xff]
    %v61 = vld [vmem:[%s1 + $0x100] sm:$0xff]
    %v62 = vld [vmem:[%s1 + $0x108] sm:$0xff]
    %v63 = vld [vmem:[%s1 + $0x110] sm:$0xff]
    %v64 = vld [vmem:[%s1 + $0x118] sm:$0xff]
    %v65 = vld [vmem:[%s1 + $0x120] sm:$0xff]
    %v66 = vld [vmem:[%s1 + $0x128] sm:$0xff]
    %v67 = vld [vmem:[%s1 + $0x130] sm:$0xff]
    %v68 = vld [vmem:[%s1 + $0x138] sm:$0xff]
    %v69 = vld [vmem:[%s1 + $0x140] sm:$0xff]
    %v70 = vld [vmem:[%s1 + $0x148] sm:$0xff]
    %v71 = vld [vmem:[%s1 + $0x150] sm:$0xff]
    %v72 = vld [vmem:[%s1 + $0x158] sm:$0xff]
    %v73 = vld [vmem:[%s1 + $0x160] sm:$0xff]
    %v74 = vld [vmem:[%s1 + $0x168] sm:$0xff]
    %v75 = vld [vmem:[%s1 + $0x170] sm:$0xff]
    %v76 = vld [vmem:[%s1 + $0x178] sm:$0xff]
    %v77 = vld [vmem:[%s1 + $0x180] sm:$0xff]
    %v78 = vld [vmem:[%s1 + $0x188] sm:$0xff]
    %v79 = vld [vmem:[%s1 + $0x190] sm:$0xff]
    %v80 = vld [vmem:[%s1 + $0x198] sm:$0xff]
    %v81 = vld [vmem:[%s1 + $0x1a0] sm:$0xff]
    %v82 = vld [vmem:[%s1 + $0x1a8] sm:$0xff]
    %v83 = vld [vmem:[%s1 + $0x1b0] sm:$0xff]
    %v84 = vld [vmem:[%s1 + $0x1b8] sm:$0xff]
    %v85 = vld [vmem:[%s1 + $0x1c0] sm:$0xff]
    %v86 = vld [vmem:[%s1 + $0x1c8] sm:$0xff]
    %v87 = vld [vmem:[%s1 + $0x1d0] sm:$0xff]
    %v88 = vld [vmem:[%s1 + $0x1d8] sm:$0xff]
    %v89 = vld [vmem:[%s1 + $0x1e0] sm:$0xff]
    %v90 = vld [vmem:[%s1 + $0x1e8] sm:$0xff]
    %v91 = vld [vmem:[%s1 + $0x1f0] sm:$0xff]
    %v92 = vld [vmem:[%s1 + $0x1f8] sm:$0xff]
    %v93 = vld [vmem:[%s1 + $0x200] sm:$0xff]
    %v94 = vld [vmem:[%s1 + $0x208] sm:$0xff]
    %v95 = vld [vmem:[%s1 + $0x210] sm:$0xff]
    %v96 = vld [vmem:[%s1 + $0x218] sm:$0xff]
    %v97 = vld [vmem:[%s1 + $0x220] sm:$0xff]
    %v98 = vld [vmem:[%s1 + $0x228] sm:$0xff]
    %v99 = vld [vmem:[%s1 + $0x230] sm:$0xff]
    %v100 = vld [vmem:[%s1 + $0x238] sm:$0xff]
    %v101 = vld [vmem:[%s1 + $0x240] sm:$0xff]
    %v102 = vld [vmem:[%s1 + $0x248] sm:$0xff]
    %v103 = vld [vmem:[%s1 + $0x250] sm:$0xff]
    %v104 = vld [vmem:[%s1 + $0x258] sm:$0xff]
    %v105 = vld [vmem:[%s1 + $0x260] sm:$0xff]
    %v106 = vld [vmem:[%s1 + $0x268] sm:$0xff]
    %v107 = vld [vmem:[%s1 + $0x270] sm:$0xff]
    %v108 = vld [vmem:[%s1 + $0x278] sm:$0xff]
    %v109 = vld [vmem:[%s1 + $0x280] sm:$0xff]
    %v110 = vld [vmem:[%s1 + $0x288] sm:$0xff]
    %v111 = vld [vmem:[%s1 + $0x290] sm:$0xff]
    %v112 = vld [vmem:[%s1 + $0x298] sm:$0xff]
    %v113 = vld [vmem:[%s1 + $0x2a0] sm:$0xff]
    %v114 = vld [vmem:[%s1 + $0x2a8] sm:$0xff]
    %v115 = vld [vmem:[%s1 + $0x2b0] sm:$0xff]
    %v116 = vld [vmem:[%s1 + $0x2b8] sm:$0xff]
    %v117 = vld [vmem:[%s1 + $0x2c0] sm:$0xff]
    %v118 = vld [vmem:[%s1 + $0x2c8] sm:$0xff]
    %v119 = vld [vmem:[%s1 + $0x2d0] sm:$0xff]
    %v120 = vld [vmem:[%s1 + $0x2d8] sm:$0xff]
    %v121 = vld [vmem:[%s1 + $0x2e0] sm:$0xff]
    %v122 = vld [vmem:[%s1 + $0x2e8] sm:$0xff]
    %v123 = vld [vmem:[%s1 + $0x2f0] sm:$0xff]
    %v124 = vld [vmem:[%s1 + $0x2f8] sm:$0xff]
    %v125 = vld [vmem:[%s1 + $0x300] sm:$0xff]
    %v126 = vld [vmem:[%s1 + $0x308] sm:$0xff]
    %v127 = vld [vmem:[%s1 + $0x310] sm:$0xff]
    %v128 = vld [vmem:[%s1 + $0x318] sm:$0xff]
    %v129 = vld [vmem:[%s1 + $0x320] sm:$0xff]
    %v130 = vld [vmem:[%s1 + $0x328] sm:$0xff]
    %v131 = vld [vmem:[%s1 + $0x330] sm:$0xff]
    %v132 = vld [vmem:[%s1 + $0x338] sm:$0xff]
    %v133 = vld [vmem:[%s1 + $0x340] sm:$0xff]
    %v134 = vld [vmem:[%s1 + $0x348] sm:$0xff]
    %v135 = vld [vmem:[%s1 + $0x350] sm:$0xff]
    %v136 = vld [vmem:[%s1 + $0x358] sm:$0xff]
    %v137 = vld [vmem:[%s1 + $0x360] sm:$0xff]
    %v138 = vld [vmem:[%s1 + $0x368] sm:$0xff]
    %v139 = vld [vmem:[%s1 + $0x370] sm:$0xff]
    %v140 = vld [vmem:[%s1 + $0x378] sm:$0xff]
    %v141 = vld [vmem:[%s1 + $0x380] sm:$0xff]
    %v142 = vld [vmem:[%s1 + $0x388] sm:$0xff]
    %v143 = vld [vmem:[%s1 + $0x390] sm:$0xff]
    %v144 = vld [vmem:[%s1 + $0x398] sm:$0xff]
    %v145 = vld [vmem:[%s1 + $0x3a0] sm:$0xff]
    %v146 = vld [vmem:[%s1 + $0x3a8] sm:$0xff]
    %v147 = vld [vmem:[%s1 + $0x3b0] sm:$0xff]
    %v148 = vld [vmem:[%s1 + $0x3b8] sm:$0xff]
    %v149 = vld [vmem:[%s1 + $0x3c0] sm:$0xff]
    %v150 = vld [vmem:[%s1 + $0x3c8] sm:$0xff]
    %v151 = vld [vmem:[%s1 + $0x3d0] sm:$0xff]
    %v152 = vld [vmem:[%s1 + $0x3d8] sm:$0xff]
    %v153 = vld [vmem:[%s1 + $0x3e0] sm:$0xff]
    %v154 = vld [vmem:[%s1 + $0x3e8] sm:$0xff]
    %v155 = vld [vmem:[%s1 + $0x3f0] sm:$0xff]
    %v156 = vld [vmem:[%s1 + $0x3f8] sm:$0xff]
    %v157 = vld [vmem:[%s1 + $0x400] sm:$0xff]
    %v158 = vld [vmem:[%s1 + $0x408] sm:$0xff]
    %v159 = vld [vmem:[%s1 + $0x410] sm:$0xff]
    %v160 = vld [vmem:[%s1 + $0x418] sm:$0xff]
    %v161 = vld [vmem:[%s1 + $0x420] sm:$0xff]
    %v162 = vld [vmem:[%s1 + $0x428] sm:$0xff]
    %v163 = vld [vmem:[%s1 + $0x430] sm:$0xff]
    %v164 = vld [vmem:[%s1 + $0x438] sm:$0xff]
    %v165 = vld [vmem:[%s1 + $0x440] sm:$0xff]
    %v166 = vld [vmem:[%s1 + $0x448] sm:$0xff]
    %v167 = vld [vmem:[%s1 + $0x450] sm:$0xff]
    %v168 = vld [vmem:[%s1 + $0x458] sm:$0xff]
    %v169 = vld [vmem:[%s1 + $0x460] sm:$0xff]
    %v170 = vld [vmem:[%s1 + $0x468] sm:$0xff]
    %v171 = vld [vmem:[%s1 + $0x470] sm:$0xff]
    %v172 = vld [vmem:[%s1 + $0x478] sm:$0xff]
    %v173 = vld [vmem:[%s1 + $0x480] sm:$0xff]
    %v174 = vld [vmem:[%s1 + $0x488] sm:$0xff]
    %v175 = vld [vmem:[%s1 + $0x490] sm:$0xff]
    %v176 = vld [vmem:[%s1 + $0x498] sm:$0xff]
    %v177 = vld [vmem:[%s1 + $0x4a0] sm:$0xff]
    %v178 = vld [vmem:[%s1 + $0x4a8] sm:$0xff]
    %v179 = vld [vmem:[%s1 + $0x4b0] sm:$0xff]
    %v180 = vld [vmem:[%s1 + $0x4b8] sm:$0xff]
    %v181 = vld [vmem:[%s1 + $0x4c0] sm:$0xff]
    %v182 = vld [vmem:[%s1 + $0x4c8] sm:$0xff]
    %v183 = vld [vmem:[%s1 + $0x4d0] sm:$0xff]
    %v184 = vld [vmem:[%s1 + $0x4d8] sm:$0xff]
    %v185 = vld [vmem:[%s1 + $0x4e0] sm:$0xff]
    %v186 = vld [vmem:[%s1 + $0x4e8] sm:$0xff]
    %v187 = vld [vmem:[%s1 + $0x4f0] sm:$0xff]
    %v188 = vld [vmem:[%s1 + $0x4f8] sm:$0xff]
    %v189 = vld [vmem:[%s1 + $0x500] sm:$0xff]
    %v190 = vld [vmem:[%s1 + $0x508] sm:$0xff]
    %v191 = vld [vmem:[%s1 + $0x510] sm:$0xff]
    %v192 = vld [vmem:[%s1 + $0x518] sm:$0xff]
    %v193 = vld [vmem:[%s1 + $0x520] sm:$0xff]
    %v194 = vld [vmem:[%s1 + $0x528] sm:$0xff]
    %v195 = vld [vmem:[%s1 + $0x530] sm:$0xff]
    %v196 = vld [vmem:[%s1 + $0x538] sm:$0xff]
    %v197 = vld [vmem:[%s1 + $0x540] sm:$0xff]
    %v198 = vld [vmem:[%s1 + $0x548] sm:$0xff]
    %v199 = vld [vmem:[%s1 + $0x550] sm:$0xff]
    %v200 = vld [vmem:[%s1 + $0x558] sm:$0xff]
    %v201 = vld [vmem:[%s1 + $0x560] sm:$0xff]
    %v202 = vld [vmem:[%s1 + $0x568] sm:$0xff]
    %v203 = vld [vmem:[%s1 + $0x570] sm:$0xff]
    %v204 = vld [vmem:[%s1 + $0x578] sm:$0xff]
    %v205 = vld [vmem:[%s1 + $0x580] sm:$0xff]
    %v206 = vld [vmem:[%s1 + $0x588] sm:$0xff]
    %v207 = vld [vmem:[%s1 + $0x590] sm:$0xff]
    %v208 = vld [vmem:[%s1 + $0x598] sm:$0xff]
    %v209 = vld [vmem:[%s1 + $0x5a0] sm:$0xff]
    %v210 = vld [vmem:[%s1 + $0x5a8] sm:$0xff]
    %v211 = vld [vmem:[%s1 + $0x5b0] sm:$0xff]
    %v212 = vld [vmem:[%s1 + $0x5b8] sm:$0xff]
    %v213 = vld [vmem:[%s1 + $0x5c0] sm:$0xff]
    %v214 = vld [vmem:[%s1 + $0x5c8] sm:$0xff]
    %v215 = vld [vmem:[%s1 + $0x5d0] sm:$0xff]
    %v216 = vld [vmem:[%s1 + $0x5d8] sm:$0xff]
    %v217 = vld [vmem:[%s1 + $0x5e0] sm:$0xff]
    %v218 = vld [vmem:[%s1 + $0x5e8] sm:$0xff]
    %v219 = vld [vmem:[%s1 + $0x5f0] sm:$0xff]
    %v220 = vld [vmem:[%s1 + $0x5f8] sm:$0xff]
    %v221 = vld [vmem:[%s1 + $0x600] sm:$0xff]
    %v222 = vld [vmem:[%s1 + $0x608] sm:$0xff]
    %v223 = vld [vmem:[%s1 + $0x610] sm:$0xff]
    %v224 = vld [vmem:[%s1 + $0x618] sm:$0xff]
    %v225 = vld [vmem:[%s1 + $0x620] sm:$0xff]
    %v226 = vld [vmem:[%s1 + $0x628] sm:$0xff]
    %v227 = vld [vmem:[%s1 + $0x630] sm:$0xff]
    %v228 = vld [vmem:[%s1 + $0x638] sm:$0xff]
    %v229 = vld [vmem:[%s1 + $0x640] sm:$0xff]
    %v230 = vld [vmem:[%s1 + $0x648] sm:$0xff]
    %v231 = vld [vmem:[%s1 + $0x650] sm:$0xff]
    %v232 = vld [vmem:[%s1 + $0x658] sm:$0xff]
    %v233 = vld [vmem:[%s1 + $0x660] sm:$0xff]
    %v234 = vld [vmem:[%s1 + $0x668] sm:$0xff]
    %v235 = vld [vmem:[%s1 + $0x670] sm:$0xff]
    %v236 = vld [vmem:[%s1 + $0x678] sm:$0xff]
    %v237 = vld [vmem:[%s1 + $0x680] sm:$0xff]
    %v238 = vld [vmem:[%s1 + $0x688] sm:$0xff]
    %v239 = vld [vmem:[%s1 + $0x690] sm:$0xff]
    %v240 = vld [vmem:[%s1 + $0x698] sm:$0xff]
    %v241 = vld [vmem:[%s1 + $0x6a0] sm:$0xff]
    %v242 = vld [vmem:[%s1 + $0x6a8] sm:$0xff]
    %v243 = vld [vmem:[%s1 + $0x6b0] sm:$0xff]
    %v244 = vld [vmem:[%s1 + $0x6b8] sm:$0xff]
    %v245 = vld [vmem:[%s1 + $0x6c0] sm:$0xff]
    %v246 = vld [vmem:[%s1 + $0x6c8] sm:$0xff]
    %v247 = vld [vmem:[%s1 + $0x6d0] sm:$0xff]
    %v248 = vld [vmem:[%s1 + $0x6d8] sm:$0xff]
    %v249 = vld [vmem:[%s1 + $0x6e0] sm:$0xff]
    %v250 = vld [vmem:[%s1 + $0x6e8] sm:$0xff]
    %v251 = vld [vmem:[%s1 + $0x6f0] sm:$0xff]
    %v252 = vld [vmem:[%s1 + $0x6f8] sm:$0xff]
    %v253 = vld [vmem:[%s1 + $0x700] sm:$0xff]
    %v254 = vld [vmem:[%s1 + $0x708] sm:$0xff]
    %v255 = vld [vmem:[%s1 + $0x710] sm:$0xff]
    %v256 = vld [vmem:[%s1 + $0x718] sm:$0xff]
    %v257 = vld [vmem:[%s1 + $0x720] sm:$0xff]
    %v258 = vld [vmem:[%s1 + $0x728] sm:$0xff]
    %v259 = vld [vmem:[%s1 + $0x730] sm:$0xff]
    %v260 = vld [vmem:[%s1 + $0x738] sm:$0xff]
    %v261 = vld [vmem:[%s1 + $0x740] sm:$0xff]
    %v262 = vld [vmem:[%s1 + $0x748] sm:$0xff]
    %v263 = vld [vmem:[%s1 + $0x750] sm:$0xff]
    %v264 = vld [vmem:[%s1 + $0x758] sm:$0xff]
    %v265 = vld [vmem:[%s1 + $0x760] sm:$0xff]
    %v266 = vld [vmem:[%s1 + $0x768] sm:$0xff]
    %v267 = vld [vmem:[%s1 + $0x770] sm:$0xff]
    %v268 = vld [vmem:[%s1 + $0x778] sm:$0xff]
    %v269 = vld [vmem:[%s1 + $0x780] sm:$0xff]
    %v270 = vld [vmem:[%s1 + $0x788] sm:$0xff]
    %v271 = vld [vmem:[%s1 + $0x790] sm:$0xff]
    %v272 = vld [vmem:[%s1 + $0x798] sm:$0xff]
    %v273 = vld [vmem:[%s1 + $0x7a0] sm:$0xff]
    %v274 = vld [vmem:[%s1 + $0x7a8] sm:$0xff]
    %v275 = vld [vmem:[%s1 + $0x7b0] sm:$0xff]
    %v276 = vld [vmem:[%s1 + $0x7b8] sm:$0xff]
    %v277 = vld [vmem:[%s1 + $0x7c0] sm:$0xff]
    %v278 = vld [vmem:[%s1 + $0x7c8] sm:$0xff]
    %v279 = vld [vmem:[%s1 + $0x7d0] sm:$0xff]
    %v280 = vld [vmem:[%s1 + $0x7d8] sm:$0xff]
    %v281 = vld [vmem:[%s1 + $0x7e0] sm:$0xff]
    %v282 = vld [vmem:[%s1 + $0x7e8] sm:$0xff]
    %v283 = vld [vmem:[%s1 + $0x7f0] sm:$0xff]
    %v284 = vld [vmem:[%s1 + $0x7f8] sm:$0xff]
    %v285 = vld [vmem:[%s1 + $0x800] sm:$0xff]
    %v286 = vld [vmem:[%s1 + $0x808] sm:$0xff]
    %v287 = vld [vmem:[%s1 + $0x810] sm:$0xff]
    %v288 = vld [vmem:[%s1 + $0x818] sm:$0xff]
    %v289 = vld [vmem:[%s1 + $0x820] sm:$0xff]
    %v290 = vld [vmem:[%s1 + $0x828] sm:$0xff]
    %v291 = vld [vmem:[%s1 + $0x830] sm:$0xff]
    %v292 = vld [vmem:[%s1 + $0x838] sm:$0xff]
    %v293 = vld [vmem:[%s1 + $0x840] sm:$0xff]
    %v294 = vld [vmem:[%s1 + $0x848] sm:$0xff]
    %v295 = vld [vmem:[%s1 + $0x850] sm:$0xff]
    %v296 = vld [vmem:[%s1 + $0x858] sm:$0xff]
    %v297 = vld [vmem:[%s1 + $0x860] sm:$0xff]
    %v298 = vld [vmem:[%s1 + $0x868] sm:$0xff]
    %v299 = vld [vmem:[%s1 + $0x870] sm:$0xff]
    %v300 = vld [vmem:[%s1 + $0x878] sm:$0xff]
    %v301 = vld [vmem:[%s1 + $0x880] sm:$0xff]
    %v302 = vld [vmem:[%s1 + $0x888] sm:$0xff]
    %v303 = vld [vmem:[%s1 + $0x890] sm:$0xff]
    %v304 = vld [vmem:[%s1 + $0x898] sm:$0xff]
    %v305 = vld [vmem:[%s1 + $0x8a0] sm:$0xff]
    %v306 = vld [vmem:[%s1 + $0x8a8] sm:$0xff]
    %v307 = vld [vmem:[%s1 + $0x8b0] sm:$0xff]
    %v308 = vld [vmem:[%s1 + $0x8b8] sm:$0xff]
    %v309 = vld [vmem:[%s1 + $0x8c0] sm:$0xff]
    %v310 = vld [vmem:[%s1 + $0x8c8] sm:$0xff]
    %v311 = vld [vmem:[%s1 + $0x8d0] sm:$0xff]
    %v312 = vld [vmem:[%s1 + $0x8d8] sm:$0xff]
    %v313 = vld [vmem:[%s1 + $0x8e0] sm:$0xff]
    %v314 = vld [vmem:[%s1 + $0x8e8] sm:$0xff]
    %v315 = vld [vmem:[%s1 + $0x8f0] sm:$0xff]
    %v316 = vld [vmem:[%s1 + $0x8f8] sm:$0xff]
    %v317 = vld [vmem:[%s1 + $0x900] sm:$0xff]
    %v318 = vld [vmem:[%s1 + $0x908] sm:$0xff]
    %v319 = vld [vmem:[%s1 + $0x910] sm:$0xff]
    %v320 = vld [vmem:[%s1 + $0x918] sm:$0xff]
    %v321 = vld [vmem:[%s1 + $0x920] sm:$0xff]
    %v322 = vld [vmem:[%s1 + $0x928] sm:$0xff]
    %v323 = vld [vmem:[%s1 + $0x930] sm:$0xff]
    %v324 = vld [vmem:[%s1 + $0x938] sm:$0xff]
    %v325 = vld [vmem:[%s1 + $0x940] sm:$0xff]
    %v326 = vld [vmem:[%s1 + $0x948] sm:$0xff]
    %v327 = vld [vmem:[%s1 + $0x950] sm:$0xff]
    %v328 = vld [vmem:[%s1 + $0x958] sm:$0xff]
    %v329 = vld [vmem:[%s1 + $0x960] sm:$0xff]
    %v330 = vld [vmem:[%s1 + $0x968] sm:$0xff]
    %v331 = vld [vmem:[%s1 + $0x970] sm:$0xff]
    %v332 = vld [vmem:[%s1 + $0x978] sm:$0xff]
    %v333 = vld [vmem:[%s1 + $0x980] sm:$0xff]
    %v334 = vld [vmem:[%s1 + $0x988] sm:$0xff]
    %v335 = vld [vmem:[%s1 + $0x990] sm:$0xff]
    %v336 = vld [vmem:[%s1 + $0x998] sm:$0xff]
    %v337 = vld [vmem:[%s1 + $0x9a0] sm:$0xff]
    %v338 = vld [vmem:[%s1 + $0x9a8] sm:$0xff]
    %v339 = vld [vmem:[%s1 + $0x9b0] sm:$0xff]
    %v340 = vld [vmem:[%s1 + $0x9b8] sm:$0xff]
    %v341 = vld [vmem:[%s1 + $0x9c0] sm:$0xff]
    %v342 = vld [vmem:[%s1 + $0x9c8] sm:$0xff]
    %v343 = vld [vmem:[%s1 + $0x9d0] sm:$0xff]
    %v344 = vld [vmem:[%s1 + $0x9d8] sm:$0xff]
    %v345 = vld [vmem:[%s1 + $0x9e0] sm:$0xff]
    %v346 = vld [vmem:[%s1 + $0x9e8] sm:$0xff]
    %v347 = vld [vmem:[%s1 + $0x9f0] sm:$0xff]
    %v348 = vld [vmem:[%s1 + $0x9f8] sm:$0xff]
    %v349 = vld [vmem:[%s1 + $0xa00] sm:$0xff]
    %v350 = vld [vmem:[%s1 + $0xa08] sm:$0xff]
    %v351 = vld [vmem:[%s1 + $0xa10] sm:$0xff]
    %v352 = vld [vmem:[%s1 + $0xa18] sm:$0xff]
    %v353 = vld [vmem:[%s1 + $0xa20] sm:$0xff]
    %v354 = vld [vmem:[%s1 + $0xa28] sm:$0xff]
    %v355 = vld [vmem:[%s1 + $0xa30] sm:$0xff]
    %v356 = vld [vmem:[%s1 + $0xa38] sm:$0xff]
    %v357 = vld [vmem:[%s1 + $0xa40] sm:$0xff]
    %v358 = vld [vmem:[%s1 + $0xa48] sm:$0xff]
    %v359 = vld [vmem:[%s1 + $0xa50] sm:$0xff]
    %v360 = vld [vmem:[%s1 + $0xa58] sm:$0xff]
    %v361 = vld [vmem:[%s1 + $0xa60] sm:$0xff]
    %v362 = vld [vmem:[%s1 + $0xa68] sm:$0xff]
    %v363 = vld [vmem:[%s1 + $0xa70] sm:$0xff]
    %v364 = vld [vmem:[%s1 + $0xa78] sm:$0xff]
    %v365 = vld [vmem:[%s1 + $0xa80] sm:$0xff]
    %v366 = vld [vmem:[%s1 + $0xa88] sm:$0xff]
    %v367 = vld [vmem:[%s1 + $0xa90] sm:$0xff]
    %v368 = vld [vmem:[%s1 + $0xa98] sm:$0xff]
    %v369 = vld [vmem:[%s1 + $0xaa0] sm:$0xff]
    %v370 = vld [vmem:[%s1 + $0xaa8] sm:$0xff]
    %v371 = vld [vmem:[%s1 + $0xab0] sm:$0xff]
    %v372 = vld [vmem:[%s1 + $0xab8] sm:$0xff]
    %v373 = vld [vmem:[%s1 + $0xac0] sm:$0xff]
    %v374 = vld [vmem:[%s1 + $0xac8] sm:$0xff]
    %v375 = vld [vmem:[%s1 + $0xad0] sm:$0xff]
    %v376 = vld [vmem:[%s1 + $0xad8] sm:$0xff]
    %v377 = vld [vmem:[%s1 + $0xae0] sm:$0xff]
    %v378 = vld [vmem:[%s1 + $0xae8] sm:$0xff]
    %v379 = vld [vmem:[%s1 + $0xaf0] sm:$0xff]
    %v380 = vld [vmem:[%s1 + $0xaf8] sm:$0xff]
    %v381 = vld [vmem:[%s1 + $0xb00] sm:$0xff]
    %v382 = vld [vmem:[%s1 + $0xb08] sm:$0xff]
    %v383 = vld [vmem:[%s1 + $0xb10] sm:$0xff]
    %v384 = vld [vmem:[%s1 + $0xb18] sm:$0xff]
    %v385 = vld [vmem:[%s1 + $0xb20] sm:$0xff]
    %v386 = vld [vmem:[%s1 + $0xb28] sm:$0xff]
    %v387 = vld [vmem:[%s1 + $0xb30] sm:$0xff]
    %v388 = vld [vmem:[%s1 + $0xb38] sm:$0xff]
    %v389 = vld [vmem:[%s1 + $0xb40] sm:$0xff]
    %v390 = vld [vmem:[%s1 + $0xb48] sm:$0xff]
    %v391 = vld [vmem:[%s1 + $0xb50] sm:$0xff]
    %v392 = vld [vmem:[%s1 + $0xb58] sm:$0xff]
    %v393 = vld [vmem:[%s1 + $0xb60] sm:$0xff]
    %v394 = vld [vmem:[%s1 + $0xb68] sm:$0xff]
    %v395 = vld [vmem:[%s1 + $0xb70] sm:$0xff]
    %v396 = vld [vmem:[%s1 + $0xb78] sm:$0xff]
    %v397 = vld [vmem:[%s1 + $0xb80] sm:$0xff]
    %v398 = vld [vmem:[%s1 + $0xb88] sm:$0xff]
    %v399 = vld [vmem:[%s1 + $0xb90] sm:$0xff]
    %v400 = vld [vmem:[%s1 + $0xb98] sm:$0xff]
    %v401 = vld [vmem:[%s1 + $0xba0] sm:$0xff]
    %v402 = vld [vmem:[%s1 + $0xba8] sm:$0xff]
    %v403 = vld [vmem:[%s1 + $0xbb0] sm:$0xff]
    %v404 = vld [vmem:[%s1 + $0xbb8] sm:$0xff]
    %v405 = vld [vmem:[%s1 + $0xbc0] sm:$0xff]
    %v406 = vld [vmem:[%s1 + $0xbc8] sm:$0xff]
    %v407 = vld [vmem:[%s1 + $0xbd0] sm:$0xff]
    %v408 = vld [vmem:[%s1 + $0xbd8] sm:$0xff]
    %v409 = vld [vmem:[%s1 + $0xbe0] sm:$0xff]
    %v410 = vld [vmem:[%s1 + $0xbe8] sm:$0xff]
    %v411 = vld [vmem:[%s1 + $0xbf0] sm:$0xff]
    %v412 = vld [vmem:[%s1 + $0xbf8] sm:$0xff]
    %v413 = vld [vmem:[%s1 + $0xc00] sm:$0xff]
    %v414 = vld [vmem:[%s1 + $0xc08] sm:$0xff]
    %v415 = vld [vmem:[%s1 + $0xc10] sm:$0xff]
    %v416 = vld [vmem:[%s1 + $0xc18] sm:$0xff]
    %v417 = vld [vmem:[%s1 + $0xc20] sm:$0xff]
    %v418 = vld [vmem:[%s1 + $0xc28] sm:$0xff]
    %v419 = vld [vmem:[%s1 + $0xc30] sm:$0xff]
    %v420 = vld [vmem:[%s1 + $0xc38] sm:$0xff]
    %v421 = vld [vmem:[%s1 + $0xc40] sm:$0xff]
    %v422 = vld [vmem:[%s1 + $0xc48] sm:$0xff]
    %v423 = vld [vmem:[%s1 + $0xc50] sm:$0xff]
    %v424 = vld [vmem:[%s1 + $0xc58] sm:$0xff]
    %v425 = vld [vmem:[%s1 + $0xc60] sm:$0xff]
    %v426 = vld [vmem:[%s1 + $0xc68] sm:$0xff]
    %v427 = vld [vmem:[%s1 + $0xc70] sm:$0xff]
    %v428 = vld [vmem:[%s1 + $0xc78] sm:$0xff]
    %v429 = vld [vmem:[%s1 + $0xc80] sm:$0xff]
    %v430 = vld [vmem:[%s1 + $0xc88] sm:$0xff]
    %v431 = vld [vmem:[%s1 + $0xc90] sm:$0xff]
    %v432 = vld [vmem:[%s1 + $0xc98] sm:$0xff]
    %v433 = vld [vmem:[%s1 + $0xca0] sm:$0xff]
    %v434 = vld [vmem:[%s1 + $0xca8] sm:$0xff]
    %v435 = vld [vmem:[%s1 + $0xcb0] sm:$0xff]
    %v436 = vld [vmem:[%s1 + $0xcb8] sm:$0xff]
    %v437 = vld [vmem:[%s1 + $0xcc0] sm:$0xff]
    %v438 = vld [vmem:[%s1 + $0xcc8] sm:$0xff]
    %v439 = vld [vmem:[%s1 + $0xcd0] sm:$0xff]
    %v440 = vld [vmem:[%s1 + $0xcd8] sm:$0xff]
    %v441 = vld [vmem:[%s1 + $0xce0] sm:$0xff]
    %v442 = vld [vmem:[%s1 + $0xce8] sm:$0xff]
    %v443 = vld [vmem:[%s1 + $0xcf0] sm:$0xff]
    %v444 = vld [vmem:[%s1 + $0xcf8] sm:$0xff]
    %v445 = vld [vmem:[%s1 + $0xd00] sm:$0xff]
    %v446 = vld [vmem:[%s1 + $0xd08] sm:$0xff]
    %v447 = vld [vmem:[%s1 + $0xd10] sm:$0xff]
    %v448 = vld [vmem:[%s1 + $0xd18] sm:$0xff]
    %v449 = vld [vmem:[%s1 + $0xd20] sm:$0xff]
    %v450 = vld [vmem:[%s1 + $0xd28] sm:$0xff]
    %v451 = vld [vmem:[%s1 + $0xd30] sm:$0xff]
    %v452 = vld [vmem:[%s1 + $0xd38] sm:$0xff]
    %v453 = vld [vmem:[%s1 + $0xd40] sm:$0xff]
    %v454 = vld [vmem:[%s1 + $0xd48] sm:$0xff]
    %v455 = vld [vmem:[%s1 + $0xd50] sm:$0xff]
    %v456 = vld [vmem:[%s1 + $0xd58] sm:$0xff]
    %v457 = vld [vmem:[%s1 + $0xd60] sm:$0xff]
    %v458 = vld [vmem:[%s1 + $0xd68] sm:$0xff]
    %v459 = vld [vmem:[%s1 + $0xd70] sm:$0xff]
    %v460 = vld [vmem:[%s1 + $0xd78] sm:$0xff]
    %v461 = vld [vmem:[%s1 + $0xd80] sm:$0xff]
    %v462 = vld [vmem:[%s1 + $0xd88] sm:$0xff]
    %v463 = vld [vmem:[%s1 + $0xd90] sm:$0xff]
    %v464 = vld [vmem:[%s1 + $0xd98] sm:$0xff]
    %v465 = vld [vmem:[%s1 + $0xda0] sm:$0xff]
    %v466 = vld [vmem:[%s1 + $0xda8] sm:$0xff]
    %v467 = vld [vmem:[%s1 + $0xdb0] sm:$0xff]
    %v468 = vld [vmem:[%s1 + $0xdb8] sm:$0xff]
    %v469 = vld [vmem:[%s1 + $0xdc0] sm:$0xff]
    %v470 = vld [vmem:[%s1 + $0xdc8] sm:$0xff]
    %v471 = vld [vmem:[%s1 + $0xdd0] sm:$0xff]
    %v472 = vld [vmem:[%s1 + $0xdd8] sm:$0xff]
    %v473 = vld [vmem:[%s1 + $0xde0] sm:$0xff]
    %v474 = vld [vmem:[%s1 + $0xde8] sm:$0xff]
    %v475 = vld [vmem:[%s1 + $0xdf0] sm:$0xff]
    %v476 = vld [vmem:[%s1 + $0xdf8] sm:$0xff]
    %v477 = vld [vmem:[%s1 + $0xe00] sm:$0xff]
    %v478 = vld [vmem:[%s1 + $0xe08] sm:$0xff]
    %v479 = vld [vmem:[%s1 + $0xe10] sm:$0xff]
    %v480 = vld [vmem:[%s1 + $0xe18] sm:$0xff]
    %v481 = vld [vmem:[%s1 + $0xe20] sm:$0xff]
    %v482 = vld [vmem:[%s1 + $0xe28] sm:$0xff]
    %v483 = vld [vmem:[%s1 + $0xe30] sm:$0xff]
    %v484 = vld [vmem:[%s1 + $0xe38] sm:$0xff]
    %v485 = vld [vmem:[%s1 + $0xe40] sm:$0xff]
    %v486 = vld [vmem:[%s1 + $0xe48] sm:$0xff]
    %v487 = vld [vmem:[%s1 + $0xe50] sm:$0xff]
    %v488 = vld [vmem:[%s1 + $0xe58] sm:$0xff]
    %v489 = vld [vmem:[%s1 + $0xe60] sm:$0xff]
    %v490 = vld [vmem:[%s1 + $0xe68] sm:$0xff]
    %v491 = vld [vmem:[%s1 + $0xe70] sm:$0xff]
    %v492 = vld [vmem:[%s1 + $0xe78] sm:$0xff]
    %v493 = vld [vmem:[%s1 + $0xe80] sm:$0xff]
    %v494 = vld [vmem:[%s1 + $0xe88] sm:$0xff]
    %v495 = vld [vmem:[%s1 + $0xe90] sm:$0xff]
    %v496 = vld [vmem:[%s1 + $0xe98] sm:$0xff]
    %v497 = vld [vmem:[%s1 + $0xea0] sm:$0xff]
    %v498 = vld [vmem:[%s1 + $0xea8] sm:$0xff]
    %v499 = vld [vmem:[%s1 + $0xeb0] sm:$0xff]
    %v500 = vld [vmem:[%s1 + $0xeb8] sm:$0xff]
    %v501 = vld [vmem:[%s1 + $0xec0] sm:$0xff]
    %v502 = vld [vmem:[%s1 + $0xec8] sm:$0xff]
    %v503 = vld [vmem:[%s1 + $0xed0] sm:$0xff]
    %v504 = vld [vmem:[%s1 + $0xed8] sm:$0xff]
    %v505 = vld [vmem:[%s1 + $0xee0] sm:$0xff]
    %v506 = vld [vmem:[%s1 + $0xee8] sm:$0xff]
    %v507 = vld [vmem:[%s1 + $0xef0] sm:$0xff]
    %v508 = vld [vmem:[%s1 + $0xef8] sm:$0xff]
    %v509 = vld [vmem:[%s1 + $0xf00] sm:$0xff]
    %v510 = vld [vmem:[%s1 + $0xf08] sm:$0xff]
    %v511 = vld [vmem:[%s1 + $0xf10] sm:$0xff]
    %v512 = vld [vmem:[%s1 + $0xf18] sm:$0xff]
    %v513 = vld [vmem:[%s1 + $0xf20] sm:$0xff]
    %v514 = vld [vmem:[%s1 + $0xf28] sm:$0xff]
    %v515 = vld [vmem:[%s1 + $0xf30] sm:$0xff]
    %v516 = vld [vmem:[%s1 + $0xf38] sm:$0xff]
    %v517 = vld [vmem:[%s1 + $0xf40] sm:$0xff]
    %v518 = vld [vmem:[%s1 + $0xf48] sm:$0xff]
    %v519 = vld [vmem:[%s2] sm:$0x1]
    %v521 = vlaneseq
    %v522 = vshrl.u32 %v521, 7
    %v523 = vsub.s32 0, %v522
    %v524 = vrot.slane %v519, %v523
    %v534 = vcombine.high %v21, %v21
    %v536 = vunpack.c.l.s4 1983009808
    %v537 = vunpack.c.0.s8 %v536
    %v538 = vlaneseq
    %v539 = vshrl.u32 %v538, 7
    %v540 = vsub.s32 %v537, %v539
    %v541 = vrot.slane %v21, %v540
    %v543 = vunpack.c.l.s4 1983009808
    %v544 = vunpack.c.0.s8 %v543
    %v545 = vlaneseq
    %v546 = vshrl.u32 %v545, 7
    %v547 = vsub.s32 %v544, %v546
    %v548 = vrot.slane %v534, %v547
    %v549 = vcombine.high %v541, %v541
    %v550 = vcombine.high %v548, %v548
    %v551 = vcombine.high %v22, %v22
    %v553 = vunpack.c.l.s4 1983009808
    %v554 = vunpack.c.0.s8 %v553
    %v555 = vlaneseq
    %v556 = vshrl.u32 %v555, 7
    %v557 = vsub.s32 %v554, %v556
    %v558 = vrot.slane %v22, %v557
    %v560 = vunpack.c.l.s4 1983009808
    %v561 = vunpack.c.0.s8 %v560
    %v562 = vlaneseq
    %v563 = vshrl.u32 %v562, 7
    %v564 = vsub.s32 %v561, %v563
    %v565 = vrot.slane %v551, %v564
    %v566 = vcombine.high %v558, %v558
    %v567 = vcombine.high %v565, %v565
    %v568 = vcombine.high %v23, %v23
    %v570 = vunpack.c.l.s4 1983009808
    %v571 = vunpack.c.0.s8 %v570
    %v572 = vlaneseq
    %v573 = vshrl.u32 %v572, 7
    %v574 = vsub.s32 %v571, %v573
    %v575 = vrot.slane %v23, %v574
    %v577 = vunpack.c.l.s4 1983009808
    %v578 = vunpack.c.0.s8 %v577
    %v579 = vlaneseq
    %v580 = vshrl.u32 %v579, 7
    %v581 = vsub.s32 %v578, %v580
    %v582 = vrot.slane %v568, %v581
    %v583 = vcombine.high %v575, %v575
    %v584 = vcombine.high %v582, %v582
    %v585 = vcombine.high %v24, %v24
    %v587 = vunpack.c.l.s4 1983009808
    %v588 = vunpack.c.0.s8 %v587
    %v589 = vlaneseq
    %v590 = vshrl.u32 %v589, 7
    %v591 = vsub.s32 %v588, %v590
    %v592 = vrot.slane %v24, %v591
    %v594 = vunpack.c.l.s4 1983009808
    %v595 = vunpack.c.0.s8 %v594
    %v596 = vlaneseq
    %v597 = vshrl.u32 %v596, 7
    %v598 = vsub.s32 %v595, %v597
    %v599 = vrot.slane %v585, %v598
    %v600 = vcombine.high %v592, %v592
    %v601 = vcombine.high %v599, %v599
    %v602 = vcombine.high %v25, %v25
    %v604 = vunpack.c.l.s4 1983009808
    %v605 = vunpack.c.0.s8 %v604
    %v606 = vlaneseq
    %v607 = vshrl.u32 %v606, 7
    %v608 = vsub.s32 %v605, %v607
    %v609 = vrot.slane %v25, %v608
    %v611 = vunpack.c.l.s4 1983009808
    %v612 = vunpack.c.0.s8 %v611
    %v613 = vlaneseq
    %v614 = vshrl.u32 %v613, 7
    %v615 = vsub.s32 %v612, %v614
    %v616 = vrot.slane %v602, %v615
    %v617 = vcombine.high %v609, %v609
    %v618 = vcombine.high %v616, %v616
    %v619 = vcombine.high %v26, %v26
    %v621 = vunpack.c.l.s4 1983009808
    %v622 = vunpack.c.0.s8 %v621
    %v623 = vlaneseq
    %v624 = vshrl.u32 %v623, 7
    %v625 = vsub.s32 %v622, %v624
    %v626 = vrot.slane %v26, %v625
    %v628 = vunpack.c.l.s4 1983009808
    %v629 = vunpack.c.0.s8 %v628
    %v630 = vlaneseq
    %v631 = vshrl.u32 %v630, 7
    %v632 = vsub.s32 %v629, %v631
    %v633 = vrot.slane %v619, %v632
    %v634 = vcombine.high %v626, %v626
    %v635 = vcombine.high %v633, %v633
    %v636 = vcombine.high %v27, %v27
    %v638 = vunpack.c.l.s4 1983009808
    %v639 = vunpack.c.0.s8 %v638
    %v640 = vlaneseq
    %v641 = vshrl.u32 %v640, 7
    %v642 = vsub.s32 %v639, %v641
    %v643 = vrot.slane %v27, %v642
    %v645 = vunpack.c.l.s4 1983009808
    %v646 = vunpack.c.0.s8 %v645
    %v647 = vlaneseq
    %v648 = vshrl.u32 %v647, 7
    %v649 = vsub.s32 %v646, %v648
    %v650 = vrot.slane %v636, %v649
    %v651 = vcombine.high %v643, %v643
    %v652 = vcombine.high %v650, %v650
    %v653 = vcombine.high %v28, %v28
    %v655 = vunpack.c.l.s4 1983009808
    %v656 = vunpack.c.0.s8 %v655
    %v657 = vlaneseq
    %v658 = vshrl.u32 %v657, 7
    %v659 = vsub.s32 %v656, %v658
    %v660 = vrot.slane %v28, %v659
    %v662 = vunpack.c.l.s4 1983009808
    %v663 = vunpack.c.0.s8 %v662
    %v664 = vlaneseq
    %v665 = vshrl.u32 %v664, 7
    %v666 = vsub.s32 %v663, %v665
    %v667 = vrot.slane %v653, %v666
    %v668 = vcombine.high %v660, %v660
    %vm699 = vcmask 654336
    %v700 = vsel %vm699, %v667, 0
    %702 = vmatprep.subr.mxu0 0.0
    %703 = vmatpush1.msra.mxu0 %v44
    %704 = vmatprep.subr.mxu0 0.0
    %705 = vmatpush1.msra.mxu0 %v43
    %706 = vmatprep.subr.mxu0 0.0
    %707 = vmatpush1.msra.mxu0 %v42
    %708 = vmatprep.subr.mxu0 0.0
    %709 = vmatpush1.msra.mxu0 %v41
    %710 = vmatprep.subr.mxu0 0.0
    %711 = vmatpush1.msra.mxu0 %v40
    %712 = vmatprep.subr.mxu0 0.0
    %713 = vmatpush1.msra.mxu0 %v39
    %714 = vmatprep.subr.mxu0 0.0
    %715 = vmatpush1.msra.mxu0 %v38
    %716 = vmatprep.subr.mxu0 0.0
    %717 = vmatpush1.msra.mxu0 %v37
    %718 = vmatprep.subr.mxu0 0.0
    %719 = vmatpush1.msra.mxu0 %v36
    %720 = vmatprep.subr.mxu0 0.0
    %721 = vmatpush1.msra.mxu0 %v35
    %722 = vmatprep.subr.mxu0 0.0
    %723 = vmatpush1.msra.mxu0 %v34
    %724 = vmatprep.subr.mxu0 0.0
    %725 = vmatpush1.msra.mxu0 %v33
    %726 = vmatprep.subr.mxu0 0.0
    %727 = vmatpush1.msra.mxu0 %v32
    %728 = vmatprep.subr.mxu0 0.0
    %729 = vmatpush1.msra.mxu0 %v31
    %730 = vmatprep.subr.mxu0 0.0
    %731 = vmatpush1.msra.mxu0 %v30
    %732 = vmatprep.subr.mxu0 0.0
    %733 = vmatpush1.msra.mxu0 %v29
    %734 = vmatprep.subr.mxu0 0.0
    %735 = vmatpush2.msra.mxu0 %v60
    %736 = vmatprep.subr.mxu0 0.0
    %737 = vmatpush2.msra.mxu0 %v59
    %738 = vmatprep.subr.mxu0 0.0
    %739 = vmatpush2.msra.mxu0 %v58
    %740 = vmatprep.subr.mxu0 0.0
    %741 = vmatpush2.msra.mxu0 %v57
    %742 = vmatprep.subr.mxu0 0.0
    %743 = vmatpush2.msra.mxu0 %v56
    %744 = vmatprep.subr.mxu0 0.0
    %745 = vmatpush2.msra.mxu0 %v55
    %746 = vmatprep.subr.mxu0 0.0
    %747 = vmatpush2.msra.mxu0 %v54
    %748 = vmatprep.subr.mxu0 0.0
    %749 = vmatpush2.msra.mxu0 %v53
    %750 = vmatprep.subr.mxu0 0.0
    %751 = vmatpush2.msra.mxu0 %v52
    %752 = vmatprep.subr.mxu0 0.0
    %753 = vmatpush2.msra.mxu0 %v51
    %754 = vmatprep.subr.mxu0 0.0
    %755 = vmatpush2.msra.mxu0 %v50
    %756 = vmatprep.subr.mxu0 0.0
    %757 = vmatpush2.msra.mxu0 %v49
    %758 = vmatprep.subr.mxu0 0.0
    %759 = vmatpush2.msra.mxu0 %v48
    %760 = vmatprep.subr.mxu0 0.0
    %761 = vmatpush2.msra.mxu0 %v47
    %762 = vmatprep.subr.mxu0 0.0
    %763 = vmatpush2.msra.mxu0 %v46
    %764 = vmatprep.subr.mxu0 0.0
    %765 = vmatpush2.msra.mxu0 %v45
    %766 = vmatprep.mubr.f32.mxu0 %v549
    %767 = vmatmul.mubr.f32.gmra.mxu0 %v541
    %v768 = vpop.f32.mrf.mxu0
    %v769 = vadd.f32 %v524, %v768
    %v770 = vpop.f32.mrf.mxu0
    %771 = vdwg.mxu0
    %772 = vmatprep.subr.mxu0 0.0
    %773 = vmatpush1.msra.mxu0 %v76
    %774 = vmatprep.subr.mxu0 0.0
    %775 = vmatpush1.msra.mxu0 %v75
    %776 = vmatprep.subr.mxu0 0.0
    %777 = vmatpush1.msra.mxu0 %v74
    %778 = vmatprep.subr.mxu0 0.0
    %779 = vmatpush1.msra.mxu0 %v73
    %780 = vmatprep.subr.mxu0 0.0
    %781 = vmatpush1.msra.mxu0 %v72
    %782 = vmatprep.subr.mxu0 0.0
    %783 = vmatpush1.msra.mxu0 %v71
    %784 = vmatprep.subr.mxu0 0.0
    %785 = vmatpush1.msra.mxu0 %v70
    %786 = vmatprep.subr.mxu0 0.0
    %787 = vmatpush1.msra.mxu0 %v69
    %788 = vmatprep.subr.mxu0 0.0
    %789 = vmatpush1.msra.mxu0 %v68
    %790 = vmatprep.subr.mxu0 0.0
    %791 = vmatpush1.msra.mxu0 %v67
    %792 = vmatprep.subr.mxu0 0.0
    %793 = vmatpush1.msra.mxu0 %v66
    %794 = vmatprep.subr.mxu0 0.0
    %795 = vmatpush1.msra.mxu0 %v65
    %796 = vmatprep.subr.mxu0 0.0
    %797 = vmatpush1.msra.mxu0 %v64
    %798 = vmatprep.subr.mxu0 0.0
    %799 = vmatpush1.msra.mxu0 %v63
    %800 = vmatprep.subr.mxu0 0.0
    %801 = vmatpush1.msra.mxu0 %v62
    %802 = vmatprep.subr.mxu0 0.0
    %803 = vmatpush1.msra.mxu0 %v61
    %804 = vmatprep.subr.mxu0 0.0
    %805 = vmatpush2.msra.mxu0 %v92
    %806 = vmatprep.subr.mxu0 0.0
    %807 = vmatpush2.msra.mxu0 %v91
    %808 = vmatprep.subr.mxu0 0.0
    %809 = vmatpush2.msra.mxu0 %v90
    %810 = vmatprep.subr.mxu0 0.0
    %811 = vmatpush2.msra.mxu0 %v89
    %812 = vmatprep.subr.mxu0 0.0
    %813 = vmatpush2.msra.mxu0 %v88
    %814 = vmatprep.subr.mxu0 0.0
    %815 = vmatpush2.msra.mxu0 %v87
    %816 = vmatprep.subr.mxu0 0.0
    %817 = vmatpush2.msra.mxu0 %v86
    %818 = vmatprep.subr.mxu0 0.0
    %819 = vmatpush2.msra.mxu0 %v85
    %820 = vmatprep.subr.mxu0 0.0
    %821 = vmatpush2.msra.mxu0 %v84
    %822 = vmatprep.subr.mxu0 0.0
    %823 = vmatpush2.msra.mxu0 %v83
    %824 = vmatprep.subr.mxu0 0.0
    %825 = vmatpush2.msra.mxu0 %v82
    %826 = vmatprep.subr.mxu0 0.0
    %827 = vmatpush2.msra.mxu0 %v81
    %828 = vmatprep.subr.mxu0 0.0
    %829 = vmatpush2.msra.mxu0 %v80
    %830 = vmatprep.subr.mxu0 0.0
    %831 = vmatpush2.msra.mxu0 %v79
    %832 = vmatprep.subr.mxu0 0.0
    %833 = vmatpush2.msra.mxu0 %v78
    %834 = vmatprep.subr.mxu0 0.0
    %835 = vmatpush2.msra.mxu0 %v77
    %836 = vmatprep.mubr.f32.mxu0 %v550
    %837 = vmatmul.mubr.f32.gmra.mxu0 %v548
    %v838 = vpop.f32.mrf.mxu0
    %v839 = vadd.f32 %v769, %v838
    %v840 = vpop.f32.mrf.mxu0
    %841 = vdwg.mxu0
    %842 = vmatprep.subr.mxu0 0.0
    %843 = vmatpush1.msra.mxu0 %v108
    %844 = vmatprep.subr.mxu0 0.0
    %845 = vmatpush1.msra.mxu0 %v107
    %846 = vmatprep.subr.mxu0 0.0
    %847 = vmatpush1.msra.mxu0 %v106
    %848 = vmatprep.subr.mxu0 0.0
    %849 = vmatpush1.msra.mxu0 %v105
    %850 = vmatprep.subr.mxu0 0.0
    %851 = vmatpush1.msra.mxu0 %v104
    %852 = vmatprep.subr.mxu0 0.0
    %853 = vmatpush1.msra.mxu0 %v103
    %854 = vmatprep.subr.mxu0 0.0
    %855 = vmatpush1.msra.mxu0 %v102
    %856 = vmatprep.subr.mxu0 0.0
    %857 = vmatpush1.msra.mxu0 %v101
    %858 = vmatprep.subr.mxu0 0.0
    %859 = vmatpush1.msra.mxu0 %v100
    %860 = vmatprep.subr.mxu0 0.0
    %861 = vmatpush1.msra.mxu0 %v99
    %862 = vmatprep.subr.mxu0 0.0
    %863 = vmatpush1.msra.mxu0 %v98
    %864 = vmatprep.subr.mxu0 0.0
    %865 = vmatpush1.msra.mxu0 %v97
    %866 = vmatprep.subr.mxu0 0.0
    %867 = vmatpush1.msra.mxu0 %v96
    %868 = vmatprep.subr.mxu0 0.0
    %869 = vmatpush1.msra.mxu0 %v95
    %870 = vmatprep.subr.mxu0 0.0
    %871 = vmatpush1.msra.mxu0 %v94
    %872 = vmatprep.subr.mxu0 0.0
    %873 = vmatpush1.msra.mxu0 %v93
    %874 = vmatprep.subr.mxu0 0.0
    %875 = vmatpush2.msra.mxu0 %v124
    %876 = vmatprep.subr.mxu0 0.0
    %877 = vmatpush2.msra.mxu0 %v123
    %878 = vmatprep.subr.mxu0 0.0
    %879 = vmatpush2.msra.mxu0 %v122
    %880 = vmatprep.subr.mxu0 0.0
    %881 = vmatpush2.msra.mxu0 %v121
    %882 = vmatprep.subr.mxu0 0.0
    %883 = vmatpush2.msra.mxu0 %v120
    %884 = vmatprep.subr.mxu0 0.0
    %885 = vmatpush2.msra.mxu0 %v119
    %886 = vmatprep.subr.mxu0 0.0
    %887 = vmatpush2.msra.mxu0 %v118
    %888 = vmatprep.subr.mxu0 0.0
    %889 = vmatpush2.msra.mxu0 %v117
    %890 = vmatprep.subr.mxu0 0.0
    %891 = vmatpush2.msra.mxu0 %v116
    %892 = vmatprep.subr.mxu0 0.0
    %893 = vmatpush2.msra.mxu0 %v115
    %894 = vmatprep.subr.mxu0 0.0
    %895 = vmatpush2.msra.mxu0 %v114
    %896 = vmatprep.subr.mxu0 0.0
    %897 = vmatpush2.msra.mxu0 %v113
    %898 = vmatprep.subr.mxu0 0.0
    %899 = vmatpush2.msra.mxu0 %v112
    %900 = vmatprep.subr.mxu0 0.0
    %901 = vmatpush2.msra.mxu0 %v111
    %902 = vmatprep.subr.mxu0 0.0
    %903 = vmatpush2.msra.mxu0 %v110
    %904 = vmatprep.subr.mxu0 0.0
    %905 = vmatpush2.msra.mxu0 %v109
    %906 = vmatprep.mubr.f32.mxu0 %v566
    %907 = vmatmul.mubr.f32.gmra.mxu0 %v558
    %v908 = vpop.f32.mrf.mxu0
    %v909 = vadd.f32 %v839, %v908
    %v910 = vpop.f32.mrf.mxu0
    %911 = vdwg.mxu0
    %912 = vmatprep.subr.mxu0 0.0
    %913 = vmatpush1.msra.mxu0 %v140
    %914 = vmatprep.subr.mxu0 0.0
    %915 = vmatpush1.msra.mxu0 %v139
    %916 = vmatprep.subr.mxu0 0.0
    %917 = vmatpush1.msra.mxu0 %v138
    %918 = vmatprep.subr.mxu0 0.0
    %919 = vmatpush1.msra.mxu0 %v137
    %920 = vmatprep.subr.mxu0 0.0
    %921 = vmatpush1.msra.mxu0 %v136
    %922 = vmatprep.subr.mxu0 0.0
    %923 = vmatpush1.msra.mxu0 %v135
    %924 = vmatprep.subr.mxu0 0.0
    %925 = vmatpush1.msra.mxu0 %v134
    %926 = vmatprep.subr.mxu0 0.0
    %927 = vmatpush1.msra.mxu0 %v133
    %928 = vmatprep.subr.mxu0 0.0
    %929 = vmatpush1.msra.mxu0 %v132
    %930 = vmatprep.subr.mxu0 0.0
    %931 = vmatpush1.msra.mxu0 %v131
    %932 = vmatprep.subr.mxu0 0.0
    %933 = vmatpush1.msra.mxu0 %v130
    %934 = vmatprep.subr.mxu0 0.0
    %935 = vmatpush1.msra.mxu0 %v129
    %936 = vmatprep.subr.mxu0 0.0
    %937 = vmatpush1.msra.mxu0 %v128
    %938 = vmatprep.subr.mxu0 0.0
    %939 = vmatpush1.msra.mxu0 %v127
    %940 = vmatprep.subr.mxu0 0.0
    %941 = vmatpush1.msra.mxu0 %v126
    %942 = vmatprep.subr.mxu0 0.0
    %943 = vmatpush1.msra.mxu0 %v125
    %944 = vmatprep.subr.mxu0 0.0
    %945 = vmatpush2.msra.mxu0 %v156
    %946 = vmatprep.subr.mxu0 0.0
    %947 = vmatpush2.msra.mxu0 %v155
    %948 = vmatprep.subr.mxu0 0.0
    %949 = vmatpush2.msra.mxu0 %v154
    %950 = vmatprep.subr.mxu0 0.0
    %951 = vmatpush2.msra.mxu0 %v153
    %952 = vmatprep.subr.mxu0 0.0
    %953 = vmatpush2.msra.mxu0 %v152
    %954 = vmatprep.subr.mxu0 0.0
    %955 = vmatpush2.msra.mxu0 %v151
    %956 = vmatprep.subr.mxu0 0.0
    %957 = vmatpush2.msra.mxu0 %v150
    %958 = vmatprep.subr.mxu0 0.0
    %959 = vmatpush2.msra.mxu0 %v149
    %960 = vmatprep.subr.mxu0 0.0
    %961 = vmatpush2.msra.mxu0 %v148
    %962 = vmatprep.subr.mxu0 0.0
    %963 = vmatpush2.msra.mxu0 %v147
    %964 = vmatprep.subr.mxu0 0.0
    %965 = vmatpush2.msra.mxu0 %v146
    %966 = vmatprep.subr.mxu0 0.0
    %967 = vmatpush2.msra.mxu0 %v145
    %968 = vmatprep.subr.mxu0 0.0
    %969 = vmatpush2.msra.mxu0 %v144
    %970 = vmatprep.subr.mxu0 0.0
    %971 = vmatpush2.msra.mxu0 %v143
    %972 = vmatprep.subr.mxu0 0.0
    %973 = vmatpush2.msra.mxu0 %v142
    %974 = vmatprep.subr.mxu0 0.0
    %975 = vmatpush2.msra.mxu0 %v141
    %976 = vmatprep.mubr.f32.mxu0 %v567
    %977 = vmatmul.mubr.f32.gmra.mxu0 %v565
    %v978 = vpop.f32.mrf.mxu0
    %v979 = vadd.f32 %v909, %v978
    %v980 = vpop.f32.mrf.mxu0
    %981 = vdwg.mxu0
    %982 = vmatprep.subr.mxu0 0.0
    %983 = vmatpush1.msra.mxu0 %v172
    %984 = vmatprep.subr.mxu0 0.0
    %985 = vmatpush1.msra.mxu0 %v171
    %986 = vmatprep.subr.mxu0 0.0
    %987 = vmatpush1.msra.mxu0 %v170
    %988 = vmatprep.subr.mxu0 0.0
    %989 = vmatpush1.msra.mxu0 %v169
    %990 = vmatprep.subr.mxu0 0.0
    %991 = vmatpush1.msra.mxu0 %v168
    %992 = vmatprep.subr.mxu0 0.0
    %993 = vmatpush1.msra.mxu0 %v167
    %994 = vmatprep.subr.mxu0 0.0
    %995 = vmatpush1.msra.mxu0 %v166
    %996 = vmatprep.subr.mxu0 0.0
    %997 = vmatpush1.msra.mxu0 %v165
    %998 = vmatprep.subr.mxu0 0.0
    %999 = vmatpush1.msra.mxu0 %v164
    %1000 = vmatprep.subr.mxu0 0.0
    %1001 = vmatpush1.msra.mxu0 %v163
    %1002 = vmatprep.subr.mxu0 0.0
    %1003 = vmatpush1.msra.mxu0 %v162
    %1004 = vmatprep.subr.mxu0 0.0
    %1005 = vmatpush1.msra.mxu0 %v161
    %1006 = vmatprep.subr.mxu0 0.0
    %1007 = vmatpush1.msra.mxu0 %v160
    %1008 = vmatprep.subr.mxu0 0.0
    %1009 = vmatpush1.msra.mxu0 %v159
    %1010 = vmatprep.subr.mxu0 0.0
    %1011 = vmatpush1.msra.mxu0 %v158
    %1012 = vmatprep.subr.mxu0 0.0
    %1013 = vmatpush1.msra.mxu0 %v157
    %1014 = vmatprep.subr.mxu0 0.0
    %1015 = vmatpush2.msra.mxu0 %v188
    %1016 = vmatprep.subr.mxu0 0.0
    %1017 = vmatpush2.msra.mxu0 %v187
    %1018 = vmatprep.subr.mxu0 0.0
    %1019 = vmatpush2.msra.mxu0 %v186
    %1020 = vmatprep.subr.mxu0 0.0
    %1021 = vmatpush2.msra.mxu0 %v185
    %1022 = vmatprep.subr.mxu0 0.0
    %1023 = vmatpush2.msra.mxu0 %v184
    %1024 = vmatprep.subr.mxu0 0.0
    %1025 = vmatpush2.msra.mxu0 %v183
    %1026 = vmatprep.subr.mxu0 0.0
    %1027 = vmatpush2.msra.mxu0 %v182
    %1028 = vmatprep.subr.mxu0 0.0
    %1029 = vmatpush2.msra.mxu0 %v181
    %1030 = vmatprep.subr.mxu0 0.0
    %1031 = vmatpush2.msra.mxu0 %v180
    %1032 = vmatprep.subr.mxu0 0.0
    %1033 = vmatpush2.msra.mxu0 %v179
    %1034 = vmatprep.subr.mxu0 0.0
    %1035 = vmatpush2.msra.mxu0 %v178
    %1036 = vmatprep.subr.mxu0 0.0
    %1037 = vmatpush2.msra.mxu0 %v177
    %1038 = vmatprep.subr.mxu0 0.0
    %1039 = vmatpush2.msra.mxu0 %v176
    %1040 = vmatprep.subr.mxu0 0.0
    %1041 = vmatpush2.msra.mxu0 %v175
    %1042 = vmatprep.subr.mxu0 0.0
    %1043 = vmatpush2.msra.mxu0 %v174
    %1044 = vmatprep.subr.mxu0 0.0
    %1045 = vmatpush2.msra.mxu0 %v173
    %1046 = vmatprep.mubr.f32.mxu0 %v583
    %1047 = vmatmul.mubr.f32.gmra.mxu0 %v575
    %v1048 = vpop.f32.mrf.mxu0
    %v1049 = vadd.f32 %v979, %v1048
    %v1050 = vpop.f32.mrf.mxu0
    %1051 = vdwg.mxu0
    %1052 = vmatprep.subr.mxu0 0.0
    %1053 = vmatpush1.msra.mxu0 %v204
    %1054 = vmatprep.subr.mxu0 0.0
    %1055 = vmatpush1.msra.mxu0 %v203
    %1056 = vmatprep.subr.mxu0 0.0
    %1057 = vmatpush1.msra.mxu0 %v202
    %1058 = vmatprep.subr.mxu0 0.0
    %1059 = vmatpush1.msra.mxu0 %v201
    %1060 = vmatprep.subr.mxu0 0.0
    %1061 = vmatpush1.msra.mxu0 %v200
    %1062 = vmatprep.subr.mxu0 0.0
    %1063 = vmatpush1.msra.mxu0 %v199
    %1064 = vmatprep.subr.mxu0 0.0
    %1065 = vmatpush1.msra.mxu0 %v198
    %1066 = vmatprep.subr.mxu0 0.0
    %1067 = vmatpush1.msra.mxu0 %v197
    %1068 = vmatprep.subr.mxu0 0.0
    %1069 = vmatpush1.msra.mxu0 %v196
    %1070 = vmatprep.subr.mxu0 0.0
    %1071 = vmatpush1.msra.mxu0 %v195
    %1072 = vmatprep.subr.mxu0 0.0
    %1073 = vmatpush1.msra.mxu0 %v194
    %1074 = vmatprep.subr.mxu0 0.0
    %1075 = vmatpush1.msra.mxu0 %v193
    %1076 = vmatprep.subr.mxu0 0.0
    %1077 = vmatpush1.msra.mxu0 %v192
    %1078 = vmatprep.subr.mxu0 0.0
    %1079 = vmatpush1.msra.mxu0 %v191
    %1080 = vmatprep.subr.mxu0 0.0
    %1081 = vmatpush1.msra.mxu0 %v190
    %1082 = vmatprep.subr.mxu0 0.0
    %1083 = vmatpush1.msra.mxu0 %v189
    %1084 = vmatprep.subr.mxu0 0.0
    %1085 = vmatpush2.msra.mxu0 %v220
    %1086 = vmatprep.subr.mxu0 0.0
    %1087 = vmatpush2.msra.mxu0 %v219
    %1088 = vmatprep.subr.mxu0 0.0
    %1089 = vmatpush2.msra.mxu0 %v218
    %1090 = vmatprep.subr.mxu0 0.0
    %1091 = vmatpush2.msra.mxu0 %v217
    %1092 = vmatprep.subr.mxu0 0.0
    %1093 = vmatpush2.msra.mxu0 %v216
    %1094 = vmatprep.subr.mxu0 0.0
    %1095 = vmatpush2.msra.mxu0 %v215
    %1096 = vmatprep.subr.mxu0 0.0
    %1097 = vmatpush2.msra.mxu0 %v214
    %1098 = vmatprep.subr.mxu0 0.0
    %1099 = vmatpush2.msra.mxu0 %v213
    %1100 = vmatprep.subr.mxu0 0.0
    %1101 = vmatpush2.msra.mxu0 %v212
    %1102 = vmatprep.subr.mxu0 0.0
    %1103 = vmatpush2.msra.mxu0 %v211
    %1104 = vmatprep.subr.mxu0 0.0
    %1105 = vmatpush2.msra.mxu0 %v210
    %1106 = vmatprep.subr.mxu0 0.0
    %1107 = vmatpush2.msra.mxu0 %v209
    %1108 = vmatprep.subr.mxu0 0.0
    %1109 = vmatpush2.msra.mxu0 %v208
    %1110 = vmatprep.subr.mxu0 0.0
    %1111 = vmatpush2.msra.mxu0 %v207
    %1112 = vmatprep.subr.mxu0 0.0
    %1113 = vmatpush2.msra.mxu0 %v206
    %1114 = vmatprep.subr.mxu0 0.0
    %1115 = vmatpush2.msra.mxu0 %v205
    %1116 = vmatprep.mubr.f32.mxu0 %v584
    %1117 = vmatmul.mubr.f32.gmra.mxu0 %v582
    %v1118 = vpop.f32.mrf.mxu0
    %v1119 = vadd.f32 %v1049, %v1118
    %v1120 = vpop.f32.mrf.mxu0
    %1121 = vdwg.mxu0
    %1122 = vmatprep.subr.mxu0 0.0
    %1123 = vmatpush1.msra.mxu0 %v236
    %1124 = vmatprep.subr.mxu0 0.0
    %1125 = vmatpush1.msra.mxu0 %v235
    %1126 = vmatprep.subr.mxu0 0.0
    %1127 = vmatpush1.msra.mxu0 %v234
    %1128 = vmatprep.subr.mxu0 0.0
    %1129 = vmatpush1.msra.mxu0 %v233
    %1130 = vmatprep.subr.mxu0 0.0
    %1131 = vmatpush1.msra.mxu0 %v232
    %1132 = vmatprep.subr.mxu0 0.0
    %1133 = vmatpush1.msra.mxu0 %v231
    %1134 = vmatprep.subr.mxu0 0.0
    %1135 = vmatpush1.msra.mxu0 %v230
    %1136 = vmatprep.subr.mxu0 0.0
    %1137 = vmatpush1.msra.mxu0 %v229
    %1138 = vmatprep.subr.mxu0 0.0
    %1139 = vmatpush1.msra.mxu0 %v228
    %1140 = vmatprep.subr.mxu0 0.0
    %1141 = vmatpush1.msra.mxu0 %v227
    %1142 = vmatprep.subr.mxu0 0.0
    %1143 = vmatpush1.msra.mxu0 %v226
    %1144 = vmatprep.subr.mxu0 0.0
    %1145 = vmatpush1.msra.mxu0 %v225
    %1146 = vmatprep.subr.mxu0 0.0
    %1147 = vmatpush1.msra.mxu0 %v224
    %1148 = vmatprep.subr.mxu0 0.0
    %1149 = vmatpush1.msra.mxu0 %v223
    %1150 = vmatprep.subr.mxu0 0.0
    %1151 = vmatpush1.msra.mxu0 %v222
    %1152 = vmatprep.subr.mxu0 0.0
    %1153 = vmatpush1.msra.mxu0 %v221
    %1154 = vmatprep.subr.mxu0 0.0
    %1155 = vmatpush2.msra.mxu0 %v252
    %1156 = vmatprep.subr.mxu0 0.0
    %1157 = vmatpush2.msra.mxu0 %v251
    %1158 = vmatprep.subr.mxu0 0.0
    %1159 = vmatpush2.msra.mxu0 %v250
    %1160 = vmatprep.subr.mxu0 0.0
    %1161 = vmatpush2.msra.mxu0 %v249
    %1162 = vmatprep.subr.mxu0 0.0
    %1163 = vmatpush2.msra.mxu0 %v248
    %1164 = vmatprep.subr.mxu0 0.0
    %1165 = vmatpush2.msra.mxu0 %v247
    %1166 = vmatprep.subr.mxu0 0.0
    %1167 = vmatpush2.msra.mxu0 %v246
    %1168 = vmatprep.subr.mxu0 0.0
    %1169 = vmatpush2.msra.mxu0 %v245
    %1170 = vmatprep.subr.mxu0 0.0
    %1171 = vmatpush2.msra.mxu0 %v244
    %1172 = vmatprep.subr.mxu0 0.0
    %1173 = vmatpush2.msra.mxu0 %v243
    %1174 = vmatprep.subr.mxu0 0.0
    %1175 = vmatpush2.msra.mxu0 %v242
    %1176 = vmatprep.subr.mxu0 0.0
    %1177 = vmatpush2.msra.mxu0 %v241
    %1178 = vmatprep.subr.mxu0 0.0
    %1179 = vmatpush2.msra.mxu0 %v240
    %1180 = vmatprep.subr.mxu0 0.0
    %1181 = vmatpush2.msra.mxu0 %v239
    %1182 = vmatprep.subr.mxu0 0.0
    %1183 = vmatpush2.msra.mxu0 %v238
    %1184 = vmatprep.subr.mxu0 0.0
    %1185 = vmatpush2.msra.mxu0 %v237
    %1186 = vmatprep.mubr.f32.mxu0 %v600
    %1187 = vmatmul.mubr.f32.gmra.mxu0 %v592
    %v1188 = vpop.f32.mrf.mxu0
    %v1189 = vadd.f32 %v1119, %v1188
    %v1190 = vpop.f32.mrf.mxu0
    %1191 = vdwg.mxu0
    %1192 = vmatprep.subr.mxu0 0.0
    %1193 = vmatpush1.msra.mxu0 %v268
    %1194 = vmatprep.subr.mxu0 0.0
    %1195 = vmatpush1.msra.mxu0 %v267
    %1196 = vmatprep.subr.mxu0 0.0
    %1197 = vmatpush1.msra.mxu0 %v266
    %1198 = vmatprep.subr.mxu0 0.0
    %1199 = vmatpush1.msra.mxu0 %v265
    %1200 = vmatprep.subr.mxu0 0.0
    %1201 = vmatpush1.msra.mxu0 %v264
    %1202 = vmatprep.subr.mxu0 0.0
    %1203 = vmatpush1.msra.mxu0 %v263
    %1204 = vmatprep.subr.mxu0 0.0
    %1205 = vmatpush1.msra.mxu0 %v262
    %1206 = vmatprep.subr.mxu0 0.0
    %1207 = vmatpush1.msra.mxu0 %v261
    %1208 = vmatprep.subr.mxu0 0.0
    %1209 = vmatpush1.msra.mxu0 %v260
    %1210 = vmatprep.subr.mxu0 0.0
    %1211 = vmatpush1.msra.mxu0 %v259
    %1212 = vmatprep.subr.mxu0 0.0
    %1213 = vmatpush1.msra.mxu0 %v258
    %1214 = vmatprep.subr.mxu0 0.0
    %1215 = vmatpush1.msra.mxu0 %v257
    %1216 = vmatprep.subr.mxu0 0.0
    %1217 = vmatpush1.msra.mxu0 %v256
    %1218 = vmatprep.subr.mxu0 0.0
    %1219 = vmatpush1.msra.mxu0 %v255
    %1220 = vmatprep.subr.mxu0 0.0
    %1221 = vmatpush1.msra.mxu0 %v254
    %1222 = vmatprep.subr.mxu0 0.0
    %1223 = vmatpush1.msra.mxu0 %v253
    %1224 = vmatprep.subr.mxu0 0.0
    %1225 = vmatpush2.msra.mxu0 %v284
    %1226 = vmatprep.subr.mxu0 0.0
    %1227 = vmatpush2.msra.mxu0 %v283
    %1228 = vmatprep.subr.mxu0 0.0
    %1229 = vmatpush2.msra.mxu0 %v282
    %1230 = vmatprep.subr.mxu0 0.0
    %1231 = vmatpush2.msra.mxu0 %v281
    %1232 = vmatprep.subr.mxu0 0.0
    %1233 = vmatpush2.msra.mxu0 %v280
    %1234 = vmatprep.subr.mxu0 0.0
    %1235 = vmatpush2.msra.mxu0 %v279
    %1236 = vmatprep.subr.mxu0 0.0
    %1237 = vmatpush2.msra.mxu0 %v278
    %1238 = vmatprep.subr.mxu0 0.0
    %1239 = vmatpush2.msra.mxu0 %v277
    %1240 = vmatprep.subr.mxu0 0.0
    %1241 = vmatpush2.msra.mxu0 %v276
    %1242 = vmatprep.subr.mxu0 0.0
    %1243 = vmatpush2.msra.mxu0 %v275
    %1244 = vmatprep.subr.mxu0 0.0
    %1245 = vmatpush2.msra.mxu0 %v274
    %1246 = vmatprep.subr.mxu0 0.0
    %1247 = vmatpush2.msra.mxu0 %v273
    %1248 = vmatprep.subr.mxu0 0.0
    %1249 = vmatpush2.msra.mxu0 %v272
    %1250 = vmatprep.subr.mxu0 0.0
    %1251 = vmatpush2.msra.mxu0 %v271
    %1252 = vmatprep.subr.mxu0 0.0
    %1253 = vmatpush2.msra.mxu0 %v270
    %1254 = vmatprep.subr.mxu0 0.0
    %1255 = vmatpush2.msra.mxu0 %v269
    %1256 = vmatprep.mubr.f32.mxu0 %v601
    %1257 = vmatmul.mubr.f32.gmra.mxu0 %v599
    %v1258 = vpop.f32.mrf.mxu0
    %v1259 = vadd.f32 %v1189, %v1258
    %v1260 = vpop.f32.mrf.mxu0
    %1261 = vdwg.mxu0
    %1262 = vmatprep.subr.mxu0 0.0
    %1263 = vmatpush1.msra.mxu0 %v300
    %1264 = vmatprep.subr.mxu0 0.0
    %1265 = vmatpush1.msra.mxu0 %v299
    %1266 = vmatprep.subr.mxu0 0.0
    %1267 = vmatpush1.msra.mxu0 %v298
    %1268 = vmatprep.subr.mxu0 0.0
    %1269 = vmatpush1.msra.mxu0 %v297
    %1270 = vmatprep.subr.mxu0 0.0
    %1271 = vmatpush1.msra.mxu0 %v296
    %1272 = vmatprep.subr.mxu0 0.0
    %1273 = vmatpush1.msra.mxu0 %v295
    %1274 = vmatprep.subr.mxu0 0.0
    %1275 = vmatpush1.msra.mxu0 %v294
    %1276 = vmatprep.subr.mxu0 0.0
    %1277 = vmatpush1.msra.mxu0 %v293
    %1278 = vmatprep.subr.mxu0 0.0
    %1279 = vmatpush1.msra.mxu0 %v292
    %1280 = vmatprep.subr.mxu0 0.0
    %1281 = vmatpush1.msra.mxu0 %v291
    %1282 = vmatprep.subr.mxu0 0.0
    %1283 = vmatpush1.msra.mxu0 %v290
    %1284 = vmatprep.subr.mxu0 0.0
    %1285 = vmatpush1.msra.mxu0 %v289
    %1286 = vmatprep.subr.mxu0 0.0
    %1287 = vmatpush1.msra.mxu0 %v288
    %1288 = vmatprep.subr.mxu0 0.0
    %1289 = vmatpush1.msra.mxu0 %v287
    %1290 = vmatprep.subr.mxu0 0.0
    %1291 = vmatpush1.msra.mxu0 %v286
    %1292 = vmatprep.subr.mxu0 0.0
    %1293 = vmatpush1.msra.mxu0 %v285
    %1294 = vmatprep.subr.mxu0 0.0
    %1295 = vmatpush2.msra.mxu0 %v316
    %1296 = vmatprep.subr.mxu0 0.0
    %1297 = vmatpush2.msra.mxu0 %v315
    %1298 = vmatprep.subr.mxu0 0.0
    %1299 = vmatpush2.msra.mxu0 %v314
    %1300 = vmatprep.subr.mxu0 0.0
    %1301 = vmatpush2.msra.mxu0 %v313
    %1302 = vmatprep.subr.mxu0 0.0
    %1303 = vmatpush2.msra.mxu0 %v312
    %1304 = vmatprep.subr.mxu0 0.0
    %1305 = vmatpush2.msra.mxu0 %v311
    %1306 = vmatprep.subr.mxu0 0.0
    %1307 = vmatpush2.msra.mxu0 %v310
    %1308 = vmatprep.subr.mxu0 0.0
    %1309 = vmatpush2.msra.mxu0 %v309
    %1310 = vmatprep.subr.mxu0 0.0
    %1311 = vmatpush2.msra.mxu0 %v308
    %1312 = vmatprep.subr.mxu0 0.0
    %1313 = vmatpush2.msra.mxu0 %v307
    %1314 = vmatprep.subr.mxu0 0.0
    %1315 = vmatpush2.msra.mxu0 %v306
    %1316 = vmatprep.subr.mxu0 0.0
    %1317 = vmatpush2.msra.mxu0 %v305
    %1318 = vmatprep.subr.mxu0 0.0
    %1319 = vmatpush2.msra.mxu0 %v304
    %1320 = vmatprep.subr.mxu0 0.0
    %1321 = vmatpush2.msra.mxu0 %v303
    %1322 = vmatprep.subr.mxu0 0.0
    %1323 = vmatpush2.msra.mxu0 %v302
    %1324 = vmatprep.subr.mxu0 0.0
    %1325 = vmatpush2.msra.mxu0 %v301
    %1326 = vmatprep.mubr.f32.mxu0 %v617
    %1327 = vmatmul.mubr.f32.gmra.mxu0 %v609
    %v1328 = vpop.f32.mrf.mxu0
    %v1329 = vadd.f32 %v1259, %v1328
    %v1330 = vpop.f32.mrf.mxu0
    %1331 = vdwg.mxu0
    %1332 = vmatprep.subr.mxu0 0.0
    %1333 = vmatpush1.msra.mxu0 %v332
    %1334 = vmatprep.subr.mxu0 0.0
    %1335 = vmatpush1.msra.mxu0 %v331
    %1336 = vmatprep.subr.mxu0 0.0
    %1337 = vmatpush1.msra.mxu0 %v330
    %1338 = vmatprep.subr.mxu0 0.0
    %1339 = vmatpush1.msra.mxu0 %v329
    %1340 = vmatprep.subr.mxu0 0.0
    %1341 = vmatpush1.msra.mxu0 %v328
    %1342 = vmatprep.subr.mxu0 0.0
    %1343 = vmatpush1.msra.mxu0 %v327
    %1344 = vmatprep.subr.mxu0 0.0
    %1345 = vmatpush1.msra.mxu0 %v326
    %1346 = vmatprep.subr.mxu0 0.0
    %1347 = vmatpush1.msra.mxu0 %v325
    %1348 = vmatprep.subr.mxu0 0.0
    %1349 = vmatpush1.msra.mxu0 %v324
    %1350 = vmatprep.subr.mxu0 0.0
    %1351 = vmatpush1.msra.mxu0 %v323
    %1352 = vmatprep.subr.mxu0 0.0
    %1353 = vmatpush1.msra.mxu0 %v322
    %1354 = vmatprep.subr.mxu0 0.0
    %1355 = vmatpush1.msra.mxu0 %v321
    %1356 = vmatprep.subr.mxu0 0.0
    %1357 = vmatpush1.msra.mxu0 %v320
    %1358 = vmatprep.subr.mxu0 0.0
    %1359 = vmatpush1.msra.mxu0 %v319
    %1360 = vmatprep.subr.mxu0 0.0
    %1361 = vmatpush1.msra.mxu0 %v318
    %1362 = vmatprep.subr.mxu0 0.0
    %1363 = vmatpush1.msra.mxu0 %v317
    %1364 = vmatprep.subr.mxu0 0.0
    %1365 = vmatpush2.msra.mxu0 %v348
    %1366 = vmatprep.subr.mxu0 0.0
    %1367 = vmatpush2.msra.mxu0 %v347
    %1368 = vmatprep.subr.mxu0 0.0
    %1369 = vmatpush2.msra.mxu0 %v346
    %1370 = vmatprep.subr.mxu0 0.0
    %1371 = vmatpush2.msra.mxu0 %v345
    %1372 = vmatprep.subr.mxu0 0.0
    %1373 = vmatpush2.msra.mxu0 %v344
    %1374 = vmatprep.subr.mxu0 0.0
    %1375 = vmatpush2.msra.mxu0 %v343
    %1376 = vmatprep.subr.mxu0 0.0
    %1377 = vmatpush2.msra.mxu0 %v342
    %1378 = vmatprep.subr.mxu0 0.0
    %1379 = vmatpush2.msra.mxu0 %v341
    %1380 = vmatprep.subr.mxu0 0.0
    %1381 = vmatpush2.msra.mxu0 %v340
    %1382 = vmatprep.subr.mxu0 0.0
    %1383 = vmatpush2.msra.mxu0 %v339
    %1384 = vmatprep.subr.mxu0 0.0
    %1385 = vmatpush2.msra.mxu0 %v338
    %1386 = vmatprep.subr.mxu0 0.0
    %1387 = vmatpush2.msra.mxu0 %v337
    %1388 = vmatprep.subr.mxu0 0.0
    %1389 = vmatpush2.msra.mxu0 %v336
    %1390 = vmatprep.subr.mxu0 0.0
    %1391 = vmatpush2.msra.mxu0 %v335
    %1392 = vmatprep.subr.mxu0 0.0
    %1393 = vmatpush2.msra.mxu0 %v334
    %1394 = vmatprep.subr.mxu0 0.0
    %1395 = vmatpush2.msra.mxu0 %v333
    %1396 = vmatprep.mubr.f32.mxu0 %v618
    %1397 = vmatmul.mubr.f32.gmra.mxu0 %v616
    %v1398 = vpop.f32.mrf.mxu0
    %v1399 = vadd.f32 %v1329, %v1398
    %v1400 = vpop.f32.mrf.mxu0
    %1401 = vdwg.mxu0
    %1402 = vmatprep.subr.mxu0 0.0
    %1403 = vmatpush1.msra.mxu0 %v364
    %1404 = vmatprep.subr.mxu0 0.0
    %1405 = vmatpush1.msra.mxu0 %v363
    %1406 = vmatprep.subr.mxu0 0.0
    %1407 = vmatpush1.msra.mxu0 %v362
    %1408 = vmatprep.subr.mxu0 0.0
    %1409 = vmatpush1.msra.mxu0 %v361
    %1410 = vmatprep.subr.mxu0 0.0
    %1411 = vmatpush1.msra.mxu0 %v360
    %1412 = vmatprep.subr.mxu0 0.0
    %1413 = vmatpush1.msra.mxu0 %v359
    %1414 = vmatprep.subr.mxu0 0.0
    %1415 = vmatpush1.msra.mxu0 %v358
    %1416 = vmatprep.subr.mxu0 0.0
    %1417 = vmatpush1.msra.mxu0 %v357
    %1418 = vmatprep.subr.mxu0 0.0
    %1419 = vmatpush1.msra.mxu0 %v356
    %1420 = vmatprep.subr.mxu0 0.0
    %1421 = vmatpush1.msra.mxu0 %v355
    %1422 = vmatprep.subr.mxu0 0.0
    %1423 = vmatpush1.msra.mxu0 %v354
    %1424 = vmatprep.subr.mxu0 0.0
    %1425 = vmatpush1.msra.mxu0 %v353
    %1426 = vmatprep.subr.mxu0 0.0
    %1427 = vmatpush1.msra.mxu0 %v352
    %1428 = vmatprep.subr.mxu0 0.0
    %1429 = vmatpush1.msra.mxu0 %v351
    %1430 = vmatprep.subr.mxu0 0.0
    %1431 = vmatpush1.msra.mxu0 %v350
    %1432 = vmatprep.subr.mxu0 0.0
    %1433 = vmatpush1.msra.mxu0 %v349
    %1434 = vmatprep.subr.mxu0 0.0
    %1435 = vmatpush2.msra.mxu0 %v380
    %1436 = vmatprep.subr.mxu0 0.0
    %1437 = vmatpush2.msra.mxu0 %v379
    %1438 = vmatprep.subr.mxu0 0.0
    %1439 = vmatpush2.msra.mxu0 %v378
    %1440 = vmatprep.subr.mxu0 0.0
    %1441 = vmatpush2.msra.mxu0 %v377
    %1442 = vmatprep.subr.mxu0 0.0
    %1443 = vmatpush2.msra.mxu0 %v376
    %1444 = vmatprep.subr.mxu0 0.0
    %1445 = vmatpush2.msra.mxu0 %v375
    %1446 = vmatprep.subr.mxu0 0.0
    %1447 = vmatpush2.msra.mxu0 %v374
    %1448 = vmatprep.subr.mxu0 0.0
    %1449 = vmatpush2.msra.mxu0 %v373
    %1450 = vmatprep.subr.mxu0 0.0
    %1451 = vmatpush2.msra.mxu0 %v372
    %1452 = vmatprep.subr.mxu0 0.0
    %1453 = vmatpush2.msra.mxu0 %v371
    %1454 = vmatprep.subr.mxu0 0.0
    %1455 = vmatpush2.msra.mxu0 %v370
    %1456 = vmatprep.subr.mxu0 0.0
    %1457 = vmatpush2.msra.mxu0 %v369
    %1458 = vmatprep.subr.mxu0 0.0
    %1459 = vmatpush2.msra.mxu0 %v368
    %1460 = vmatprep.subr.mxu0 0.0
    %1461 = vmatpush2.msra.mxu0 %v367
    %1462 = vmatprep.subr.mxu0 0.0
    %1463 = vmatpush2.msra.mxu0 %v366
    %1464 = vmatprep.subr.mxu0 0.0
    %1465 = vmatpush2.msra.mxu0 %v365
    %1466 = vmatprep.mubr.f32.mxu0 %v634
    %1467 = vmatmul.mubr.f32.gmra.mxu0 %v626
    %v1468 = vpop.f32.mrf.mxu0
    %v1469 = vadd.f32 %v1399, %v1468
    %v1470 = vpop.f32.mrf.mxu0
    %1471 = vdwg.mxu0
    %1472 = vmatprep.subr.mxu0 0.0
    %1473 = vmatpush1.msra.mxu0 %v396
    %1474 = vmatprep.subr.mxu0 0.0
    %1475 = vmatpush1.msra.mxu0 %v395
    %1476 = vmatprep.subr.mxu0 0.0
    %1477 = vmatpush1.msra.mxu0 %v394
    %1478 = vmatprep.subr.mxu0 0.0
    %1479 = vmatpush1.msra.mxu0 %v393
    %1480 = vmatprep.subr.mxu0 0.0
    %1481 = vmatpush1.msra.mxu0 %v392
    %1482 = vmatprep.subr.mxu0 0.0
    %1483 = vmatpush1.msra.mxu0 %v391
    %1484 = vmatprep.subr.mxu0 0.0
    %1485 = vmatpush1.msra.mxu0 %v390
    %1486 = vmatprep.subr.mxu0 0.0
    %1487 = vmatpush1.msra.mxu0 %v389
    %1488 = vmatprep.subr.mxu0 0.0
    %1489 = vmatpush1.msra.mxu0 %v388
    %1490 = vmatprep.subr.mxu0 0.0
    %1491 = vmatpush1.msra.mxu0 %v387
    %1492 = vmatprep.subr.mxu0 0.0
    %1493 = vmatpush1.msra.mxu0 %v386
    %1494 = vmatprep.subr.mxu0 0.0
    %1495 = vmatpush1.msra.mxu0 %v385
    %1496 = vmatprep.subr.mxu0 0.0
    %1497 = vmatpush1.msra.mxu0 %v384
    %1498 = vmatprep.subr.mxu0 0.0
    %1499 = vmatpush1.msra.mxu0 %v383
    %1500 = vmatprep.subr.mxu0 0.0
    %1501 = vmatpush1.msra.mxu0 %v382
    %1502 = vmatprep.subr.mxu0 0.0
    %1503 = vmatpush1.msra.mxu0 %v381
    %1504 = vmatprep.subr.mxu0 0.0
    %1505 = vmatpush2.msra.mxu0 %v412
    %1506 = vmatprep.subr.mxu0 0.0
    %1507 = vmatpush2.msra.mxu0 %v411
    %1508 = vmatprep.subr.mxu0 0.0
    %1509 = vmatpush2.msra.mxu0 %v410
    %1510 = vmatprep.subr.mxu0 0.0
    %1511 = vmatpush2.msra.mxu0 %v409
    %1512 = vmatprep.subr.mxu0 0.0
    %1513 = vmatpush2.msra.mxu0 %v408
    %1514 = vmatprep.subr.mxu0 0.0
    %1515 = vmatpush2.msra.mxu0 %v407
    %1516 = vmatprep.subr.mxu0 0.0
    %1517 = vmatpush2.msra.mxu0 %v406
    %1518 = vmatprep.subr.mxu0 0.0
    %1519 = vmatpush2.msra.mxu0 %v405
    %1520 = vmatprep.subr.mxu0 0.0
    %1521 = vmatpush2.msra.mxu0 %v404
    %1522 = vmatprep.subr.mxu0 0.0
    %1523 = vmatpush2.msra.mxu0 %v403
    %1524 = vmatprep.subr.mxu0 0.0
    %1525 = vmatpush2.msra.mxu0 %v402
    %1526 = vmatprep.subr.mxu0 0.0
    %1527 = vmatpush2.msra.mxu0 %v401
    %1528 = vmatprep.subr.mxu0 0.0
    %1529 = vmatpush2.msra.mxu0 %v400
    %1530 = vmatprep.subr.mxu0 0.0
    %1531 = vmatpush2.msra.mxu0 %v399
    %1532 = vmatprep.subr.mxu0 0.0
    %1533 = vmatpush2.msra.mxu0 %v398
    %1534 = vmatprep.subr.mxu0 0.0
    %1535 = vmatpush2.msra.mxu0 %v397
    %1536 = vmatprep.mubr.f32.mxu0 %v635
    %1537 = vmatmul.mubr.f32.gmra.mxu0 %v633
    %v1538 = vpop.f32.mrf.mxu0
    %v1539 = vadd.f32 %v1469, %v1538
    %v1540 = vpop.f32.mrf.mxu0
    %1541 = vdwg.mxu0
    %1542 = vmatprep.subr.mxu0 0.0
    %1543 = vmatpush1.msra.mxu0 %v428
    %1544 = vmatprep.subr.mxu0 0.0
    %1545 = vmatpush1.msra.mxu0 %v427
    %1546 = vmatprep.subr.mxu0 0.0
    %1547 = vmatpush1.msra.mxu0 %v426
    %1548 = vmatprep.subr.mxu0 0.0
    %1549 = vmatpush1.msra.mxu0 %v425
    %1550 = vmatprep.subr.mxu0 0.0
    %1551 = vmatpush1.msra.mxu0 %v424
    %1552 = vmatprep.subr.mxu0 0.0
    %1553 = vmatpush1.msra.mxu0 %v423
    %1554 = vmatprep.subr.mxu0 0.0
    %1555 = vmatpush1.msra.mxu0 %v422
    %1556 = vmatprep.subr.mxu0 0.0
    %1557 = vmatpush1.msra.mxu0 %v421
    %1558 = vmatprep.subr.mxu0 0.0
    %1559 = vmatpush1.msra.mxu0 %v420
    %1560 = vmatprep.subr.mxu0 0.0
    %1561 = vmatpush1.msra.mxu0 %v419
    %1562 = vmatprep.subr.mxu0 0.0
    %1563 = vmatpush1.msra.mxu0 %v418
    %1564 = vmatprep.subr.mxu0 0.0
    %1565 = vmatpush1.msra.mxu0 %v417
    %1566 = vmatprep.subr.mxu0 0.0
    %1567 = vmatpush1.msra.mxu0 %v416
    %1568 = vmatprep.subr.mxu0 0.0
    %1569 = vmatpush1.msra.mxu0 %v415
    %1570 = vmatprep.subr.mxu0 0.0
    %1571 = vmatpush1.msra.mxu0 %v414
    %1572 = vmatprep.subr.mxu0 0.0
    %1573 = vmatpush1.msra.mxu0 %v413
    %1574 = vmatprep.subr.mxu0 0.0
    %1575 = vmatpush2.msra.mxu0 %v444
    %1576 = vmatprep.subr.mxu0 0.0
    %1577 = vmatpush2.msra.mxu0 %v443
    %1578 = vmatprep.subr.mxu0 0.0
    %1579 = vmatpush2.msra.mxu0 %v442
    %1580 = vmatprep.subr.mxu0 0.0
    %1581 = vmatpush2.msra.mxu0 %v441
    %1582 = vmatprep.subr.mxu0 0.0
    %1583 = vmatpush2.msra.mxu0 %v440
    %1584 = vmatprep.subr.mxu0 0.0
    %1585 = vmatpush2.msra.mxu0 %v439
    %1586 = vmatprep.subr.mxu0 0.0
    %1587 = vmatpush2.msra.mxu0 %v438
    %1588 = vmatprep.subr.mxu0 0.0
    %1589 = vmatpush2.msra.mxu0 %v437
    %1590 = vmatprep.subr.mxu0 0.0
    %1591 = vmatpush2.msra.mxu0 %v436
    %1592 = vmatprep.subr.mxu0 0.0
    %1593 = vmatpush2.msra.mxu0 %v435
    %1594 = vmatprep.subr.mxu0 0.0
    %1595 = vmatpush2.msra.mxu0 %v434
    %1596 = vmatprep.subr.mxu0 0.0
    %1597 = vmatpush2.msra.mxu0 %v433
    %1598 = vmatprep.subr.mxu0 0.0
    %1599 = vmatpush2.msra.mxu0 %v432
    %1600 = vmatprep.subr.mxu0 0.0
    %1601 = vmatpush2.msra.mxu0 %v431
    %1602 = vmatprep.subr.mxu0 0.0
    %1603 = vmatpush2.msra.mxu0 %v430
    %1604 = vmatprep.subr.mxu0 0.0
    %1605 = vmatpush2.msra.mxu0 %v429
    %1606 = vmatprep.mubr.f32.mxu0 %v651
    %1607 = vmatmul.mubr.f32.gmra.mxu0 %v643
    %v1608 = vpop.f32.mrf.mxu0
    %v1609 = vadd.f32 %v1539, %v1608
    %v1610 = vpop.f32.mrf.mxu0
    %1611 = vdwg.mxu0
    %1612 = vmatprep.subr.mxu0 0.0
    %1613 = vmatpush1.msra.mxu0 %v460
    %1614 = vmatprep.subr.mxu0 0.0
    %1615 = vmatpush1.msra.mxu0 %v459
    %1616 = vmatprep.subr.mxu0 0.0
    %1617 = vmatpush1.msra.mxu0 %v458
    %1618 = vmatprep.subr.mxu0 0.0
    %1619 = vmatpush1.msra.mxu0 %v457
    %1620 = vmatprep.subr.mxu0 0.0
    %1621 = vmatpush1.msra.mxu0 %v456
    %1622 = vmatprep.subr.mxu0 0.0
    %1623 = vmatpush1.msra.mxu0 %v455
    %1624 = vmatprep.subr.mxu0 0.0
    %1625 = vmatpush1.msra.mxu0 %v454
    %1626 = vmatprep.subr.mxu0 0.0
    %1627 = vmatpush1.msra.mxu0 %v453
    %1628 = vmatprep.subr.mxu0 0.0
    %1629 = vmatpush1.msra.mxu0 %v452
    %1630 = vmatprep.subr.mxu0 0.0
    %1631 = vmatpush1.msra.mxu0 %v451
    %1632 = vmatprep.subr.mxu0 0.0
    %1633 = vmatpush1.msra.mxu0 %v450
    %1634 = vmatprep.subr.mxu0 0.0
    %1635 = vmatpush1.msra.mxu0 %v449
    %1636 = vmatprep.subr.mxu0 0.0
    %1637 = vmatpush1.msra.mxu0 %v448
    %1638 = vmatprep.subr.mxu0 0.0
    %1639 = vmatpush1.msra.mxu0 %v447
    %1640 = vmatprep.subr.mxu0 0.0
    %1641 = vmatpush1.msra.mxu0 %v446
    %1642 = vmatprep.subr.mxu0 0.0
    %1643 = vmatpush1.msra.mxu0 %v445
    %1644 = vmatprep.subr.mxu0 0.0
    %1645 = vmatpush2.msra.mxu0 %v476
    %1646 = vmatprep.subr.mxu0 0.0
    %1647 = vmatpush2.msra.mxu0 %v475
    %1648 = vmatprep.subr.mxu0 0.0
    %1649 = vmatpush2.msra.mxu0 %v474
    %1650 = vmatprep.subr.mxu0 0.0
    %1651 = vmatpush2.msra.mxu0 %v473
    %1652 = vmatprep.subr.mxu0 0.0
    %1653 = vmatpush2.msra.mxu0 %v472
    %1654 = vmatprep.subr.mxu0 0.0
    %1655 = vmatpush2.msra.mxu0 %v471
    %1656 = vmatprep.subr.mxu0 0.0
    %1657 = vmatpush2.msra.mxu0 %v470
    %1658 = vmatprep.subr.mxu0 0.0
    %1659 = vmatpush2.msra.mxu0 %v469
    %1660 = vmatprep.subr.mxu0 0.0
    %1661 = vmatpush2.msra.mxu0 %v468
    %1662 = vmatprep.subr.mxu0 0.0
    %1663 = vmatpush2.msra.mxu0 %v467
    %1664 = vmatprep.subr.mxu0 0.0
    %1665 = vmatpush2.msra.mxu0 %v466
    %1666 = vmatprep.subr.mxu0 0.0
    %1667 = vmatpush2.msra.mxu0 %v465
    %1668 = vmatprep.subr.mxu0 0.0
    %1669 = vmatpush2.msra.mxu0 %v464
    %1670 = vmatprep.subr.mxu0 0.0
    %1671 = vmatpush2.msra.mxu0 %v463
    %1672 = vmatprep.subr.mxu0 0.0
    %1673 = vmatpush2.msra.mxu0 %v462
    %1674 = vmatprep.subr.mxu0 0.0
    %1675 = vmatpush2.msra.mxu0 %v461
    %1676 = vmatprep.mubr.f32.mxu0 %v652
    %1677 = vmatmul.mubr.f32.gmra.mxu0 %v650
    %v1678 = vpop.f32.mrf.mxu0
    %v1679 = vadd.f32 %v1609, %v1678
    %v1680 = vpop.f32.mrf.mxu0
    %1681 = vdwg.mxu0
    %1682 = vmatprep.subr.mxu0 0.0
    %1683 = vmatpush1.msra.mxu0 %v492
    %1684 = vmatprep.subr.mxu0 0.0
    %1685 = vmatpush1.msra.mxu0 %v491
    %1686 = vmatprep.subr.mxu0 0.0
    %1687 = vmatpush1.msra.mxu0 %v490
    %1688 = vmatprep.subr.mxu0 0.0
    %1689 = vmatpush1.msra.mxu0 %v489
    %1690 = vmatprep.subr.mxu0 0.0
    %1691 = vmatpush1.msra.mxu0 %v488
    %1692 = vmatprep.subr.mxu0 0.0
    %1693 = vmatpush1.msra.mxu0 %v487
    %1694 = vmatprep.subr.mxu0 0.0
    %1695 = vmatpush1.msra.mxu0 %v486
    %1696 = vmatprep.subr.mxu0 0.0
    %1697 = vmatpush1.msra.mxu0 %v485
    %1698 = vmatprep.subr.mxu0 0.0
    %1699 = vmatpush1.msra.mxu0 %v484
    %1700 = vmatprep.subr.mxu0 0.0
    %1701 = vmatpush1.msra.mxu0 %v483
    %1702 = vmatprep.subr.mxu0 0.0
    %1703 = vmatpush1.msra.mxu0 %v482
    %1704 = vmatprep.subr.mxu0 0.0
    %1705 = vmatpush1.msra.mxu0 %v481
    %1706 = vmatprep.subr.mxu0 0.0
    %1707 = vmatpush1.msra.mxu0 %v480
    %1708 = vmatprep.subr.mxu0 0.0
    %1709 = vmatpush1.msra.mxu0 %v479
    %1710 = vmatprep.subr.mxu0 0.0
    %1711 = vmatpush1.msra.mxu0 %v478
    %1712 = vmatprep.subr.mxu0 0.0
    %1713 = vmatpush1.msra.mxu0 %v477
    %1714 = vmatprep.subr.mxu0 0.0
    %1715 = vmatpush2.msra.mxu0 %v508
    %1716 = vmatprep.subr.mxu0 0.0
    %1717 = vmatpush2.msra.mxu0 %v507
    %1718 = vmatprep.subr.mxu0 0.0
    %1719 = vmatpush2.msra.mxu0 %v506
    %1720 = vmatprep.subr.mxu0 0.0
    %1721 = vmatpush2.msra.mxu0 %v505
    %1722 = vmatprep.subr.mxu0 0.0
    %1723 = vmatpush2.msra.mxu0 %v504
    %1724 = vmatprep.subr.mxu0 0.0
    %1725 = vmatpush2.msra.mxu0 %v503
    %1726 = vmatprep.subr.mxu0 0.0
    %1727 = vmatpush2.msra.mxu0 %v502
    %1728 = vmatprep.subr.mxu0 0.0
    %1729 = vmatpush2.msra.mxu0 %v501
    %1730 = vmatprep.subr.mxu0 0.0
    %1731 = vmatpush2.msra.mxu0 %v500
    %1732 = vmatprep.subr.mxu0 0.0
    %1733 = vmatpush2.msra.mxu0 %v499
    %1734 = vmatprep.subr.mxu0 0.0
    %1735 = vmatpush2.msra.mxu0 %v498
    %1736 = vmatprep.subr.mxu0 0.0
    %1737 = vmatpush2.msra.mxu0 %v497
    %1738 = vmatprep.subr.mxu0 0.0
    %1739 = vmatpush2.msra.mxu0 %v496
    %1740 = vmatprep.subr.mxu0 0.0
    %1741 = vmatpush2.msra.mxu0 %v495
    %1742 = vmatprep.subr.mxu0 0.0
    %1743 = vmatpush2.msra.mxu0 %v494
    %1744 = vmatprep.subr.mxu0 0.0
    %1745 = vmatpush2.msra.mxu0 %v493
    %1746 = vmatprep.mubr.f32.mxu0 %v668
    %1747 = vmatmul.mubr.f32.gmra.mxu0 %v660
    %v1748 = vpop.f32.mrf.mxu0
    %v1749 = vadd.f32 %v1679, %v1748
    %v1750 = vpop.f32.mrf.mxu0
    %1751 = vdwg.mxu0
    %1752 = vmatprep.subr.mxu0 0.0
    %1753 = vmatpush1.msra.mxu0 0.0
    %1754 = vmatprep.subr.mxu0 0.0
    %1755 = vmatpush1.msra.mxu0 0.0
    %1756 = vmatprep.subr.mxu0 0.0
    %1757 = vmatpush1.msra.mxu0 0.0
    %1758 = vmatprep.subr.mxu0 0.0
    %1759 = vmatpush1.msra.mxu0 0.0
    %1760 = vmatprep.subr.mxu0 0.0
    %1761 = vmatpush1.msra.mxu0 0.0
    %1762 = vmatprep.subr.mxu0 0.0
    %1763 = vmatpush1.msra.mxu0 0.0
    %1764 = vmatprep.subr.mxu0 0.0
    %1765 = vmatpush1.msra.mxu0 %v518
    %1766 = vmatprep.subr.mxu0 0.0
    %1767 = vmatpush1.msra.mxu0 %v517
    %1768 = vmatprep.subr.mxu0 0.0
    %1769 = vmatpush1.msra.mxu0 %v516
    %1770 = vmatprep.subr.mxu0 0.0
    %1771 = vmatpush1.msra.mxu0 %v515
    %1772 = vmatprep.subr.mxu0 0.0
    %1773 = vmatpush1.msra.mxu0 %v514
    %1774 = vmatprep.subr.mxu0 0.0
    %1775 = vmatpush1.msra.mxu0 %v513
    %1776 = vmatprep.subr.mxu0 0.0
    %1777 = vmatpush1.msra.mxu0 %v512
    %1778 = vmatprep.subr.mxu0 0.0
    %1779 = vmatpush1.msra.mxu0 %v511
    %1780 = vmatprep.subr.mxu0 0.0
    %1781 = vmatpush1.msra.mxu0 %v510
    %1782 = vmatprep.subr.mxu0 0.0
    %1783 = vmatpush1.msra.mxu0 %v509
    %1784 = vmatprep.subr.mxu0 0.0
    %1785 = vmatpush2.msra.mxu0 0.0
    %1786 = vmatprep.subr.mxu0 0.0
    %1787 = vmatpush2.msra.mxu0 0.0
    %1788 = vmatprep.subr.mxu0 0.0
    %1789 = vmatpush2.msra.mxu0 0.0
    %1790 = vmatprep.subr.mxu0 0.0
    %1791 = vmatpush2.msra.mxu0 0.0
    %1792 = vmatprep.subr.mxu0 0.0
    %1793 = vmatpush2.msra.mxu0 0.0
    %1794 = vmatprep.subr.mxu0 0.0
    %1795 = vmatpush2.msra.mxu0 0.0
    %1796 = vmatprep.subr.mxu0 0.0
    %1797 = vmatpush2.msra.mxu0 0.0
    %1798 = vmatprep.subr.mxu0 0.0
    %1799 = vmatpush2.msra.mxu0 0.0
    %1800 = vmatprep.subr.mxu0 0.0
    %1801 = vmatpush2.msra.mxu0 0.0
    %1802 = vmatprep.subr.mxu0 0.0
    %1803 = vmatpush2.msra.mxu0 0.0
    %1804 = vmatprep.subr.mxu0 0.0
    %1805 = vmatpush2.msra.mxu0 0.0
    %1806 = vmatprep.subr.mxu0 0.0
    %1807 = vmatpush2.msra.mxu0 0.0
    %1808 = vmatprep.subr.mxu0 0.0
    %1809 = vmatpush2.msra.mxu0 0.0
    %1810 = vmatprep.subr.mxu0 0.0
    %1811 = vmatpush2.msra.mxu0 0.0
    %1812 = vmatprep.subr.mxu0 0.0
    %1813 = vmatpush2.msra.mxu0 0.0
    %1814 = vmatprep.subr.mxu0 0.0
    %1815 = vmatpush2.msra.mxu0 0.0
    %1816 = vmatprep.mubr.f32.mxu0 0.0
    %1817 = vmatmul.mubr.f32.gmra.mxu0 %v700
    %v1818 = vpop.f32.mrf.mxu0
    %v1819 = vadd.f32 %v1749, %v1818
    %v1820 = vpop.f32.mrf.mxu0
    %1821 = vdwg.mxu0
    %v1822 = vmax.f32 %v1819, 0.0
    %v1823 = vld [vmem:[%s3] sm:$0xff]
    %v1824 = vld [vmem:[%s3 + $0x8] sm:$0xff]
    %v1825 = vld [vmem:[%s3 + $0x10] sm:$0xff]
    %v1826 = vld [vmem:[%s3 + $0x18] sm:$0xff]
    %v1827 = vld [vmem:[%s3 + $0x20] sm:$0xff]
    %v1828 = vld [vmem:[%s3 + $0x28] sm:$0xff]
    %v1829 = vld [vmem:[%s3 + $0x30] sm:$0xff]
    %v1830 = vld [vmem:[%s3 + $0x38] sm:$0xff]
    %v1831 = vld [vmem:[%s4] sm:$0x1]
    %v1833 = vlaneseq
    %v1834 = vshrl.u32 %v1833, 7
    %v1835 = vsub.s32 0, %v1834
    %v1836 = vrot.slane %v1831, %v1835
    %vm1838 = vcmask 523264
    %v1840 = vsel %vm1838, %v1822, 0
    %1842 = vmatprep.subr.mxu0 0.0
    %1843 = vmatpush1.msra.mxu0 0.0
    %1844 = vmatprep.subr.mxu0 0.0
    %1845 = vmatpush1.msra.mxu0 0.0
    %1846 = vmatprep.subr.mxu0 0.0
    %1847 = vmatpush1.msra.mxu0 0.0
    %1848 = vmatprep.subr.mxu0 0.0
    %1849 = vmatpush1.msra.mxu0 0.0
    %1850 = vmatprep.subr.mxu0 0.0
    %1851 = vmatpush1.msra.mxu0 0.0
    %1852 = vmatprep.subr.mxu0 0.0
    %1853 = vmatpush1.msra.mxu0 0.0
    %1854 = vmatprep.subr.mxu0 0.0
    %1855 = vmatpush1.msra.mxu0 0.0
    %1856 = vmatprep.subr.mxu0 0.0
    %1857 = vmatpush1.msra.mxu0 0.0
    %1858 = vmatprep.subr.mxu0 0.0
    %1859 = vmatpush1.msra.mxu0 %v1830
    %1860 = vmatprep.subr.mxu0 0.0
    %1861 = vmatpush1.msra.mxu0 %v1829
    %1862 = vmatprep.subr.mxu0 0.0
    %1863 = vmatpush1.msra.mxu0 %v1828
    %1864 = vmatprep.subr.mxu0 0.0
    %1865 = vmatpush1.msra.mxu0 %v1827
    %1866 = vmatprep.subr.mxu0 0.0
    %1867 = vmatpush1.msra.mxu0 %v1826
    %1868 = vmatprep.subr.mxu0 0.0
    %1869 = vmatpush1.msra.mxu0 %v1825
    %1870 = vmatprep.subr.mxu0 0.0
    %1871 = vmatpush1.msra.mxu0 %v1824
    %1872 = vmatprep.subr.mxu0 0.0
    %1873 = vmatpush1.msra.mxu0 %v1823
    %1874 = vmatprep.subr.mxu0 0.0
    %1875 = vmatpush2.msra.mxu0 0.0
    %1876 = vmatprep.subr.mxu0 0.0
    %1877 = vmatpush2.msra.mxu0 0.0
    %1878 = vmatprep.subr.mxu0 0.0
    %1879 = vmatpush2.msra.mxu0 0.0
    %1880 = vmatprep.subr.mxu0 0.0
    %1881 = vmatpush2.msra.mxu0 0.0
    %1882 = vmatprep.subr.mxu0 0.0
    %1883 = vmatpush2.msra.mxu0 0.0
    %1884 = vmatprep.subr.mxu0 0.0
    %1885 = vmatpush2.msra.mxu0 0.0
    %1886 = vmatprep.subr.mxu0 0.0
    %1887 = vmatpush2.msra.mxu0 0.0
    %1888 = vmatprep.subr.mxu0 0.0
    %1889 = vmatpush2.msra.mxu0 0.0
    %1890 = vmatprep.subr.mxu0 0.0
    %1891 = vmatpush2.msra.mxu0 0.0
    %1892 = vmatprep.subr.mxu0 0.0
    %1893 = vmatpush2.msra.mxu0 0.0
    %1894 = vmatprep.subr.mxu0 0.0
    %1895 = vmatpush2.msra.mxu0 0.0
    %1896 = vmatprep.subr.mxu0 0.0
    %1897 = vmatpush2.msra.mxu0 0.0
    %1898 = vmatprep.subr.mxu0 0.0
    %1899 = vmatpush2.msra.mxu0 0.0
    %1900 = vmatprep.subr.mxu0 0.0
    %1901 = vmatpush2.msra.mxu0 0.0
    %1902 = vmatprep.subr.mxu0 0.0
    %1903 = vmatpush2.msra.mxu0 0.0
    %1904 = vmatprep.subr.mxu0 0.0
    %1905 = vmatpush2.msra.mxu0 0.0
    %1906 = vmatprep.mubr.f32.mxu0 0.0
    %1907 = vmatmul.mubr.f32.gmra.mxu0 %v1840
    %v1908 = vpop.f32.mrf.mxu0
    %v1909 = vadd.f32 %v1836, %v1908
    %v1910 = vpop.f32.mrf.mxu0
    %1911 = vdwg.mxu0
    %vm1912 = vcmask 25600
    %1913 = vst.msk [vmem:[#allocation2] sm:$0x3] %vm1912, %v1909
    // Predicated region
    $region22: #{net_forward.5} parent=1 // pred_check
      _
    $region23: #{net_forward.5} parent=1 // pred_check_branch
      %1915 = sbr.rel (0) target = $region25
    $region24: #{net_forward.5} parent=1 // pred_region
      %s1917 = ssub.s32 32, 32
      %1918 = vsyncadd [#allocation3], %s1917
      %s1920 = sshll.u32 [#allocation2], 4
      %s1921 = int_to_ptr.vmem [resolvable:$true] %s1920
      %1923 = dma.vmem_to_hbm [thread:$0]  %s1921, 32, %s5, [#allocation3]
    $region25: #{net_forward.5} parent=1 // pred_fallthru
      _
    // Predicated region
    $region26: #{net_forward.5} parent=1 // pred_check
      _
    $region27: #{net_forward.5} parent=1 // pred_check_branch
      %1925 = sbr.rel (0) target = $region29
    $region28: #{net_forward.5} parent=1 // pred_region
      %1926 = dma.done [#allocation3], 32
    $region29: #{net_forward.5} parent=1 // pred_fallthru
      _
    %1927 = vsyncpa [#allocation3], 1

</llo_original>
